<compile_context>
chip_gen: v7x
topology: tpu7x:2x2x1
jax: 0.10.0
libtpu: 0.0.40
codegen_flags: <defaults>
</compile_context>

<pallas_src>
import functools

import jax
import jax.numpy as jnp
from jax.experimental import pallas as pl
from jax.experimental.pallas import tpu as pltpu


def _round_up(x, m):
    return (x + m - 1) // m * m


# Fits v7x physical VMEM (64 MiB) with headroom; raises v5e's 16 MiB scoped
# default. Worst-case per-step footprint with tm=512, tk=2048, tn=512 is
# ~10-12 MiB (double-buffered A + W + out, f32 acc scratch).
_VMEM_LIMIT = 48 * 1024 * 1024


def _pick_tk(K, cap=2048):
    """Largest K tile <= cap that divides K (full K when K <= cap)."""
    if K <= cap:
        return K
    for tk in range(cap, 127, -128):
        if K % tk == 0:
            return tk
    return K  # fall back to a single K tile


# ----------------------------- Pallas kernels ------------------------------ #

def _conv_gemm_kernel(a_ref, w_ref, b_ref, o_ref, *rest, apply_act, emit_stats):
    """Tiled conv-as-GEMM: acc += A_tile(bf16) @ W_tile(bf16) in f32.

    Epilogue (last K step): add bias, optional LeakyReLU(0.2), cast+store the
    output tile, and (for BN layers) emit per-channel partial sum / sum-sq
    rows computed from the f32 accumulator (so BN stats never re-read y).
    """
    if emit_stats:
        stat_ref, acc_ref = rest
    else:
        (acc_ref,) = rest

    kk = pl.program_id(2)

    @pl.when(kk == 0)
    def _():
        acc_ref[...] = jnp.zeros_like(acc_ref)

    acc_ref[...] += jnp.dot(a_ref[...], w_ref[...],
                            preferred_element_type=jnp.float32)

    @pl.when(kk == pl.num_programs(2) - 1)
    def _():
        y = acc_ref[...] + b_ref[...]
        if apply_act:
            y = jnp.where(y >= 0.0, y, 0.2 * y)
        o_ref[...] = y.astype(o_ref.dtype)
        if emit_stats:
            # Partial (per M-tile) channel sums for BatchNorm. Row 0: sum,
            # row 1: sum of squares, rows 2..7: zero filler (keeps the output
            # block (8, tn) tile-aligned). Padded M rows are exact zeros so
            # they contribute nothing.
            s1 = jnp.sum(y, axis=0, keepdims=True)
            s2 = jnp.sum(y * y, axis=0, keepdims=True)
            rid = jax.lax.broadcasted_iota(jnp.int32, (8, y.shape[1]), 0)
            stat_ref[...] = jnp.where(rid == 0, s1,
                                      jnp.where(rid == 1, s2, 0.0))


def conv_gemm(a, w, b, *, apply_act, emit_stats, out_dtype, tm, tk, tn):
    Mp, K = a.shape
    _, Np = w.shape
    gm, gn, gk = Mp // tm, Np // tn, K // tk

    kernel = functools.partial(_conv_gemm_kernel, apply_act=apply_act,
                               emit_stats=emit_stats)
    in_specs = [pl.BlockSpec((tm, tk), lambda i, j, k: (i, k)),
                pl.BlockSpec((tk, tn), lambda i, j, k: (k, j)),
                pl.BlockSpec((1, tn), lambda i, j, k: (0, j))]
    out_spec_y = pl.BlockSpec((tm, tn), lambda i, j, k: (i, j))
    if emit_stats:
        out_shape = (jax.ShapeDtypeStruct((Mp, Np), out_dtype),
                     jax.ShapeDtypeStruct((gm * 8, Np), jnp.float32))
        out_specs = (out_spec_y,
                     pl.BlockSpec((8, tn), lambda i, j, k: (i, j)))
    else:
        out_shape = jax.ShapeDtypeStruct((Mp, Np), out_dtype)
        out_specs = out_spec_y

    return pl.pallas_call(
        kernel,
        out_shape=out_shape,
        grid_spec=pltpu.PrefetchScalarGridSpec(
            num_scalar_prefetch=0,
            grid=(gm, gn, gk),
            in_specs=in_specs,
            out_specs=out_specs,
            scratch_shapes=[pltpu.VMEM((tm, tn), jnp.float32)]),
        compiler_params=pltpu.CompilerParams(
            dimension_semantics=("parallel", "parallel", "arbitrary"),
            vmem_limit_bytes=_VMEM_LIMIT),
    )(a, w, b)


def _bn_finalize_kernel(stats_ref, scale_ref, shift_ref, *, m_valid, eps):
    """Reduce per-tile partials -> folded BN scale/shift (gamma=1, beta=0)."""
    st = stats_ref[...]                                   # (gm*8, tn)
    rid = jax.lax.broadcasted_iota(jnp.int32, st.shape, 0)
    total_sum = jnp.sum(jnp.where(rid % 8 == 0, st, 0.0), axis=0, keepdims=True)
    total_sq = jnp.sum(jnp.where(rid % 8 == 1, st, 0.0), axis=0, keepdims=True)
    inv_m = 1.0 / float(m_valid)
    mean = total_sum * inv_m
    # TODO(synk): E[x^2]-E[x]^2 in f32 can cancel at very large N*H*W; a
    # Welford/Chan-style combine of per-tile (mean, M2) partials would be safer.
    var = jnp.maximum(total_sq * inv_m - mean * mean, 0.0)
    scale = jax.lax.rsqrt(var + eps)
    scale_ref[...] = scale
    shift_ref[...] = -mean * scale


def bn_finalize(stats, m_valid, eps=1e-5):
    R, Np = stats.shape
    tn = min(512, Np)
    kernel = functools.partial(_bn_finalize_kernel, m_valid=m_valid, eps=eps)
    # TODO(synk): for extremely large gm (huge batch*resolution) also tile the
    # row reduction; at current shapes the (R, tn) block is well under VMEM.
    return pl.pallas_call(
        kernel,
        out_shape=(jax.ShapeDtypeStruct((1, Np), jnp.float32),
                   jax.ShapeDtypeStruct((1, Np), jnp.float32)),
        grid_spec=pltpu.PrefetchScalarGridSpec(
            num_scalar_prefetch=0,
            grid=(Np // tn,),
            in_specs=[pl.BlockSpec((R, tn), lambda j: (0, j))],
            out_specs=(pl.BlockSpec((1, tn), lambda j: (0, j)),
                       pl.BlockSpec((1, tn), lambda j: (0, j)))),
        compiler_params=pltpu.CompilerParams(
            dimension_semantics=("parallel",),
            vmem_limit_bytes=_VMEM_LIMIT),
    )(stats)


def _bn_act_kernel(y_ref, scale_ref, shift_ref, o_ref):
    y = y_ref[...].astype(jnp.float32) * scale_ref[...] + shift_ref[...]
    o_ref[...] = jnp.where(y >= 0.0, y, 0.2 * y).astype(o_ref.dtype)


def bn_act(y, scale, shift, *, tm, out_dtype):
    # TODO(synk): once patch extraction is fused into the GEMM's A DMA, this
    # pass can be folded into the next layer's A-load and deleted entirely.
    Mp, Np = y.shape
    gm = Mp // tm
    return pl.pallas_call(
        _bn_act_kernel,
        out_shape=jax.ShapeDtypeStruct((Mp, Np), out_dtype),
        grid_spec=pltpu.PrefetchScalarGridSpec(
            num_scalar_prefetch=0,
            grid=(gm,),
            in_specs=[pl.BlockSpec((tm, Np), lambda i: (i, 0)),
                      pl.BlockSpec((1, Np), lambda i: (0, 0)),
                      pl.BlockSpec((1, Np), lambda i: (0, 0))],
            out_specs=pl.BlockSpec((tm, Np), lambda i: (i, 0))),
        compiler_params=pltpu.CompilerParams(
            dimension_semantics=("parallel",),
            vmem_limit_bytes=_VMEM_LIMIT),
    )(y, scale, shift)


# ------------------------------- JAX glue ----------------------------------- #

def im2col_nhwc(x, k, s, p):
    """x: [N, H, W, C] -> (patches [N*Ho*Wo, k*k*C], (Ho, Wo)).

    Built from k*k *static strided slices* + concat (no gather). K order is
    (kh, kw, c), matching the weight layout.
    """
    # TODO(synk): fully fusing patch extraction into the GEMM's A-operand DMA
    # (extra (kh,kw) K-grid axis over the padded NHWC tensor) would remove the
    # remaining staging of the patch matrix in HBM.
    N, H, W, C = x.shape
    xp = jnp.pad(x, ((0, 0), (p, p), (p, p), (0, 0)))
    Hp, Wp = H + 2 * p, W + 2 * p
    Ho = (Hp - k) // s + 1
    Wo = (Wp - k) // s + 1
    taps = []
    for kh in range(k):
        for kw in range(k):
            taps.append(xp[:, kh:kh + (Ho - 1) * s + 1:s,
                           kw:kw + (Wo - 1) * s + 1:s, :])   # [N, Ho, Wo, C]
    patches = jnp.concatenate(taps, axis=-1)                 # [N, Ho, Wo, k*k*C]
    return patches.reshape(N * Ho * Wo, k * k * C), (Ho, Wo)


def conv_block(x_nhwc, layer):
    """One get_layers() block on channels-last input: Conv2d(k=4) [+ BN] [+ LeakyReLU]."""
    N, H, W, Cin = x_nhwc.shape
    k, p = 4, 1
    s = layer["s"]
    Cout = layer["cout"]
    norm, act = layer["norm"], layer["act"]
    w_p, b_p = layer["w_p"], layer["b_p"]
    tk = layer["tk"]
    K, Np = w_p.shape
    tn = Np                      # weight-stationary along N: gn == 1

    a, (Ho, Wo) = im2col_nhwc(x_nhwc, k, s, p)               # (M, K) bf16
    M = a.shape[0]

    # tm multiple of 16 keeps bf16 (16,128) sublane tiling happy; only the
    # ragged last M tile gets a (fusible) zero pad. K is never padded.
    tm = min(512, _round_up(M, 16))
    Mp = _round_up(M, tm)
    if Mp != M:
        a = jnp.pad(a, ((0, Mp - M), (0, 0)))

    if norm:
        # Pre-activation conv (no bias for BN layers); stats fused into the
        # GEMM epilogue from the f32 accumulator; conv output stored bf16.
        y, stats = conv_gemm(a, w_p, b_p, apply_act=False, emit_stats=True,
                             out_dtype=jnp.bfloat16, tm=tm, tk=tk, tn=tn)
        scale, shift = bn_finalize(stats, M)    # biased batch stats, eps=1e-5
        # In this model norm=True always comes with act=True.
        out = bn_act(y, scale, shift, tm=tm, out_dtype=jnp.bfloat16)
    else:
        # Fused bias + (optional) LeakyReLU. Final layer keeps f32 logits.
        out_dt = jnp.bfloat16 if act else jnp.float32
        out = conv_gemm(a, w_p, b_p, apply_act=act, emit_stats=False,
                        out_dtype=out_dt, tm=tm, tk=tk, tn=tn)

    # Keep the [:, :Cout] slice: padded channels of BN layers carry rsqrt(eps)
    # scale and must not leak into the next layer.
    return out[:M, :Cout].reshape(N, Ho, Wo, Cout)


class PatchDiscriminatorPallas:
    """Mirrors PatchDiscriminator(input_c, num_filters, n_down) forward pass."""

    def __init__(self, input_c, num_filters=64, n_down=3, key=None):
        key = jax.random.PRNGKey(0) if key is None else key
        k = 4
        cfg = [(input_c, num_filters, 2, False, True)]
        for i in range(n_down):
            cfg.append((num_filters * 2 ** i, num_filters * 2 ** (i + 1),
                        1 if i == n_down - 1 else 2, True, True))
        cfg.append((num_filters * 2 ** n_down, 1, 1, False, False))

        self.layers = []
        for (ni, nf, s, norm, act) in cfg:
            key, wk, bk = jax.random.split(key, 3)
            bound = 1.0 / float(ni * k * k) ** 0.5   # PyTorch-style uniform init
            w = jax.random.uniform(wk, (nf, ni, k, k), jnp.float32, -bound, bound)
            b = None
            if not norm:                             # Conv2d(bias=not norm)
                b = jax.random.uniform(bk, (nf,), jnp.float32, -bound, bound)

            # GEMM-ready weights: K = ni*k*k (true contraction dim, unpadded),
            # N padded to a lane-dense multiple of 128, bf16, done once here.
            K = ni * k * k
            tk = _pick_tk(K)
            Np = _round_up(nf, 128)
            # K ordered (kh, kw, cin) to match the channels-last im2col layout.
            w_mat = w.transpose(2, 3, 1, 0).reshape(K, nf)
            w_p = jnp.zeros((K, Np), jnp.bfloat16).at[:, :nf].set(
                w_mat.astype(jnp.bfloat16))
            b_vec = b if b is not None else jnp.zeros((nf,), jnp.float32)
            b_p = jnp.zeros((1, Np), jnp.float32).at[0, :nf].set(b_vec)

            self.layers.append(dict(w_p=w_p, b_p=b_p, s=s, norm=norm, act=act,
                                    cin=ni, cout=nf, tk=tk))

    def __call__(self, x_nchw):
        # NCHW f32 interface -> channels-last bf16 internally (lane-dense).
        x = jnp.transpose(x_nchw, (0, 2, 3, 1)).astype(jnp.bfloat16)
        for L in self.layers:
            x = conv_block(x, L)
        # Final layer output is f32 NHWC; return NCHW like the PyTorch module.
        return jnp.transpose(x, (0, 3, 1, 2)).astype(jnp.float32)


if __name__ == "__main__":
    key = jax.random.PRNGKey(0)
    kx, kp = jax.random.split(key)
    # Small-but-valid shapes: 32x32 input survives 3 stride-2 convs + two k=4/s=1 convs.
    x = jax.random.normal(kx, (2, 3, 32, 32), dtype=jnp.float32)

    model = PatchDiscriminatorPallas(input_c=3, num_filters=16, n_down=3, key=kp)
    fwd = jax.jit(lambda inp: model(inp))
    out = jax.block_until_ready(fwd(x))

    assert out.shape == (2, 1, 2, 2), out.shape
    assert jnp.all(jnp.isfinite(out))
    print("KERNEL_OK")
</pallas_src>

<mosaic_0001>
module attributes {stable_mosaic.version = 11 : i64} {
  func.func @_conv_gemm_kernel(%arg0: i32, %arg1: i32, %arg2: i32, %arg3: memref<512x48xbf16, #tpu.memory_space<vmem>>, %arg4: memref<48x128xbf16, #tpu.memory_space<vmem>>, %arg5: memref<1x128xf32, #tpu.memory_space<vmem>>, %arg6: memref<512x128xbf16, #tpu.memory_space<vmem>>, %arg7: memref<512x128xf32, #tpu.memory_space<vmem>>) attributes {dimension_semantics = [#tpu.dimension_semantics<parallel>, #tpu.dimension_semantics<parallel>, #tpu.dimension_semantics<arbitrary>], iteration_bounds = array<i64: 1, 1, 1>, scalar_prefetch = 0 : i64, scratch_operands = 1 : i64, tpu.core_type = #tpu.core_type<tc>, window_params = [{transform_indices = @transform_0, window_bounds = array<i64: 512, 48>}, {transform_indices = @transform_1, window_bounds = array<i64: 48, 128>}, {transform_indices = @transform_2, window_bounds = array<i64: 1, 128>}, {transform_indices = @transform_3, window_bounds = array<i64: 512, 128>}]} {
    %c0_i32 = arith.constant 0 : i32
    %0 = arith.cmpi eq, %arg2, %c0_i32 : i32
    %1 = arith.extui %0 : i1 to i32
    %c0_i32_0 = arith.constant 0 : i32
    %2 = arith.cmpi ne, %1, %c0_i32_0 : i32
    scf.if %2 {
      %cst_10 = arith.constant 0.000000e+00 : f32
      %12 = vector.broadcast %cst_10 : f32 to vector<512x128xf32>
      %c0_11 = arith.constant 0 : index
      %c0_12 = arith.constant 0 : index
      %13 = vector.load %arg7[%c0_11, %c0_12] : memref<512x128xf32, #tpu.memory_space<vmem>>, vector<512x128xf32>
      tpu.vector_store %arg7[%c0_11, %c0_12], %12 {strides = array<i32>} : memref<512x128xf32, #tpu.memory_space<vmem>>, vector<512x128xf32>,
    } else {
    }
    %c0 = arith.constant 0 : index
    %c0_1 = arith.constant 0 : index
    %3 = vector.load %arg7[%c0, %c0_1] : memref<512x128xf32, #tpu.memory_space<vmem>>, vector<512x128xf32>
    %c0_2 = arith.constant 0 : index
    %c0_3 = arith.constant 0 : index
    %4 = vector.load %arg3[%c0_2, %c0_3] : memref<512x48xbf16, #tpu.memory_space<vmem>>, vector<512x48xbf16>
    %c0_4 = arith.constant 0 : index
    %c0_5 = arith.constant 0 : index
    %5 = vector.load %arg4[%c0_4, %c0_5] : memref<48x128xbf16, #tpu.memory_space<vmem>>, vector<48x128xbf16>
    %cst = arith.constant dense<0.000000e+00> : vector<512x128xf32>
    %6 = tpu.matmul %4, %5, %cst {dimension_numbers = #tpu.dot_dimension_numbers<[1], [0], [0], [1], [0, 0, 1, 1], [], []>} : vector<512x48xbf16>, vector<48x128xbf16>, vector<512x128xf32> -> vector<512x128xf32>
    %7 = arith.addf %3, %6 : vector<512x128xf32>
    %c0_6 = arith.constant 0 : index
    %c0_7 = arith.constant 0 : index
    %8 = vector.load %arg7[%c0_6, %c0_7] : memref<512x128xf32, #tpu.memory_space<vmem>>, vector<512x128xf32>
    tpu.vector_store %arg7[%c0_6, %c0_7], %7 {strides = array<i32>} : memref<512x128xf32, #tpu.memory_space<vmem>>, vector<512x128xf32>,
    %c0_i32_8 = arith.constant 0 : i32
    %9 = arith.cmpi eq, %arg2, %c0_i32_8 : i32
    %10 = arith.extui %9 : i1 to i32
    %c0_i32_9 = arith.constant 0 : i32
    %11 = arith.cmpi ne, %10, %c0_i32_9 : i32
    scf.if %11 {
      %c0_10 = arith.constant 0 : index
      %c0_11 = arith.constant 0 : index
      %12 = vector.load %arg7[%c0_10, %c0_11] : memref<512x128xf32, #tpu.memory_space<vmem>>, vector<512x128xf32>
      %c0_12 = arith.constant 0 : index
      %c0_13 = arith.constant 0 : index
      %13 = vector.load %arg5[%c0_12, %c0_13] : memref<1x128xf32, #tpu.memory_space<vmem>>, vector<1x128xf32>
      %14 = vector.broadcast %13 : vector<1x128xf32> to vector<512x128xf32>
      %15 = arith.addf %12, %14 : vector<512x128xf32>
      %cst_14 = arith.constant 0.000000e+00 : f32
      %16 = vector.broadcast %cst_14 : f32 to vector<512x128xf32>
      %17 = arith.cmpf oge, %15, %16 : vector<512x128xf32>
      %cst_15 = arith.constant 2.000000e-01 : f32
      %18 = vector.broadcast %cst_15 : f32 to vector<512x128xf32>
      %19 = arith.mulf %18, %15 : vector<512x128xf32>
      %20 = arith.select %17, %15, %19 : vector<512x128xi1>, vector<512x128xf32>
      %21 = arith.truncf %20 : vector<512x128xf32> to vector<512x128xbf16>
      %c0_16 = arith.constant 0 : index
      %c0_17 = arith.constant 0 : index
      %22 = vector.load %arg6[%c0_16, %c0_17] : memref<512x128xbf16, #tpu.memory_space<vmem>>, vector<512x128xbf16>
      tpu.vector_store %arg6[%c0_16, %c0_17], %21 {strides = array<i32>} : memref<512x128xbf16, #tpu.memory_space<vmem>>, vector<512x128xbf16>,
    } else {
    }
    return
  }
  func.func @transform_0(%arg0: i32, %arg1: i32, %arg2: i32) -> (i32, i32) {
    %c0_i32 = arith.constant 0 : i32
    return %arg0, %arg2 : i32, i32
  }
  func.func @transform_1(%arg0: i32, %arg1: i32, %arg2: i32) -> (i32, i32) {
    %c0_i32 = arith.constant 0 : i32
    return %arg2, %arg1 : i32, i32
  }
  func.func @transform_2(%arg0: i32, %arg1: i32, %arg2: i32) -> (i32, i32) {
    %c0_i32 = arith.constant 0 : i32
    %c0_i32_0 = arith.constant 0 : i32
    return %c0_i32, %arg1 : i32, i32
  }
  func.func @transform_3(%arg0: i32, %arg1: i32, %arg2: i32) -> (i32, i32) {
    %c0_i32 = arith.constant 0 : i32
    return %arg0, %arg1 : i32, i32
  }
}

module attributes {stable_mosaic.version = 11 : i64} {
  func.func @_conv_gemm_kernel(%arg0: i32, %arg1: i32, %arg2: i32, %arg3: memref<128x256xbf16, #tpu.memory_space<vmem>>, %arg4: memref<256x128xbf16, #tpu.memory_space<vmem>>, %arg5: memref<1x128xf32, #tpu.memory_space<vmem>>, %arg6: memref<128x128xbf16, #tpu.memory_space<vmem>>, %arg7: memref<8x128xf32, #tpu.memory_space<vmem>>, %arg8: memref<128x128xf32, #tpu.memory_space<vmem>>) attributes {dimension_semantics = [#tpu.dimension_semantics<parallel>, #tpu.dimension_semantics<parallel>, #tpu.dimension_semantics<arbitrary>], iteration_bounds = array<i64: 1, 1, 1>, scalar_prefetch = 0 : i64, scratch_operands = 1 : i64, tpu.core_type = #tpu.core_type<tc>, window_params = [{transform_indices = @transform_0, window_bounds = array<i64: 128, 256>}, {transform_indices = @transform_1, window_bounds = array<i64: 256, 128>}, {transform_indices = @transform_2, window_bounds = array<i64: 1, 128>}, {transform_indices = @transform_3, window_bounds = array<i64: 128, 128>}, {transform_indices = @transform_4, window_bounds = array<i64: 8, 128>}]} {
    %c0_i32 = arith.constant 0 : i32
    %0 = arith.cmpi eq, %arg2, %c0_i32 : i32
    %1 = arith.extui %0 : i1 to i32
    %c0_i32_0 = arith.constant 0 : i32
    %2 = arith.cmpi ne, %1, %c0_i32_0 : i32
    scf.if %2 {
      %cst_10 = arith.constant 0.000000e+00 : f32
      %12 = vector.broadcast %cst_10 : f32 to vector<128x128xf32>
      %c0_11 = arith.constant 0 : index
      %c0_12 = arith.constant 0 : index
      %13 = vector.load %arg8[%c0_11, %c0_12] : memref<128x128xf32, #tpu.memory_space<vmem>>, vector<128x128xf32>
      tpu.vector_store %arg8[%c0_11, %c0_12], %12 {strides = array<i32>} : memref<128x128xf32, #tpu.memory_space<vmem>>, vector<128x128xf32>,
    } else {
    }
    %c0 = arith.constant 0 : index
    %c0_1 = arith.constant 0 : index
    %3 = vector.load %arg8[%c0, %c0_1] : memref<128x128xf32, #tpu.memory_space<vmem>>, vector<128x128xf32>
    %c0_2 = arith.constant 0 : index
    %c0_3 = arith.constant 0 : index
    %4 = vector.load %arg3[%c0_2, %c0_3] : memref<128x256xbf16, #tpu.memory_space<vmem>>, vector<128x256xbf16>
    %c0_4 = arith.constant 0 : index
    %c0_5 = arith.constant 0 : index
    %5 = vector.load %arg4[%c0_4, %c0_5] : memref<256x128xbf16, #tpu.memory_space<vmem>>, vector<256x128xbf16>
    %cst = arith.constant dense<0.000000e+00> : vector<128x128xf32>
    %6 = tpu.matmul %4, %5, %cst {dimension_numbers = #tpu.dot_dimension_numbers<[1], [0], [0], [1], [0, 0, 1, 1], [], []>} : vector<128x256xbf16>, vector<256x128xbf16>, vector<128x128xf32> -> vector<128x128xf32>
    %7 = arith.addf %3, %6 : vector<128x128xf32>
    %c0_6 = arith.constant 0 : index
    %c0_7 = arith.constant 0 : index
    %8 = vector.load %arg8[%c0_6, %c0_7] : memref<128x128xf32, #tpu.memory_space<vmem>>, vector<128x128xf32>
    tpu.vector_store %arg8[%c0_6, %c0_7], %7 {strides = array<i32>} : memref<128x128xf32, #tpu.memory_space<vmem>>, vector<128x128xf32>,
    %c0_i32_8 = arith.constant 0 : i32
    %9 = arith.cmpi eq, %arg2, %c0_i32_8 : i32
    %10 = arith.extui %9 : i1 to i32
    %c0_i32_9 = arith.constant 0 : i32
    %11 = arith.cmpi ne, %10, %c0_i32_9 : i32
    scf.if %11 {
      %c0_10 = arith.constant 0 : index
      %c0_11 = arith.constant 0 : index
      %12 = vector.load %arg8[%c0_10, %c0_11] : memref<128x128xf32, #tpu.memory_space<vmem>>, vector<128x128xf32>
      %c0_12 = arith.constant 0 : index
      %c0_13 = arith.constant 0 : index
      %13 = vector.load %arg5[%c0_12, %c0_13] : memref<1x128xf32, #tpu.memory_space<vmem>>, vector<1x128xf32>
      %14 = vector.broadcast %13 : vector<1x128xf32> to vector<128x128xf32>
      %15 = arith.addf %12, %14 : vector<128x128xf32>
      %16 = arith.truncf %15 : vector<128x128xf32> to vector<128x128xbf16>
      %c0_14 = arith.constant 0 : index
      %c0_15 = arith.constant 0 : index
      %17 = vector.load %arg6[%c0_14, %c0_15] : memref<128x128xbf16, #tpu.memory_space<vmem>>, vector<128x128xbf16>
      tpu.vector_store %arg6[%c0_14, %c0_15], %16 {strides = array<i32>} : memref<128x128xbf16, #tpu.memory_space<vmem>>, vector<128x128xbf16>,
      %cst_16 = arith.constant dense<0.000000e+00> : vector<128xf32>
      %18 = vector.multi_reduction <add>, %15, %cst_16 [0] : vector<128x128xf32> to vector<128xf32>
      %19 = vector.shape_cast %18 : vector<128xf32> to vector<1x128xf32>
      %20 = arith.mulf %15, %15 : vector<128x128xf32>
      %cst_17 = arith.constant dense<0.000000e+00> : vector<128xf32>
      %21 = vector.multi_reduction <add>, %20, %cst_17 [0] : vector<128x128xf32> to vector<128xf32>
      %22 = vector.shape_cast %21 : vector<128xf32> to vector<1x128xf32>
      %23 = tpu.iota {dimensions = array<i32: 0>} : vector<8x128xi32>
      %c0_i32_18 = arith.constant 0 : i32
      %24 = vector.broadcast %c0_i32_18 : i32 to vector<8x128xi32>
      %25 = arith.cmpi eq, %23, %24 : vector<8x128xi32>
      %c1_i32 = arith.constant 1 : i32
      %26 = vector.broadcast %c1_i32 : i32 to vector<8x128xi32>
      %27 = arith.cmpi eq, %23, %26 : vector<8x128xi32>
      %cst_19 = arith.constant 0.000000e+00 : f32
      %28 = vector.shape_cast %22 : vector<1x128xf32> to vector<1x128xf32>
      %29 = vector.broadcast %28 : vector<1x128xf32> to vector<8x128xf32>
      %30 = vector.broadcast %cst_19 : f32 to vector<8x128xf32>
      %31 = arith.select %27, %29, %30 : vector<8x128xi1>, vector<8x128xf32>
      %32 = vector.shape_cast %19 : vector<1x128xf32> to vector<1x128xf32>
      %33 = vector.broadcast %32 : vector<1x128xf32> to vector<8x128xf32>
      %34 = arith.select %25, %33, %31 : vector<8x128xi1>, vector<8x128xf32>
      %c0_20 = arith.constant 0 : index
      %c0_21 = arith.constant 0 : index
      %35 = vector.load %arg7[%c0_20, %c0_21] : memref<8x128xf32, #tpu.memory_space<vmem>>, vector<8x128xf32>
      tpu.vector_store %arg7[%c0_20, %c0_21], %34 {strides = array<i32>} : memref<8x128xf32, #tpu.memory_space<vmem>>, vector<8x128xf32>,
    } else {
    }
    return
  }
  func.func @transform_0(%arg0: i32, %arg1: i32, %arg2: i32) -> (i32, i32) {
    %c0_i32 = arith.constant 0 : i32
    return %arg0, %arg2 : i32, i32
  }
  func.func @transform_1(%arg0: i32, %arg1: i32, %arg2: i32) -> (i32, i32) {
    %c0_i32 = arith.constant 0 : i32
    return %arg2, %arg1 : i32, i32
  }
  func.func @transform_2(%arg0: i32, %arg1: i32, %arg2: i32) -> (i32, i32) {
    %c0_i32 = arith.constant 0 : i32
    %c0_i32_0 = arith.constant 0 : i32
    return %c0_i32, %arg1 : i32, i32
  }
  func.func @transform_3(%arg0: i32, %arg1: i32, %arg2: i32) -> (i32, i32) {
    %c0_i32 = arith.constant 0 : i32
    return %arg0, %arg1 : i32, i32
  }
  func.func @transform_4(%arg0: i32, %arg1: i32, %arg2: i32) -> (i32, i32) {
    %c0_i32 = arith.constant 0 : i32
    return %arg0, %arg1 : i32, i32
  }
}

module attributes {stable_mosaic.version = 11 : i64} {
  func.func @_bn_finalize_kernel(%arg0: i32, %arg1: memref<8x128xf32, #tpu.memory_space<vmem>>, %arg2: memref<1x128xf32, #tpu.memory_space<vmem>>, %arg3: memref<1x128xf32, #tpu.memory_space<vmem>>) attributes {dimension_semantics = [#tpu.dimension_semantics<parallel>], iteration_bounds = array<i64: 1>, scalar_prefetch = 0 : i64, scratch_operands = 0 : i64, tpu.core_type = #tpu.core_type<tc>, window_params = [{transform_indices = @transform_0, window_bounds = array<i64: 8, 128>}, {transform_indices = @transform_1, window_bounds = array<i64: 1, 128>}, {transform_indices = @transform_2, window_bounds = array<i64: 1, 128>}]} {
    %c0 = arith.constant 0 : index
    %c0_0 = arith.constant 0 : index
    %0 = vector.load %arg1[%c0, %c0_0] : memref<8x128xf32, #tpu.memory_space<vmem>>, vector<8x128xf32>
    %1 = tpu.iota {dimensions = array<i32: 0>} : vector<8x128xi32>
    %c8_i32 = arith.constant 8 : i32
    %c0_i32 = arith.constant 0 : i32
    %2 = arith.cmpi eq, %c8_i32, %c0_i32 : i32
    %c1_i32 = arith.constant 1 : i32
    %3 = arith.select %2, %c1_i32, %c8_i32 : i32
    %4 = vector.broadcast %3 : i32 to vector<8x128xi32>
    %5 = arith.remsi %1, %4 : vector<8x128xi32>
    %c0_i32_1 = arith.constant 0 : i32
    %6 = vector.broadcast %c0_i32_1 : i32 to vector<8x128xi32>
    %7 = arith.cmpi ne, %5, %6 : vector<8x128xi32>
    %c0_i32_2 = arith.constant 0 : i32
    %8 = vector.broadcast %c0_i32_2 : i32 to vector<8x128xi32>
    %9 = arith.cmpi slt, %5, %8 : vector<8x128xi32>
    %c0_i32_3 = arith.constant 0 : i32
    %10 = arith.cmpi slt, %3, %c0_i32_3 : i32
    %11 = vector.broadcast %10 : i1 to vector<8x128xi1>
    %12 = vector.broadcast %11 : vector<8x128xi1> to vector<8x128xi1>
    %13 = arith.xori %9, %12 : vector<8x128xi1>
    %14 = arith.andi %13, %7 : vector<8x128xi1>
    %15 = vector.broadcast %3 : i32 to vector<8x128xi32>
    %16 = arith.addi %5, %15 : vector<8x128xi32>
    %17 = arith.select %14, %16, %5 : vector<8x128xi1>, vector<8x128xi32>
    %c0_i32_4 = arith.constant 0 : i32
    %18 = vector.broadcast %c0_i32_4 : i32 to vector<8x128xi32>
    %19 = arith.cmpi eq, %17, %18 : vector<8x128xi32>
    %cst = arith.constant 0.000000e+00 : f32
    %20 = vector.broadcast %cst : f32 to vector<8x128xf32>
    %21 = arith.select %19, %0, %20 : vector<8x128xi1>, vector<8x128xf32>
    %cst_5 = arith.constant dense<0.000000e+00> : vector<128xf32>
    %22 = vector.multi_reduction <add>, %21, %cst_5 [0] : vector<8x128xf32> to vector<128xf32>
    %23 = vector.shape_cast %22 : vector<128xf32> to vector<1x128xf32>
    %c8_i32_6 = arith.constant 8 : i32
    %c0_i32_7 = arith.constant 0 : i32
    %24 = arith.cmpi eq, %c8_i32_6, %c0_i32_7 : i32
    %c1_i32_8 = arith.constant 1 : i32
    %25 = arith.select %24, %c1_i32_8, %c8_i32_6 : i32
    %26 = vector.broadcast %25 : i32 to vector<8x128xi32>
    %27 = arith.remsi %1, %26 : vector<8x128xi32>
    %c0_i32_9 = arith.constant 0 : i32
    %28 = vector.broadcast %c0_i32_9 : i32 to vector<8x128xi32>
    %29 = arith.cmpi ne, %27, %28 : vector<8x128xi32>
    %c0_i32_10 = arith.constant 0 : i32
    %30 = vector.broadcast %c0_i32_10 : i32 to vector<8x128xi32>
    %31 = arith.cmpi slt, %27, %30 : vector<8x128xi32>
    %c0_i32_11 = arith.constant 0 : i32
    %32 = arith.cmpi slt, %25, %c0_i32_11 : i32
    %33 = vector.broadcast %32 : i1 to vector<8x128xi1>
    %34 = vector.broadcast %33 : vector<8x128xi1> to vector<8x128xi1>
    %35 = arith.xori %31, %34 : vector<8x128xi1>
    %36 = arith.andi %35, %29 : vector<8x128xi1>
    %37 = vector.broadcast %25 : i32 to vector<8x128xi32>
    %38 = arith.addi %27, %37 : vector<8x128xi32>
    %39 = arith.select %36, %38, %27 : vector<8x128xi1>, vector<8x128xi32>
    %c1_i32_12 = arith.constant 1 : i32
    %40 = vector.broadcast %c1_i32_12 : i32 to vector<8x128xi32>
    %41 = arith.cmpi eq, %39, %40 : vector<8x128xi32>
    %cst_13 = arith.constant 0.000000e+00 : f32
    %42 = vector.broadcast %cst_13 : f32 to vector<8x128xf32>
    %43 = arith.select %41, %0, %42 : vector<8x128xi1>, vector<8x128xf32>
    %cst_14 = arith.constant dense<0.000000e+00> : vector<128xf32>
    %44 = vector.multi_reduction <add>, %43, %cst_14 [0] : vector<8x128xf32> to vector<128xf32>
    %45 = vector.shape_cast %44 : vector<128xf32> to vector<1x128xf32>
    %cst_15 = arith.constant 7.812500e-03 : f32
    %46 = vector.broadcast %cst_15 : f32 to vector<1x128xf32>
    %47 = arith.mulf %23, %46 : vector<1x128xf32>
    %cst_16 = arith.constant 7.812500e-03 : f32
    %48 = vector.broadcast %cst_16 : f32 to vector<1x128xf32>
    %49 = arith.mulf %45, %48 : vector<1x128xf32>
    %50 = arith.mulf %47, %47 : vector<1x128xf32>
    %51 = arith.subf %49, %50 : vector<1x128xf32>
    %cst_17 = arith.constant 0.000000e+00 : f32
    %52 = vector.broadcast %cst_17 : f32 to vector<1x128xf32>
    %53 = arith.maximumf %51, %52 : vector<1x128xf32>
    %cst_18 = arith.constant 9.99999974E-6 : f32
    %54 = vector.broadcast %cst_18 : f32 to vector<1x128xf32>
    %55 = arith.addf %53, %54 : vector<1x128xf32>
    %56 = math.rsqrt %55 : vector<1x128xf32>
    %c0_19 = arith.constant 0 : index
    %c0_20 = arith.constant 0 : index
    %57 = vector.load %arg2[%c0_19, %c0_20] : memref<1x128xf32, #tpu.memory_space<vmem>>, vector<1x128xf32>
    tpu.vector_store %arg2[%c0_19, %c0_20], %56 {strides = array<i32>} : memref<1x128xf32, #tpu.memory_space<vmem>>, vector<1x128xf32>,
    %cst_21 = arith.constant 0.000000e+00 : f32
    %58 = vector.broadcast %cst_21 : f32 to vector<1x128xf32>
    %59 = arith.subf %58, %47 : vector<1x128xf32>
    %60 = arith.mulf %59, %56 : vector<1x128xf32>
    %c0_22 = arith.constant 0 : index
    %c0_23 = arith.constant 0 : index
    %61 = vector.load %arg3[%c0_22, %c0_23] : memref<1x128xf32, #tpu.memory_space<vmem>>, vector<1x128xf32>
    tpu.vector_store %arg3[%c0_22, %c0_23], %60 {strides = array<i32>} : memref<1x128xf32, #tpu.memory_space<vmem>>, vector<1x128xf32>,
    return
  }
  func.func @transform_0(%arg0: i32) -> (i32, i32) {
    %c0_i32 = arith.constant 0 : i32
    %c0_i32_0 = arith.constant 0 : i32
    return %c0_i32, %arg0 : i32, i32
  }
  func.func @transform_1(%arg0: i32) -> (i32, i32) {
    %c0_i32 = arith.constant 0 : i32
    %c0_i32_0 = arith.constant 0 : i32
    return %c0_i32, %arg0 : i32, i32
  }
  func.func @transform_2(%arg0: i32) -> (i32, i32) {
    %c0_i32 = arith.constant 0 : i32
    %c0_i32_0 = arith.constant 0 : i32
    return %c0_i32, %arg0 : i32, i32
  }
}

module attributes {stable_mosaic.version = 11 : i64} {
  func.func @_bn_act_kernel(%arg0: i32, %arg1: memref<128x128xbf16, #tpu.memory_space<vmem>>, %arg2: memref<1x128xf32, #tpu.memory_space<vmem>>, %arg3: memref<1x128xf32, #tpu.memory_space<vmem>>, %arg4: memref<128x128xbf16, #tpu.memory_space<vmem>>) attributes {dimension_semantics = [#tpu.dimension_semantics<parallel>], iteration_bounds = array<i64: 1>, scalar_prefetch = 0 : i64, scratch_operands = 0 : i64, tpu.core_type = #tpu.core_type<tc>, window_params = [{transform_indices = @transform_0, window_bounds = array<i64: 128, 128>}, {pipeline_mode = #tpu.pipeline_mode<synchronous>, transform_indices = @transform_1, window_bounds = array<i64: 1, 128>}, {pipeline_mode = #tpu.pipeline_mode<synchronous>, transform_indices = @transform_2, window_bounds = array<i64: 1, 128>}, {transform_indices = @transform_3, window_bounds = array<i64: 128, 128>}]} {
    %c0 = arith.constant 0 : index
    %c0_0 = arith.constant 0 : index
    %0 = vector.load %arg1[%c0, %c0_0] : memref<128x128xbf16, #tpu.memory_space<vmem>>, vector<128x128xbf16>
    %1 = arith.extf %0 : vector<128x128xbf16> to vector<128x128xf32>
    %c0_1 = arith.constant 0 : index
    %c0_2 = arith.constant 0 : index
    %2 = vector.load %arg2[%c0_1, %c0_2] : memref<1x128xf32, #tpu.memory_space<vmem>>, vector<1x128xf32>
    %3 = vector.broadcast %2 : vector<1x128xf32> to vector<128x128xf32>
    %4 = arith.mulf %1, %3 : vector<128x128xf32>
    %c0_3 = arith.constant 0 : index
    %c0_4 = arith.constant 0 : index
    %5 = vector.load %arg3[%c0_3, %c0_4] : memref<1x128xf32, #tpu.memory_space<vmem>>, vector<1x128xf32>
    %6 = vector.broadcast %5 : vector<1x128xf32> to vector<128x128xf32>
    %7 = arith.addf %4, %6 : vector<128x128xf32>
    %cst = arith.constant 0.000000e+00 : f32
    %8 = vector.broadcast %cst : f32 to vector<128x128xf32>
    %9 = arith.cmpf oge, %7, %8 : vector<128x128xf32>
    %cst_5 = arith.constant 2.000000e-01 : f32
    %10 = vector.broadcast %cst_5 : f32 to vector<128x128xf32>
    %11 = arith.mulf %10, %7 : vector<128x128xf32>
    %12 = arith.select %9, %7, %11 : vector<128x128xi1>, vector<128x128xf32>
    %13 = arith.truncf %12 : vector<128x128xf32> to vector<128x128xbf16>
    %c0_6 = arith.constant 0 : index
    %c0_7 = arith.constant 0 : index
    %14 = vector.load %arg4[%c0_6, %c0_7] : memref<128x128xbf16, #tpu.memory_space<vmem>>, vector<128x128xbf16>
    tpu.vector_store %arg4[%c0_6, %c0_7], %13 {strides = array<i32>} : memref<128x128xbf16, #tpu.memory_space<vmem>>, vector<128x128xbf16>,
    return
  }
  func.func @transform_0(%arg0: i32) -> (i32, i32) {
    %c0_i32 = arith.constant 0 : i32
    %c0_i32_0 = arith.constant 0 : i32
    return %arg0, %c0_i32 : i32, i32
  }
  func.func @transform_1(%arg0: i32) -> (i32, i32) {
    %c0_i32 = arith.constant 0 : i32
    %c0_i32_0 = arith.constant 0 : i32
    %c0_i32_1 = arith.constant 0 : i32
    return %c0_i32, %c0_i32_0 : i32, i32
  }
  func.func @transform_2(%arg0: i32) -> (i32, i32) {
    %c0_i32 = arith.constant 0 : i32
    %c0_i32_0 = arith.constant 0 : i32
    %c0_i32_1 = arith.constant 0 : i32
    return %c0_i32, %c0_i32_0 : i32, i32
  }
  func.func @transform_3(%arg0: i32) -> (i32, i32) {
    %c0_i32 = arith.constant 0 : i32
    %c0_i32_0 = arith.constant 0 : i32
    return %arg0, %c0_i32 : i32, i32
  }
}

module attributes {stable_mosaic.version = 11 : i64} {
  func.func @_bn_finalize_kernel(%arg0: i32, %arg1: memref<8x128xf32, #tpu.memory_space<vmem>>, %arg2: memref<1x128xf32, #tpu.memory_space<vmem>>, %arg3: memref<1x128xf32, #tpu.memory_space<vmem>>) attributes {dimension_semantics = [#tpu.dimension_semantics<parallel>], iteration_bounds = array<i64: 1>, scalar_prefetch = 0 : i64, scratch_operands = 0 : i64, tpu.core_type = #tpu.core_type<tc>, window_params = [{transform_indices = @transform_0, window_bounds = array<i64: 8, 128>}, {transform_indices = @transform_1, window_bounds = array<i64: 1, 128>}, {transform_indices = @transform_2, window_bounds = array<i64: 1, 128>}]} {
    %c0 = arith.constant 0 : index
    %c0_0 = arith.constant 0 : index
    %0 = vector.load %arg1[%c0, %c0_0] : memref<8x128xf32, #tpu.memory_space<vmem>>, vector<8x128xf32>
    %1 = tpu.iota {dimensions = array<i32: 0>} : vector<8x128xi32>
    %c8_i32 = arith.constant 8 : i32
    %c0_i32 = arith.constant 0 : i32
    %2 = arith.cmpi eq, %c8_i32, %c0_i32 : i32
    %c1_i32 = arith.constant 1 : i32
    %3 = arith.select %2, %c1_i32, %c8_i32 : i32
    %4 = vector.broadcast %3 : i32 to vector<8x128xi32>
    %5 = arith.remsi %1, %4 : vector<8x128xi32>
    %c0_i32_1 = arith.constant 0 : i32
    %6 = vector.broadcast %c0_i32_1 : i32 to vector<8x128xi32>
    %7 = arith.cmpi ne, %5, %6 : vector<8x128xi32>
    %c0_i32_2 = arith.constant 0 : i32
    %8 = vector.broadcast %c0_i32_2 : i32 to vector<8x128xi32>
    %9 = arith.cmpi slt, %5, %8 : vector<8x128xi32>
    %c0_i32_3 = arith.constant 0 : i32
    %10 = arith.cmpi slt, %3, %c0_i32_3 : i32
    %11 = vector.broadcast %10 : i1 to vector<8x128xi1>
    %12 = vector.broadcast %11 : vector<8x128xi1> to vector<8x128xi1>
    %13 = arith.xori %9, %12 : vector<8x128xi1>
    %14 = arith.andi %13, %7 : vector<8x128xi1>
    %15 = vector.broadcast %3 : i32 to vector<8x128xi32>
    %16 = arith.addi %5, %15 : vector<8x128xi32>
    %17 = arith.select %14, %16, %5 : vector<8x128xi1>, vector<8x128xi32>
    %c0_i32_4 = arith.constant 0 : i32
    %18 = vector.broadcast %c0_i32_4 : i32 to vector<8x128xi32>
    %19 = arith.cmpi eq, %17, %18 : vector<8x128xi32>
    %cst = arith.constant 0.000000e+00 : f32
    %20 = vector.broadcast %cst : f32 to vector<8x128xf32>
    %21 = arith.select %19, %0, %20 : vector<8x128xi1>, vector<8x128xf32>
    %cst_5 = arith.constant dense<0.000000e+00> : vector<128xf32>
    %22 = vector.multi_reduction <add>, %21, %cst_5 [0] : vector<8x128xf32> to vector<128xf32>
    %23 = vector.shape_cast %22 : vector<128xf32> to vector<1x128xf32>
    %c8_i32_6 = arith.constant 8 : i32
    %c0_i32_7 = arith.constant 0 : i32
    %24 = arith.cmpi eq, %c8_i32_6, %c0_i32_7 : i32
    %c1_i32_8 = arith.constant 1 : i32
    %25 = arith.select %24, %c1_i32_8, %c8_i32_6 : i32
    %26 = vector.broadcast %25 : i32 to vector<8x128xi32>
    %27 = arith.remsi %1, %26 : vector<8x128xi32>
    %c0_i32_9 = arith.constant 0 : i32
    %28 = vector.broadcast %c0_i32_9 : i32 to vector<8x128xi32>
    %29 = arith.cmpi ne, %27, %28 : vector<8x128xi32>
    %c0_i32_10 = arith.constant 0 : i32
    %30 = vector.broadcast %c0_i32_10 : i32 to vector<8x128xi32>
    %31 = arith.cmpi slt, %27, %30 : vector<8x128xi32>
    %c0_i32_11 = arith.constant 0 : i32
    %32 = arith.cmpi slt, %25, %c0_i32_11 : i32
    %33 = vector.broadcast %32 : i1 to vector<8x128xi1>
    %34 = vector.broadcast %33 : vector<8x128xi1> to vector<8x128xi1>
    %35 = arith.xori %31, %34 : vector<8x128xi1>
    %36 = arith.andi %35, %29 : vector<8x128xi1>
    %37 = vector.broadcast %25 : i32 to vector<8x128xi32>
    %38 = arith.addi %27, %37 : vector<8x128xi32>
    %39 = arith.select %36, %38, %27 : vector<8x128xi1>, vector<8x128xi32>
    %c1_i32_12 = arith.constant 1 : i32
    %40 = vector.broadcast %c1_i32_12 : i32 to vector<8x128xi32>
    %41 = arith.cmpi eq, %39, %40 : vector<8x128xi32>
    %cst_13 = arith.constant 0.000000e+00 : f32
    %42 = vector.broadcast %cst_13 : f32 to vector<8x128xf32>
    %43 = arith.select %41, %0, %42 : vector<8x128xi1>, vector<8x128xf32>
    %cst_14 = arith.constant dense<0.000000e+00> : vector<128xf32>
    %44 = vector.multi_reduction <add>, %43, %cst_14 [0] : vector<8x128xf32> to vector<128xf32>
    %45 = vector.shape_cast %44 : vector<128xf32> to vector<1x128xf32>
    %cst_15 = arith.constant 3.125000e-02 : f32
    %46 = vector.broadcast %cst_15 : f32 to vector<1x128xf32>
    %47 = arith.mulf %23, %46 : vector<1x128xf32>
    %cst_16 = arith.constant 3.125000e-02 : f32
    %48 = vector.broadcast %cst_16 : f32 to vector<1x128xf32>
    %49 = arith.mulf %45, %48 : vector<1x128xf32>
    %50 = arith.mulf %47, %47 : vector<1x128xf32>
    %51 = arith.subf %49, %50 : vector<1x128xf32>
    %cst_17 = arith.constant 0.000000e+00 : f32
    %52 = vector.broadcast %cst_17 : f32 to vector<1x128xf32>
    %53 = arith.maximumf %51, %52 : vector<1x128xf32>
    %cst_18 = arith.constant 9.99999974E-6 : f32
    %54 = vector.broadcast %cst_18 : f32 to vector<1x128xf32>
    %55 = arith.addf %53, %54 : vector<1x128xf32>
    %56 = math.rsqrt %55 : vector<1x128xf32>
    %c0_19 = arith.constant 0 : index
    %c0_20 = arith.constant 0 : index
    %57 = vector.load %arg2[%c0_19, %c0_20] : memref<1x128xf32, #tpu.memory_space<vmem>>, vector<1x128xf32>
    tpu.vector_store %arg2[%c0_19, %c0_20], %56 {strides = array<i32>} : memref<1x128xf32, #tpu.memory_space<vmem>>, vector<1x128xf32>,
    %cst_21 = arith.constant 0.000000e+00 : f32
    %58 = vector.broadcast %cst_21 : f32 to vector<1x128xf32>
    %59 = arith.subf %58, %47 : vector<1x128xf32>
    %60 = arith.mulf %59, %56 : vector<1x128xf32>
    %c0_22 = arith.constant 0 : index
    %c0_23 = arith.constant 0 : index
    %61 = vector.load %arg3[%c0_22, %c0_23] : memref<1x128xf32, #tpu.memory_space<vmem>>, vector<1x128xf32>
    tpu.vector_store %arg3[%c0_22, %c0_23], %60 {strides = array<i32>} : memref<1x128xf32, #tpu.memory_space<vmem>>, vector<1x128xf32>,
    return
  }
  func.func @transform_0(%arg0: i32) -> (i32, i32) {
    %c0_i32 = arith.constant 0 : i32
    %c0_i32_0 = arith.constant 0 : i32
    return %c0_i32, %arg0 : i32, i32
  }
  func.func @transform_1(%arg0: i32) -> (i32, i32) {
    %c0_i32 = arith.constant 0 : i32
    %c0_i32_0 = arith.constant 0 : i32
    return %c0_i32, %arg0 : i32, i32
  }
  func.func @transform_2(%arg0: i32) -> (i32, i32) {
    %c0_i32 = arith.constant 0 : i32
    %c0_i32_0 = arith.constant 0 : i32
    return %c0_i32, %arg0 : i32, i32
  }
}

module attributes {stable_mosaic.version = 11 : i64} {
  func.func @_conv_gemm_kernel(%arg0: i32, %arg1: i32, %arg2: i32, %arg3: memref<32x512xbf16, #tpu.memory_space<vmem>>, %arg4: memref<512x128xbf16, #tpu.memory_space<vmem>>, %arg5: memref<1x128xf32, #tpu.memory_space<vmem>>, %arg6: memref<32x128xbf16, #tpu.memory_space<vmem>>, %arg7: memref<8x128xf32, #tpu.memory_space<vmem>>, %arg8: memref<32x128xf32, #tpu.memory_space<vmem>>) attributes {dimension_semantics = [#tpu.dimension_semantics<parallel>, #tpu.dimension_semantics<parallel>, #tpu.dimension_semantics<arbitrary>], iteration_bounds = array<i64: 1, 1, 1>, scalar_prefetch = 0 : i64, scratch_operands = 1 : i64, tpu.core_type = #tpu.core_type<tc>, window_params = [{transform_indices = @transform_0, window_bounds = array<i64: 32, 512>}, {transform_indices = @transform_1, window_bounds = array<i64: 512, 128>}, {transform_indices = @transform_2, window_bounds = array<i64: 1, 128>}, {transform_indices = @transform_3, window_bounds = array<i64: 32, 128>}, {transform_indices = @transform_4, window_bounds = array<i64: 8, 128>}]} {
    %c0_i32 = arith.constant 0 : i32
    %0 = arith.cmpi eq, %arg2, %c0_i32 : i32
    %1 = arith.extui %0 : i1 to i32
    %c0_i32_0 = arith.constant 0 : i32
    %2 = arith.cmpi ne, %1, %c0_i32_0 : i32
    scf.if %2 {
      %cst_10 = arith.constant 0.000000e+00 : f32
      %12 = vector.broadcast %cst_10 : f32 to vector<32x128xf32>
      %c0_11 = arith.constant 0 : index
      %c0_12 = arith.constant 0 : index
      %13 = vector.load %arg8[%c0_11, %c0_12] : memref<32x128xf32, #tpu.memory_space<vmem>>, vector<32x128xf32>
      tpu.vector_store %arg8[%c0_11, %c0_12], %12 {strides = array<i32>} : memref<32x128xf32, #tpu.memory_space<vmem>>, vector<32x128xf32>,
    } else {
    }
    %c0 = arith.constant 0 : index
    %c0_1 = arith.constant 0 : index
    %3 = vector.load %arg8[%c0, %c0_1] : memref<32x128xf32, #tpu.memory_space<vmem>>, vector<32x128xf32>
    %c0_2 = arith.constant 0 : index
    %c0_3 = arith.constant 0 : index
    %4 = vector.load %arg3[%c0_2, %c0_3] : memref<32x512xbf16, #tpu.memory_space<vmem>>, vector<32x512xbf16>
    %c0_4 = arith.constant 0 : index
    %c0_5 = arith.constant 0 : index
    %5 = vector.load %arg4[%c0_4, %c0_5] : memref<512x128xbf16, #tpu.memory_space<vmem>>, vector<512x128xbf16>
    %cst = arith.constant dense<0.000000e+00> : vector<32x128xf32>
    %6 = tpu.matmul %4, %5, %cst {dimension_numbers = #tpu.dot_dimension_numbers<[1], [0], [0], [1], [0, 0, 1, 1], [], []>} : vector<32x512xbf16>, vector<512x128xbf16>, vector<32x128xf32> -> vector<32x128xf32>
    %7 = arith.addf %3, %6 : vector<32x128xf32>
    %c0_6 = arith.constant 0 : index
    %c0_7 = arith.constant 0 : index
    %8 = vector.load %arg8[%c0_6, %c0_7] : memref<32x128xf32, #tpu.memory_space<vmem>>, vector<32x128xf32>
    tpu.vector_store %arg8[%c0_6, %c0_7], %7 {strides = array<i32>} : memref<32x128xf32, #tpu.memory_space<vmem>>, vector<32x128xf32>,
    %c0_i32_8 = arith.constant 0 : i32
    %9 = arith.cmpi eq, %arg2, %c0_i32_8 : i32
    %10 = arith.extui %9 : i1 to i32
    %c0_i32_9 = arith.constant 0 : i32
    %11 = arith.cmpi ne, %10, %c0_i32_9 : i32
    scf.if %11 {
      %c0_10 = arith.constant 0 : index
      %c0_11 = arith.constant 0 : index
      %12 = vector.load %arg8[%c0_10, %c0_11] : memref<32x128xf32, #tpu.memory_space<vmem>>, vector<32x128xf32>
      %c0_12 = arith.constant 0 : index
      %c0_13 = arith.constant 0 : index
      %13 = vector.load %arg5[%c0_12, %c0_13] : memref<1x128xf32, #tpu.memory_space<vmem>>, vector<1x128xf32>
      %14 = vector.broadcast %13 : vector<1x128xf32> to vector<32x128xf32>
      %15 = arith.addf %12, %14 : vector<32x128xf32>
      %16 = arith.truncf %15 : vector<32x128xf32> to vector<32x128xbf16>
      %c0_14 = arith.constant 0 : index
      %c0_15 = arith.constant 0 : index
      %17 = vector.load %arg6[%c0_14, %c0_15] : memref<32x128xbf16, #tpu.memory_space<vmem>>, vector<32x128xbf16>
      tpu.vector_store %arg6[%c0_14, %c0_15], %16 {strides = array<i32>} : memref<32x128xbf16, #tpu.memory_space<vmem>>, vector<32x128xbf16>,
      %cst_16 = arith.constant dense<0.000000e+00> : vector<128xf32>
      %18 = vector.multi_reduction <add>, %15, %cst_16 [0] : vector<32x128xf32> to vector<128xf32>
      %19 = vector.shape_cast %18 : vector<128xf32> to vector<1x128xf32>
      %20 = arith.mulf %15, %15 : vector<32x128xf32>
      %cst_17 = arith.constant dense<0.000000e+00> : vector<128xf32>
      %21 = vector.multi_reduction <add>, %20, %cst_17 [0] : vector<32x128xf32> to vector<128xf32>
      %22 = vector.shape_cast %21 : vector<128xf32> to vector<1x128xf32>
      %23 = tpu.iota {dimensions = array<i32: 0>} : vector<8x128xi32>
      %c0_i32_18 = arith.constant 0 : i32
      %24 = vector.broadcast %c0_i32_18 : i32 to vector<8x128xi32>
      %25 = arith.cmpi eq, %23, %24 : vector<8x128xi32>
      %c1_i32 = arith.constant 1 : i32
      %26 = vector.broadcast %c1_i32 : i32 to vector<8x128xi32>
      %27 = arith.cmpi eq, %23, %26 : vector<8x128xi32>
      %cst_19 = arith.constant 0.000000e+00 : f32
      %28 = vector.shape_cast %22 : vector<1x128xf32> to vector<1x128xf32>
      %29 = vector.broadcast %28 : vector<1x128xf32> to vector<8x128xf32>
      %30 = vector.broadcast %cst_19 : f32 to vector<8x128xf32>
      %31 = arith.select %27, %29, %30 : vector<8x128xi1>, vector<8x128xf32>
      %32 = vector.shape_cast %19 : vector<1x128xf32> to vector<1x128xf32>
      %33 = vector.broadcast %32 : vector<1x128xf32> to vector<8x128xf32>
      %34 = arith.select %25, %33, %31 : vector<8x128xi1>, vector<8x128xf32>
      %c0_20 = arith.constant 0 : index
      %c0_21 = arith.constant 0 : index
      %35 = vector.load %arg7[%c0_20, %c0_21] : memref<8x128xf32, #tpu.memory_space<vmem>>, vector<8x128xf32>
      tpu.vector_store %arg7[%c0_20, %c0_21], %34 {strides = array<i32>} : memref<8x128xf32, #tpu.memory_space<vmem>>, vector<8x128xf32>,
    } else {
    }
    return
  }
  func.func @transform_0(%arg0: i32, %arg1: i32, %arg2: i32) -> (i32, i32) {
    %c0_i32 = arith.constant 0 : i32
    return %arg0, %arg2 : i32, i32
  }
  func.func @transform_1(%arg0: i32, %arg1: i32, %arg2: i32) -> (i32, i32) {
    %c0_i32 = arith.constant 0 : i32
    return %arg2, %arg1 : i32, i32
  }
  func.func @transform_2(%arg0: i32, %arg1: i32, %arg2: i32) -> (i32, i32) {
    %c0_i32 = arith.constant 0 : i32
    %c0_i32_0 = arith.constant 0 : i32
    return %c0_i32, %arg1 : i32, i32
  }
  func.func @transform_3(%arg0: i32, %arg1: i32, %arg2: i32) -> (i32, i32) {
    %c0_i32 = arith.constant 0 : i32
    return %arg0, %arg1 : i32, i32
  }
  func.func @transform_4(%arg0: i32, %arg1: i32, %arg2: i32) -> (i32, i32) {
    %c0_i32 = arith.constant 0 : i32
    return %arg0, %arg1 : i32, i32
  }
}

module attributes {stable_mosaic.version = 11 : i64} {
  func.func @_bn_act_kernel(%arg0: i32, %arg1: memref<32x128xbf16, #tpu.memory_space<vmem>>, %arg2: memref<1x128xf32, #tpu.memory_space<vmem>>, %arg3: memref<1x128xf32, #tpu.memory_space<vmem>>, %arg4: memref<32x128xbf16, #tpu.memory_space<vmem>>) attributes {dimension_semantics = [#tpu.dimension_semantics<parallel>], iteration_bounds = array<i64: 1>, scalar_prefetch = 0 : i64, scratch_operands = 0 : i64, tpu.core_type = #tpu.core_type<tc>, window_params = [{transform_indices = @transform_0, window_bounds = array<i64: 32, 128>}, {pipeline_mode = #tpu.pipeline_mode<synchronous>, transform_indices = @transform_1, window_bounds = array<i64: 1, 128>}, {pipeline_mode = #tpu.pipeline_mode<synchronous>, transform_indices = @transform_2, window_bounds = array<i64: 1, 128>}, {transform_indices = @transform_3, window_bounds = array<i64: 32, 128>}]} {
    %c0 = arith.constant 0 : index
    %c0_0 = arith.constant 0 : index
    %0 = vector.load %arg1[%c0, %c0_0] : memref<32x128xbf16, #tpu.memory_space<vmem>>, vector<32x128xbf16>
    %1 = arith.extf %0 : vector<32x128xbf16> to vector<32x128xf32>
    %c0_1 = arith.constant 0 : index
    %c0_2 = arith.constant 0 : index
    %2 = vector.load %arg2[%c0_1, %c0_2] : memref<1x128xf32, #tpu.memory_space<vmem>>, vector<1x128xf32>
    %3 = vector.broadcast %2 : vector<1x128xf32> to vector<32x128xf32>
    %4 = arith.mulf %1, %3 : vector<32x128xf32>
    %c0_3 = arith.constant 0 : index
    %c0_4 = arith.constant 0 : index
    %5 = vector.load %arg3[%c0_3, %c0_4] : memref<1x128xf32, #tpu.memory_space<vmem>>, vector<1x128xf32>
    %6 = vector.broadcast %5 : vector<1x128xf32> to vector<32x128xf32>
    %7 = arith.addf %4, %6 : vector<32x128xf32>
    %cst = arith.constant 0.000000e+00 : f32
    %8 = vector.broadcast %cst : f32 to vector<32x128xf32>
    %9 = arith.cmpf oge, %7, %8 : vector<32x128xf32>
    %cst_5 = arith.constant 2.000000e-01 : f32
    %10 = vector.broadcast %cst_5 : f32 to vector<32x128xf32>
    %11 = arith.mulf %10, %7 : vector<32x128xf32>
    %12 = arith.select %9, %7, %11 : vector<32x128xi1>, vector<32x128xf32>
    %13 = arith.truncf %12 : vector<32x128xf32> to vector<32x128xbf16>
    %c0_6 = arith.constant 0 : index
    %c0_7 = arith.constant 0 : index
    %14 = vector.load %arg4[%c0_6, %c0_7] : memref<32x128xbf16, #tpu.memory_space<vmem>>, vector<32x128xbf16>
    tpu.vector_store %arg4[%c0_6, %c0_7], %13 {strides = array<i32>} : memref<32x128xbf16, #tpu.memory_space<vmem>>, vector<32x128xbf16>,
    return
  }
  func.func @transform_0(%arg0: i32) -> (i32, i32) {
    %c0_i32 = arith.constant 0 : i32
    %c0_i32_0 = arith.constant 0 : i32
    return %arg0, %c0_i32 : i32, i32
  }
  func.func @transform_1(%arg0: i32) -> (i32, i32) {
    %c0_i32 = arith.constant 0 : i32
    %c0_i32_0 = arith.constant 0 : i32
    %c0_i32_1 = arith.constant 0 : i32
    return %c0_i32, %c0_i32_0 : i32, i32
  }
  func.func @transform_2(%arg0: i32) -> (i32, i32) {
    %c0_i32 = arith.constant 0 : i32
    %c0_i32_0 = arith.constant 0 : i32
    %c0_i32_1 = arith.constant 0 : i32
    return %c0_i32, %c0_i32_0 : i32, i32
  }
  func.func @transform_3(%arg0: i32) -> (i32, i32) {
    %c0_i32 = arith.constant 0 : i32
    %c0_i32_0 = arith.constant 0 : i32
    return %arg0, %c0_i32 : i32, i32
  }
}

module attributes {stable_mosaic.version = 11 : i64} {
  func.func @_conv_gemm_kernel(%arg0: i32, %arg1: i32, %arg2: i32, %arg3: memref<32x1024xbf16, #tpu.memory_space<vmem>>, %arg4: memref<1024x128xbf16, #tpu.memory_space<vmem>>, %arg5: memref<1x128xf32, #tpu.memory_space<vmem>>, %arg6: memref<32x128xbf16, #tpu.memory_space<vmem>>, %arg7: memref<8x128xf32, #tpu.memory_space<vmem>>, %arg8: memref<32x128xf32, #tpu.memory_space<vmem>>) attributes {dimension_semantics = [#tpu.dimension_semantics<parallel>, #tpu.dimension_semantics<parallel>, #tpu.dimension_semantics<arbitrary>], iteration_bounds = array<i64: 1, 1, 1>, scalar_prefetch = 0 : i64, scratch_operands = 1 : i64, tpu.core_type = #tpu.core_type<tc>, window_params = [{transform_indices = @transform_0, window_bounds = array<i64: 32, 1024>}, {transform_indices = @transform_1, window_bounds = array<i64: 1024, 128>}, {transform_indices = @transform_2, window_bounds = array<i64: 1, 128>}, {transform_indices = @transform_3, window_bounds = array<i64: 32, 128>}, {transform_indices = @transform_4, window_bounds = array<i64: 8, 128>}]} {
    %c0_i32 = arith.constant 0 : i32
    %0 = arith.cmpi eq, %arg2, %c0_i32 : i32
    %1 = arith.extui %0 : i1 to i32
    %c0_i32_0 = arith.constant 0 : i32
    %2 = arith.cmpi ne, %1, %c0_i32_0 : i32
    scf.if %2 {
      %cst_10 = arith.constant 0.000000e+00 : f32
      %12 = vector.broadcast %cst_10 : f32 to vector<32x128xf32>
      %c0_11 = arith.constant 0 : index
      %c0_12 = arith.constant 0 : index
      %13 = vector.load %arg8[%c0_11, %c0_12] : memref<32x128xf32, #tpu.memory_space<vmem>>, vector<32x128xf32>
      tpu.vector_store %arg8[%c0_11, %c0_12], %12 {strides = array<i32>} : memref<32x128xf32, #tpu.memory_space<vmem>>, vector<32x128xf32>,
    } else {
    }
    %c0 = arith.constant 0 : index
    %c0_1 = arith.constant 0 : index
    %3 = vector.load %arg8[%c0, %c0_1] : memref<32x128xf32, #tpu.memory_space<vmem>>, vector<32x128xf32>
    %c0_2 = arith.constant 0 : index
    %c0_3 = arith.constant 0 : index
    %4 = vector.load %arg3[%c0_2, %c0_3] : memref<32x1024xbf16, #tpu.memory_space<vmem>>, vector<32x1024xbf16>
    %c0_4 = arith.constant 0 : index
    %c0_5 = arith.constant 0 : index
    %5 = vector.load %arg4[%c0_4, %c0_5] : memref<1024x128xbf16, #tpu.memory_space<vmem>>, vector<1024x128xbf16>
    %cst = arith.constant dense<0.000000e+00> : vector<32x128xf32>
    %6 = tpu.matmul %4, %5, %cst {dimension_numbers = #tpu.dot_dimension_numbers<[1], [0], [0], [1], [0, 0, 1, 1], [], []>} : vector<32x1024xbf16>, vector<1024x128xbf16>, vector<32x128xf32> -> vector<32x128xf32>
    %7 = arith.addf %3, %6 : vector<32x128xf32>
    %c0_6 = arith.constant 0 : index
    %c0_7 = arith.constant 0 : index
    %8 = vector.load %arg8[%c0_6, %c0_7] : memref<32x128xf32, #tpu.memory_space<vmem>>, vector<32x128xf32>
    tpu.vector_store %arg8[%c0_6, %c0_7], %7 {strides = array<i32>} : memref<32x128xf32, #tpu.memory_space<vmem>>, vector<32x128xf32>,
    %c0_i32_8 = arith.constant 0 : i32
    %9 = arith.cmpi eq, %arg2, %c0_i32_8 : i32
    %10 = arith.extui %9 : i1 to i32
    %c0_i32_9 = arith.constant 0 : i32
    %11 = arith.cmpi ne, %10, %c0_i32_9 : i32
    scf.if %11 {
      %c0_10 = arith.constant 0 : index
      %c0_11 = arith.constant 0 : index
      %12 = vector.load %arg8[%c0_10, %c0_11] : memref<32x128xf32, #tpu.memory_space<vmem>>, vector<32x128xf32>
      %c0_12 = arith.constant 0 : index
      %c0_13 = arith.constant 0 : index
      %13 = vector.load %arg5[%c0_12, %c0_13] : memref<1x128xf32, #tpu.memory_space<vmem>>, vector<1x128xf32>
      %14 = vector.broadcast %13 : vector<1x128xf32> to vector<32x128xf32>
      %15 = arith.addf %12, %14 : vector<32x128xf32>
      %16 = arith.truncf %15 : vector<32x128xf32> to vector<32x128xbf16>
      %c0_14 = arith.constant 0 : index
      %c0_15 = arith.constant 0 : index
      %17 = vector.load %arg6[%c0_14, %c0_15] : memref<32x128xbf16, #tpu.memory_space<vmem>>, vector<32x128xbf16>
      tpu.vector_store %arg6[%c0_14, %c0_15], %16 {strides = array<i32>} : memref<32x128xbf16, #tpu.memory_space<vmem>>, vector<32x128xbf16>,
      %cst_16 = arith.constant dense<0.000000e+00> : vector<128xf32>
      %18 = vector.multi_reduction <add>, %15, %cst_16 [0] : vector<32x128xf32> to vector<128xf32>
      %19 = vector.shape_cast %18 : vector<128xf32> to vector<1x128xf32>
      %20 = arith.mulf %15, %15 : vector<32x128xf32>
      %cst_17 = arith.constant dense<0.000000e+00> : vector<128xf32>
      %21 = vector.multi_reduction <add>, %20, %cst_17 [0] : vector<32x128xf32> to vector<128xf32>
      %22 = vector.shape_cast %21 : vector<128xf32> to vector<1x128xf32>
      %23 = tpu.iota {dimensions = array<i32: 0>} : vector<8x128xi32>
      %c0_i32_18 = arith.constant 0 : i32
      %24 = vector.broadcast %c0_i32_18 : i32 to vector<8x128xi32>
      %25 = arith.cmpi eq, %23, %24 : vector<8x128xi32>
      %c1_i32 = arith.constant 1 : i32
      %26 = vector.broadcast %c1_i32 : i32 to vector<8x128xi32>
      %27 = arith.cmpi eq, %23, %26 : vector<8x128xi32>
      %cst_19 = arith.constant 0.000000e+00 : f32
      %28 = vector.shape_cast %22 : vector<1x128xf32> to vector<1x128xf32>
      %29 = vector.broadcast %28 : vector<1x128xf32> to vector<8x128xf32>
      %30 = vector.broadcast %cst_19 : f32 to vector<8x128xf32>
      %31 = arith.select %27, %29, %30 : vector<8x128xi1>, vector<8x128xf32>
      %32 = vector.shape_cast %19 : vector<1x128xf32> to vector<1x128xf32>
      %33 = vector.broadcast %32 : vector<1x128xf32> to vector<8x128xf32>
      %34 = arith.select %25, %33, %31 : vector<8x128xi1>, vector<8x128xf32>
      %c0_20 = arith.constant 0 : index
      %c0_21 = arith.constant 0 : index
      %35 = vector.load %arg7[%c0_20, %c0_21] : memref<8x128xf32, #tpu.memory_space<vmem>>, vector<8x128xf32>
      tpu.vector_store %arg7[%c0_20, %c0_21], %34 {strides = array<i32>} : memref<8x128xf32, #tpu.memory_space<vmem>>, vector<8x128xf32>,
    } else {
    }
    return
  }
  func.func @transform_0(%arg0: i32, %arg1: i32, %arg2: i32) -> (i32, i32) {
    %c0_i32 = arith.constant 0 : i32
    return %arg0, %arg2 : i32, i32
  }
  func.func @transform_1(%arg0: i32, %arg1: i32, %arg2: i32) -> (i32, i32) {
    %c0_i32 = arith.constant 0 : i32
    return %arg2, %arg1 : i32, i32
  }
  func.func @transform_2(%arg0: i32, %arg1: i32, %arg2: i32) -> (i32, i32) {
    %c0_i32 = arith.constant 0 : i32
    %c0_i32_0 = arith.constant 0 : i32
    return %c0_i32, %arg1 : i32, i32
  }
  func.func @transform_3(%arg0: i32, %arg1: i32, %arg2: i32) -> (i32, i32) {
    %c0_i32 = arith.constant 0 : i32
    return %arg0, %arg1 : i32, i32
  }
  func.func @transform_4(%arg0: i32, %arg1: i32, %arg2: i32) -> (i32, i32) {
    %c0_i32 = arith.constant 0 : i32
    return %arg0, %arg1 : i32, i32
  }
}

module attributes {stable_mosaic.version = 11 : i64} {
  func.func @_bn_finalize_kernel(%arg0: i32, %arg1: memref<8x128xf32, #tpu.memory_space<vmem>>, %arg2: memref<1x128xf32, #tpu.memory_space<vmem>>, %arg3: memref<1x128xf32, #tpu.memory_space<vmem>>) attributes {dimension_semantics = [#tpu.dimension_semantics<parallel>], iteration_bounds = array<i64: 1>, scalar_prefetch = 0 : i64, scratch_operands = 0 : i64, tpu.core_type = #tpu.core_type<tc>, window_params = [{transform_indices = @transform_0, window_bounds = array<i64: 8, 128>}, {transform_indices = @transform_1, window_bounds = array<i64: 1, 128>}, {transform_indices = @transform_2, window_bounds = array<i64: 1, 128>}]} {
    %c0 = arith.constant 0 : index
    %c0_0 = arith.constant 0 : index
    %0 = vector.load %arg1[%c0, %c0_0] : memref<8x128xf32, #tpu.memory_space<vmem>>, vector<8x128xf32>
    %1 = tpu.iota {dimensions = array<i32: 0>} : vector<8x128xi32>
    %c8_i32 = arith.constant 8 : i32
    %c0_i32 = arith.constant 0 : i32
    %2 = arith.cmpi eq, %c8_i32, %c0_i32 : i32
    %c1_i32 = arith.constant 1 : i32
    %3 = arith.select %2, %c1_i32, %c8_i32 : i32
    %4 = vector.broadcast %3 : i32 to vector<8x128xi32>
    %5 = arith.remsi %1, %4 : vector<8x128xi32>
    %c0_i32_1 = arith.constant 0 : i32
    %6 = vector.broadcast %c0_i32_1 : i32 to vector<8x128xi32>
    %7 = arith.cmpi ne, %5, %6 : vector<8x128xi32>
    %c0_i32_2 = arith.constant 0 : i32
    %8 = vector.broadcast %c0_i32_2 : i32 to vector<8x128xi32>
    %9 = arith.cmpi slt, %5, %8 : vector<8x128xi32>
    %c0_i32_3 = arith.constant 0 : i32
    %10 = arith.cmpi slt, %3, %c0_i32_3 : i32
    %11 = vector.broadcast %10 : i1 to vector<8x128xi1>
    %12 = vector.broadcast %11 : vector<8x128xi1> to vector<8x128xi1>
    %13 = arith.xori %9, %12 : vector<8x128xi1>
    %14 = arith.andi %13, %7 : vector<8x128xi1>
    %15 = vector.broadcast %3 : i32 to vector<8x128xi32>
    %16 = arith.addi %5, %15 : vector<8x128xi32>
    %17 = arith.select %14, %16, %5 : vector<8x128xi1>, vector<8x128xi32>
    %c0_i32_4 = arith.constant 0 : i32
    %18 = vector.broadcast %c0_i32_4 : i32 to vector<8x128xi32>
    %19 = arith.cmpi eq, %17, %18 : vector<8x128xi32>
    %cst = arith.constant 0.000000e+00 : f32
    %20 = vector.broadcast %cst : f32 to vector<8x128xf32>
    %21 = arith.select %19, %0, %20 : vector<8x128xi1>, vector<8x128xf32>
    %cst_5 = arith.constant dense<0.000000e+00> : vector<128xf32>
    %22 = vector.multi_reduction <add>, %21, %cst_5 [0] : vector<8x128xf32> to vector<128xf32>
    %23 = vector.shape_cast %22 : vector<128xf32> to vector<1x128xf32>
    %c8_i32_6 = arith.constant 8 : i32
    %c0_i32_7 = arith.constant 0 : i32
    %24 = arith.cmpi eq, %c8_i32_6, %c0_i32_7 : i32
    %c1_i32_8 = arith.constant 1 : i32
    %25 = arith.select %24, %c1_i32_8, %c8_i32_6 : i32
    %26 = vector.broadcast %25 : i32 to vector<8x128xi32>
    %27 = arith.remsi %1, %26 : vector<8x128xi32>
    %c0_i32_9 = arith.constant 0 : i32
    %28 = vector.broadcast %c0_i32_9 : i32 to vector<8x128xi32>
    %29 = arith.cmpi ne, %27, %28 : vector<8x128xi32>
    %c0_i32_10 = arith.constant 0 : i32
    %30 = vector.broadcast %c0_i32_10 : i32 to vector<8x128xi32>
    %31 = arith.cmpi slt, %27, %30 : vector<8x128xi32>
    %c0_i32_11 = arith.constant 0 : i32
    %32 = arith.cmpi slt, %25, %c0_i32_11 : i32
    %33 = vector.broadcast %32 : i1 to vector<8x128xi1>
    %34 = vector.broadcast %33 : vector<8x128xi1> to vector<8x128xi1>
    %35 = arith.xori %31, %34 : vector<8x128xi1>
    %36 = arith.andi %35, %29 : vector<8x128xi1>
    %37 = vector.broadcast %25 : i32 to vector<8x128xi32>
    %38 = arith.addi %27, %37 : vector<8x128xi32>
    %39 = arith.select %36, %38, %27 : vector<8x128xi1>, vector<8x128xi32>
    %c1_i32_12 = arith.constant 1 : i32
    %40 = vector.broadcast %c1_i32_12 : i32 to vector<8x128xi32>
    %41 = arith.cmpi eq, %39, %40 : vector<8x128xi32>
    %cst_13 = arith.constant 0.000000e+00 : f32
    %42 = vector.broadcast %cst_13 : f32 to vector<8x128xf32>
    %43 = arith.select %41, %0, %42 : vector<8x128xi1>, vector<8x128xf32>
    %cst_14 = arith.constant dense<0.000000e+00> : vector<128xf32>
    %44 = vector.multi_reduction <add>, %43, %cst_14 [0] : vector<8x128xf32> to vector<128xf32>
    %45 = vector.shape_cast %44 : vector<128xf32> to vector<1x128xf32>
    %cst_15 = arith.constant 0.055555556 : f32
    %46 = vector.broadcast %cst_15 : f32 to vector<1x128xf32>
    %47 = arith.mulf %23, %46 : vector<1x128xf32>
    %cst_16 = arith.constant 0.055555556 : f32
    %48 = vector.broadcast %cst_16 : f32 to vector<1x128xf32>
    %49 = arith.mulf %45, %48 : vector<1x128xf32>
    %50 = arith.mulf %47, %47 : vector<1x128xf32>
    %51 = arith.subf %49, %50 : vector<1x128xf32>
    %cst_17 = arith.constant 0.000000e+00 : f32
    %52 = vector.broadcast %cst_17 : f32 to vector<1x128xf32>
    %53 = arith.maximumf %51, %52 : vector<1x128xf32>
    %cst_18 = arith.constant 9.99999974E-6 : f32
    %54 = vector.broadcast %cst_18 : f32 to vector<1x128xf32>
    %55 = arith.addf %53, %54 : vector<1x128xf32>
    %56 = math.rsqrt %55 : vector<1x128xf32>
    %c0_19 = arith.constant 0 : index
    %c0_20 = arith.constant 0 : index
    %57 = vector.load %arg2[%c0_19, %c0_20] : memref<1x128xf32, #tpu.memory_space<vmem>>, vector<1x128xf32>
    tpu.vector_store %arg2[%c0_19, %c0_20], %56 {strides = array<i32>} : memref<1x128xf32, #tpu.memory_space<vmem>>, vector<1x128xf32>,
    %cst_21 = arith.constant 0.000000e+00 : f32
    %58 = vector.broadcast %cst_21 : f32 to vector<1x128xf32>
    %59 = arith.subf %58, %47 : vector<1x128xf32>
    %60 = arith.mulf %59, %56 : vector<1x128xf32>
    %c0_22 = arith.constant 0 : index
    %c0_23 = arith.constant 0 : index
    %61 = vector.load %arg3[%c0_22, %c0_23] : memref<1x128xf32, #tpu.memory_space<vmem>>, vector<1x128xf32>
    tpu.vector_store %arg3[%c0_22, %c0_23], %60 {strides = array<i32>} : memref<1x128xf32, #tpu.memory_space<vmem>>, vector<1x128xf32>,
    return
  }
  func.func @transform_0(%arg0: i32) -> (i32, i32) {
    %c0_i32 = arith.constant 0 : i32
    %c0_i32_0 = arith.constant 0 : i32
    return %c0_i32, %arg0 : i32, i32
  }
  func.func @transform_1(%arg0: i32) -> (i32, i32) {
    %c0_i32 = arith.constant 0 : i32
    %c0_i32_0 = arith.constant 0 : i32
    return %c0_i32, %arg0 : i32, i32
  }
  func.func @transform_2(%arg0: i32) -> (i32, i32) {
    %c0_i32 = arith.constant 0 : i32
    %c0_i32_0 = arith.constant 0 : i32
    return %c0_i32, %arg0 : i32, i32
  }
}

module attributes {stable_mosaic.version = 11 : i64} {
  func.func @_conv_gemm_kernel(%arg0: i32, %arg1: i32, %arg2: i32, %arg3: memref<16x2048xbf16, #tpu.memory_space<vmem>>, %arg4: memref<2048x128xbf16, #tpu.memory_space<vmem>>, %arg5: memref<1x128xf32, #tpu.memory_space<vmem>>, %arg6: memref<16x128xf32, #tpu.memory_space<vmem>>, %arg7: memref<16x128xf32, #tpu.memory_space<vmem>>) attributes {dimension_semantics = [#tpu.dimension_semantics<parallel>, #tpu.dimension_semantics<parallel>, #tpu.dimension_semantics<arbitrary>], iteration_bounds = array<i64: 1, 1, 1>, scalar_prefetch = 0 : i64, scratch_operands = 1 : i64, tpu.core_type = #tpu.core_type<tc>, window_params = [{transform_indices = @transform_0, window_bounds = array<i64: 16, 2048>}, {transform_indices = @transform_1, window_bounds = array<i64: 2048, 128>}, {transform_indices = @transform_2, window_bounds = array<i64: 1, 128>}, {transform_indices = @transform_3, window_bounds = array<i64: 16, 128>}]} {
    %c0_i32 = arith.constant 0 : i32
    %0 = arith.cmpi eq, %arg2, %c0_i32 : i32
    %1 = arith.extui %0 : i1 to i32
    %c0_i32_0 = arith.constant 0 : i32
    %2 = arith.cmpi ne, %1, %c0_i32_0 : i32
    scf.if %2 {
      %cst_10 = arith.constant 0.000000e+00 : f32
      %12 = vector.broadcast %cst_10 : f32 to vector<16x128xf32>
      %c0_11 = arith.constant 0 : index
      %c0_12 = arith.constant 0 : index
      %13 = vector.load %arg7[%c0_11, %c0_12] : memref<16x128xf32, #tpu.memory_space<vmem>>, vector<16x128xf32>
      tpu.vector_store %arg7[%c0_11, %c0_12], %12 {strides = array<i32>} : memref<16x128xf32, #tpu.memory_space<vmem>>, vector<16x128xf32>,
    } else {
    }
    %c0 = arith.constant 0 : index
    %c0_1 = arith.constant 0 : index
    %3 = vector.load %arg7[%c0, %c0_1] : memref<16x128xf32, #tpu.memory_space<vmem>>, vector<16x128xf32>
    %c0_2 = arith.constant 0 : index
    %c0_3 = arith.constant 0 : index
    %4 = vector.load %arg3[%c0_2, %c0_3] : memref<16x2048xbf16, #tpu.memory_space<vmem>>, vector<16x2048xbf16>
    %c0_4 = arith.constant 0 : index
    %c0_5 = arith.constant 0 : index
    %5 = vector.load %arg4[%c0_4, %c0_5] : memref<2048x128xbf16, #tpu.memory_space<vmem>>, vector<2048x128xbf16>
    %cst = arith.constant dense<0.000000e+00> : vector<16x128xf32>
    %6 = tpu.matmul %4, %5, %cst {dimension_numbers = #tpu.dot_dimension_numbers<[1], [0], [0], [1], [0, 0, 1, 1], [], []>} : vector<16x2048xbf16>, vector<2048x128xbf16>, vector<16x128xf32> -> vector<16x128xf32>
    %7 = arith.addf %3, %6 : vector<16x128xf32>
    %c0_6 = arith.constant 0 : index
    %c0_7 = arith.constant 0 : index
    %8 = vector.load %arg7[%c0_6, %c0_7] : memref<16x128xf32, #tpu.memory_space<vmem>>, vector<16x128xf32>
    tpu.vector_store %arg7[%c0_6, %c0_7], %7 {strides = array<i32>} : memref<16x128xf32, #tpu.memory_space<vmem>>, vector<16x128xf32>,
    %c0_i32_8 = arith.constant 0 : i32
    %9 = arith.cmpi eq, %arg2, %c0_i32_8 : i32
    %10 = arith.extui %9 : i1 to i32
    %c0_i32_9 = arith.constant 0 : i32
    %11 = arith.cmpi ne, %10, %c0_i32_9 : i32
    scf.if %11 {
      %c0_10 = arith.constant 0 : index
      %c0_11 = arith.constant 0 : index
      %12 = vector.load %arg7[%c0_10, %c0_11] : memref<16x128xf32, #tpu.memory_space<vmem>>, vector<16x128xf32>
      %c0_12 = arith.constant 0 : index
      %c0_13 = arith.constant 0 : index
      %13 = vector.load %arg5[%c0_12, %c0_13] : memref<1x128xf32, #tpu.memory_space<vmem>>, vector<1x128xf32>
      %14 = vector.broadcast %13 : vector<1x128xf32> to vector<16x128xf32>
      %15 = arith.addf %12, %14 : vector<16x128xf32>
      %c0_14 = arith.constant 0 : index
      %c0_15 = arith.constant 0 : index
      %16 = vector.load %arg6[%c0_14, %c0_15] : memref<16x128xf32, #tpu.memory_space<vmem>>, vector<16x128xf32>
      tpu.vector_store %arg6[%c0_14, %c0_15], %15 {strides = array<i32>} : memref<16x128xf32, #tpu.memory_space<vmem>>, vector<16x128xf32>,
    } else {
    }
    return
  }
  func.func @transform_0(%arg0: i32, %arg1: i32, %arg2: i32) -> (i32, i32) {
    %c0_i32 = arith.constant 0 : i32
    return %arg0, %arg2 : i32, i32
  }
  func.func @transform_1(%arg0: i32, %arg1: i32, %arg2: i32) -> (i32, i32) {
    %c0_i32 = arith.constant 0 : i32
    return %arg2, %arg1 : i32, i32
  }
  func.func @transform_2(%arg0: i32, %arg1: i32, %arg2: i32) -> (i32, i32) {
    %c0_i32 = arith.constant 0 : i32
    %c0_i32_0 = arith.constant 0 : i32
    return %c0_i32, %arg1 : i32, i32
  }
  func.func @transform_3(%arg0: i32, %arg1: i32, %arg2: i32) -> (i32, i32) {
    %c0_i32 = arith.constant 0 : i32
    return %arg0, %arg1 : i32, i32
  }
}

</mosaic_0001>

<llo_original>
// kernel: _lambda_.11
$region0: #{_lambda_.11}
  #allocation0 [shape = 'u32[]', space=smem, size = 0x4, offset = 0x4, fixed_abs, tag = 'smem constant byte address 0x4 - core index']
  #allocation1 [shape = 'u32[144,128]{1,0:T(1,128)}', space=vmem, size = 0x12000, scoped, tag = 'internal scratch']
  #allocation2 [shape = 'f32[512,128]{1,0:T(8,128)}', space=vmem, size = 0x40000, scoped, tag = 'scratch operand']
  %s0 = inlined_call_operand.vmem [shape: bf16[512,48], index: 0, kind: input, shape index: {}]
  %s1 = inlined_call_operand.vmem [shape: bf16[48,128], index: 1, kind: input, shape index: {}]
  %s2 = inlined_call_operand.vmem [shape: f32[1,128], index: 2, kind: input, shape index: {}]
  %s3 = inlined_call_operand.vmem [shape: bf16[512,128], index: 3, kind: output, shape index: {}]
  %s4 = sld [smem:[#allocation0]]
  $region30: #{_lambda_.11} parent=0
    _
  %s6 = ssub.s32 1, %s4
  %s7 = scalar_select 0, %s6, %s4
  // Predicated region
  $region2: #{_lambda_.11} parent=0 // pred_check
    _
  $region3: #{_lambda_.11} parent=0 // pred_check_branch
    %9 = sbr.rel (0) target = $region5
  $region4: #{_lambda_.11} parent=0 // pred_region
    _
  $region5: #{_lambda_.11} parent=0 // pred_fallthru
    _
  // Predicated region
  $region6: #{_lambda_.11} parent=0 // pred_check
    _
  $region7: #{_lambda_.11} parent=0 // pred_check_branch
    %11 = sbr.rel (0) target = $region9
  $region8: #{_lambda_.11} parent=0 // pred_region
    _
  $region9: #{_lambda_.11} parent=0 // pred_fallthru
    _
  // Predicated region
  $region10: #{_lambda_.11} parent=0 // pred_check
    _
  $region11: #{_lambda_.11} parent=0 // pred_check_branch
    %13 = sbr.rel (0) target = $region13
  $region12: #{_lambda_.11} parent=0 // pred_region
    _
  $region13: #{_lambda_.11} parent=0 // pred_fallthru
    _
  %p15 = scmp.eq.s32.totalorder 0, 0
  // Predicated region
  $region14: #{_lambda_.11} parent=0 // pred_check
    %p16 = pneg %p15
  $region15: #{_lambda_.11} parent=0 // pred_check_branch
    %18 = sbr.rel (%p16) target = $region17
  $region16: #{_lambda_.11} parent=0 // pred_region
    %19 = vst [vmem:[#allocation2] sm:$0xff] 0.0
    %20 = vst [vmem:[#allocation2 + $0x8] sm:$0xff] 0.0
    %21 = vst [vmem:[#allocation2 + $0x10] sm:$0xff] 0.0
    %22 = vst [vmem:[#allocation2 + $0x18] sm:$0xff] 0.0
    %23 = vst [vmem:[#allocation2 + $0x20] sm:$0xff] 0.0
    %24 = vst [vmem:[#allocation2 + $0x28] sm:$0xff] 0.0
    %25 = vst [vmem:[#allocation2 + $0x30] sm:$0xff] 0.0
    %26 = vst [vmem:[#allocation2 + $0x38] sm:$0xff] 0.0
    %27 = vst [vmem:[#allocation2 + $0x40] sm:$0xff] 0.0
    %28 = vst [vmem:[#allocation2 + $0x48] sm:$0xff] 0.0
    %29 = vst [vmem:[#allocation2 + $0x50] sm:$0xff] 0.0
    %30 = vst [vmem:[#allocation2 + $0x58] sm:$0xff] 0.0
    %31 = vst [vmem:[#allocation2 + $0x60] sm:$0xff] 0.0
    %32 = vst [vmem:[#allocation2 + $0x68] sm:$0xff] 0.0
    %33 = vst [vmem:[#allocation2 + $0x70] sm:$0xff] 0.0
    %34 = vst [vmem:[#allocation2 + $0x78] sm:$0xff] 0.0
    %35 = vst [vmem:[#allocation2 + $0x80] sm:$0xff] 0.0
    %36 = vst [vmem:[#allocation2 + $0x88] sm:$0xff] 0.0
    %37 = vst [vmem:[#allocation2 + $0x90] sm:$0xff] 0.0
    %38 = vst [vmem:[#allocation2 + $0x98] sm:$0xff] 0.0
    %39 = vst [vmem:[#allocation2 + $0xa0] sm:$0xff] 0.0
    %40 = vst [vmem:[#allocation2 + $0xa8] sm:$0xff] 0.0
    %41 = vst [vmem:[#allocation2 + $0xb0] sm:$0xff] 0.0
    %42 = vst [vmem:[#allocation2 + $0xb8] sm:$0xff] 0.0
    %43 = vst [vmem:[#allocation2 + $0xc0] sm:$0xff] 0.0
    %44 = vst [vmem:[#allocation2 + $0xc8] sm:$0xff] 0.0
    %45 = vst [vmem:[#allocation2 + $0xd0] sm:$0xff] 0.0
    %46 = vst [vmem:[#allocation2 + $0xd8] sm:$0xff] 0.0
    %47 = vst [vmem:[#allocation2 + $0xe0] sm:$0xff] 0.0
    %48 = vst [vmem:[#allocation2 + $0xe8] sm:$0xff] 0.0
    %49 = vst [vmem:[#allocation2 + $0xf0] sm:$0xff] 0.0
    %50 = vst [vmem:[#allocation2 + $0xf8] sm:$0xff] 0.0
    %51 = vst [vmem:[#allocation2 + $0x100] sm:$0xff] 0.0
    %52 = vst [vmem:[#allocation2 + $0x108] sm:$0xff] 0.0
    %53 = vst [vmem:[#allocation2 + $0x110] sm:$0xff] 0.0
    %54 = vst [vmem:[#allocation2 + $0x118] sm:$0xff] 0.0
    %55 = vst [vmem:[#allocation2 + $0x120] sm:$0xff] 0.0
    %56 = vst [vmem:[#allocation2 + $0x128] sm:$0xff] 0.0
    %57 = vst [vmem:[#allocation2 + $0x130] sm:$0xff] 0.0
    %58 = vst [vmem:[#allocation2 + $0x138] sm:$0xff] 0.0
    %59 = vst [vmem:[#allocation2 + $0x140] sm:$0xff] 0.0
    %60 = vst [vmem:[#allocation2 + $0x148] sm:$0xff] 0.0
    %61 = vst [vmem:[#allocation2 + $0x150] sm:$0xff] 0.0
    %62 = vst [vmem:[#allocation2 + $0x158] sm:$0xff] 0.0
    %63 = vst [vmem:[#allocation2 + $0x160] sm:$0xff] 0.0
    %64 = vst [vmem:[#allocation2 + $0x168] sm:$0xff] 0.0
    %65 = vst [vmem:[#allocation2 + $0x170] sm:$0xff] 0.0
    %66 = vst [vmem:[#allocation2 + $0x178] sm:$0xff] 0.0
    %67 = vst [vmem:[#allocation2 + $0x180] sm:$0xff] 0.0
    %68 = vst [vmem:[#allocation2 + $0x188] sm:$0xff] 0.0
    %69 = vst [vmem:[#allocation2 + $0x190] sm:$0xff] 0.0
    %70 = vst [vmem:[#allocation2 + $0x198] sm:$0xff] 0.0
    %71 = vst [vmem:[#allocation2 + $0x1a0] sm:$0xff] 0.0
    %72 = vst [vmem:[#allocation2 + $0x1a8] sm:$0xff] 0.0
    %73 = vst [vmem:[#allocation2 + $0x1b0] sm:$0xff] 0.0
    %74 = vst [vmem:[#allocation2 + $0x1b8] sm:$0xff] 0.0
    %75 = vst [vmem:[#allocation2 + $0x1c0] sm:$0xff] 0.0
    %76 = vst [vmem:[#allocation2 + $0x1c8] sm:$0xff] 0.0
    %77 = vst [vmem:[#allocation2 + $0x1d0] sm:$0xff] 0.0
    %78 = vst [vmem:[#allocation2 + $0x1d8] sm:$0xff] 0.0
    %79 = vst [vmem:[#allocation2 + $0x1e0] sm:$0xff] 0.0
    %80 = vst [vmem:[#allocation2 + $0x1e8] sm:$0xff] 0.0
    %81 = vst [vmem:[#allocation2 + $0x1f0] sm:$0xff] 0.0
    %82 = vst [vmem:[#allocation2 + $0x1f8] sm:$0xff] 0.0
  $region17: #{_lambda_.11} parent=0 // pred_fallthru
    _
  %v83 = vld [vmem:[#allocation2] sm:$0xff]
  %v84 = vld [vmem:[#allocation2 + $0x8] sm:$0xff]
  %v85 = vld [vmem:[#allocation2 + $0x10] sm:$0xff]
  %v86 = vld [vmem:[#allocation2 + $0x18] sm:$0xff]
  %v87 = vld [vmem:[#allocation2 + $0x20] sm:$0xff]
  %v88 = vld [vmem:[#allocation2 + $0x28] sm:$0xff]
  %v89 = vld [vmem:[#allocation2 + $0x30] sm:$0xff]
  %v90 = vld [vmem:[#allocation2 + $0x38] sm:$0xff]
  %v91 = vld [vmem:[#allocation2 + $0x40] sm:$0xff]
  %v92 = vld [vmem:[#allocation2 + $0x48] sm:$0xff]
  %v93 = vld [vmem:[#allocation2 + $0x50] sm:$0xff]
  %v94 = vld [vmem:[#allocation2 + $0x58] sm:$0xff]
  %v95 = vld [vmem:[#allocation2 + $0x60] sm:$0xff]
  %v96 = vld [vmem:[#allocation2 + $0x68] sm:$0xff]
  %v97 = vld [vmem:[#allocation2 + $0x70] sm:$0xff]
  %v98 = vld [vmem:[#allocation2 + $0x78] sm:$0xff]
  %v99 = vld [vmem:[#allocation2 + $0x80] sm:$0xff]
  %v100 = vld [vmem:[#allocation2 + $0x88] sm:$0xff]
  %v101 = vld [vmem:[#allocation2 + $0x90] sm:$0xff]
  %v102 = vld [vmem:[#allocation2 + $0x98] sm:$0xff]
  %v103 = vld [vmem:[#allocation2 + $0xa0] sm:$0xff]
  %v104 = vld [vmem:[#allocation2 + $0xa8] sm:$0xff]
  %v105 = vld [vmem:[#allocation2 + $0xb0] sm:$0xff]
  %v106 = vld [vmem:[#allocation2 + $0xb8] sm:$0xff]
  %v107 = vld [vmem:[#allocation2 + $0xc0] sm:$0xff]
  %v108 = vld [vmem:[#allocation2 + $0xc8] sm:$0xff]
  %v109 = vld [vmem:[#allocation2 + $0xd0] sm:$0xff]
  %v110 = vld [vmem:[#allocation2 + $0xd8] sm:$0xff]
  %v111 = vld [vmem:[#allocation2 + $0xe0] sm:$0xff]
  %v112 = vld [vmem:[#allocation2 + $0xe8] sm:$0xff]
  %v113 = vld [vmem:[#allocation2 + $0xf0] sm:$0xff]
  %v114 = vld [vmem:[#allocation2 + $0xf8] sm:$0xff]
  %v115 = vld [vmem:[#allocation2 + $0x100] sm:$0xff]
  %v116 = vld [vmem:[#allocation2 + $0x108] sm:$0xff]
  %v117 = vld [vmem:[#allocation2 + $0x110] sm:$0xff]
  %v118 = vld [vmem:[#allocation2 + $0x118] sm:$0xff]
  %v119 = vld [vmem:[#allocation2 + $0x120] sm:$0xff]
  %v120 = vld [vmem:[#allocation2 + $0x128] sm:$0xff]
  %v121 = vld [vmem:[#allocation2 + $0x130] sm:$0xff]
  %v122 = vld [vmem:[#allocation2 + $0x138] sm:$0xff]
  %v123 = vld [vmem:[#allocation2 + $0x140] sm:$0xff]
  %v124 = vld [vmem:[#allocation2 + $0x148] sm:$0xff]
  %v125 = vld [vmem:[#allocation2 + $0x150] sm:$0xff]
  %v126 = vld [vmem:[#allocation2 + $0x158] sm:$0xff]
  %v127 = vld [vmem:[#allocation2 + $0x160] sm:$0xff]
  %v128 = vld [vmem:[#allocation2 + $0x168] sm:$0xff]
  %v129 = vld [vmem:[#allocation2 + $0x170] sm:$0xff]
  %v130 = vld [vmem:[#allocation2 + $0x178] sm:$0xff]
  %v131 = vld [vmem:[#allocation2 + $0x180] sm:$0xff]
  %v132 = vld [vmem:[#allocation2 + $0x188] sm:$0xff]
  %v133 = vld [vmem:[#allocation2 + $0x190] sm:$0xff]
  %v134 = vld [vmem:[#allocation2 + $0x198] sm:$0xff]
  %v135 = vld [vmem:[#allocation2 + $0x1a0] sm:$0xff]
  %v136 = vld [vmem:[#allocation2 + $0x1a8] sm:$0xff]
  %v137 = vld [vmem:[#allocation2 + $0x1b0] sm:$0xff]
  %v138 = vld [vmem:[#allocation2 + $0x1b8] sm:$0xff]
  %v139 = vld [vmem:[#allocation2 + $0x1c0] sm:$0xff]
  %v140 = vld [vmem:[#allocation2 + $0x1c8] sm:$0xff]
  %v141 = vld [vmem:[#allocation2 + $0x1d0] sm:$0xff]
  %v142 = vld [vmem:[#allocation2 + $0x1d8] sm:$0xff]
  %v143 = vld [vmem:[#allocation2 + $0x1e0] sm:$0xff]
  %v144 = vld [vmem:[#allocation2 + $0x1e8] sm:$0xff]
  %v145 = vld [vmem:[#allocation2 + $0x1f0] sm:$0xff]
  %v146 = vld [vmem:[#allocation2 + $0x1f8] sm:$0xff]
  %v147 = vld [vmem:[%s0] sm:$0xf]
  %v148 = vld [vmem:[%s0 + $0x4] sm:$0xf]
  %v149 = vld [vmem:[%s0 + $0x8] sm:$0xf]
  %v150 = vld [vmem:[%s0 + $0xc] sm:$0xf]
  %v151 = vld [vmem:[%s0 + $0x10] sm:$0xf]
  %v152 = vld [vmem:[%s0 + $0x14] sm:$0xf]
  %v153 = vld [vmem:[%s0 + $0x18] sm:$0xf]
  %v154 = vld [vmem:[%s0 + $0x1c] sm:$0xf]
  %v155 = vld [vmem:[%s0 + $0x20] sm:$0xf]
  %v156 = vld [vmem:[%s0 + $0x24] sm:$0xf]
  %v157 = vld [vmem:[%s0 + $0x28] sm:$0xf]
  %v158 = vld [vmem:[%s0 + $0x2c] sm:$0xf]
  %v159 = vld [vmem:[%s0 + $0x30] sm:$0xf]
  %v160 = vld [vmem:[%s0 + $0x34] sm:$0xf]
  %v161 = vld [vmem:[%s0 + $0x38] sm:$0xf]
  %v162 = vld [vmem:[%s0 + $0x3c] sm:$0xf]
  %v163 = vld [vmem:[%s0 + $0x40] sm:$0xf]
  %v164 = vld [vmem:[%s0 + $0x44] sm:$0xf]
  %v165 = vld [vmem:[%s0 + $0x48] sm:$0xf]
  %v166 = vld [vmem:[%s0 + $0x4c] sm:$0xf]
  %v167 = vld [vmem:[%s0 + $0x50] sm:$0xf]
  %v168 = vld [vmem:[%s0 + $0x54] sm:$0xf]
  %v169 = vld [vmem:[%s0 + $0x58] sm:$0xf]
  %v170 = vld [vmem:[%s0 + $0x5c] sm:$0xf]
  %v171 = vld [vmem:[%s0 + $0x60] sm:$0xf]
  %v172 = vld [vmem:[%s0 + $0x64] sm:$0xf]
  %v173 = vld [vmem:[%s0 + $0x68] sm:$0xf]
  %v174 = vld [vmem:[%s0 + $0x6c] sm:$0xf]
  %v175 = vld [vmem:[%s0 + $0x70] sm:$0xf]
  %v176 = vld [vmem:[%s0 + $0x74] sm:$0xf]
  %v177 = vld [vmem:[%s0 + $0x78] sm:$0xf]
  %v178 = vld [vmem:[%s0 + $0x7c] sm:$0xf]
  %v179 = vld [vmem:[%s0 + $0x80] sm:$0xf]
  %v180 = vld [vmem:[%s0 + $0x84] sm:$0xf]
  %v181 = vld [vmem:[%s0 + $0x88] sm:$0xf]
  %v182 = vld [vmem:[%s0 + $0x8c] sm:$0xf]
  %v183 = vld [vmem:[%s0 + $0x90] sm:$0xf]
  %v184 = vld [vmem:[%s0 + $0x94] sm:$0xf]
  %v185 = vld [vmem:[%s0 + $0x98] sm:$0xf]
  %v186 = vld [vmem:[%s0 + $0x9c] sm:$0xf]
  %v187 = vld [vmem:[%s0 + $0xa0] sm:$0xf]
  %v188 = vld [vmem:[%s0 + $0xa4] sm:$0xf]
  %v189 = vld [vmem:[%s0 + $0xa8] sm:$0xf]
  %v190 = vld [vmem:[%s0 + $0xac] sm:$0xf]
  %v191 = vld [vmem:[%s0 + $0xb0] sm:$0xf]
  %v192 = vld [vmem:[%s0 + $0xb4] sm:$0xf]
  %v193 = vld [vmem:[%s0 + $0xb8] sm:$0xf]
  %v194 = vld [vmem:[%s0 + $0xbc] sm:$0xf]
  %v195 = vld [vmem:[%s0 + $0xc0] sm:$0xf]
  %v196 = vld [vmem:[%s0 + $0xc4] sm:$0xf]
  %v197 = vld [vmem:[%s0 + $0xc8] sm:$0xf]
  %v198 = vld [vmem:[%s0 + $0xcc] sm:$0xf]
  %v199 = vld [vmem:[%s0 + $0xd0] sm:$0xf]
  %v200 = vld [vmem:[%s0 + $0xd4] sm:$0xf]
  %v201 = vld [vmem:[%s0 + $0xd8] sm:$0xf]
  %v202 = vld [vmem:[%s0 + $0xdc] sm:$0xf]
  %v203 = vld [vmem:[%s0 + $0xe0] sm:$0xf]
  %v204 = vld [vmem:[%s0 + $0xe4] sm:$0xf]
  %v205 = vld [vmem:[%s0 + $0xe8] sm:$0xf]
  %v206 = vld [vmem:[%s0 + $0xec] sm:$0xf]
  %v207 = vld [vmem:[%s0 + $0xf0] sm:$0xf]
  %v208 = vld [vmem:[%s0 + $0xf4] sm:$0xf]
  %v209 = vld [vmem:[%s0 + $0xf8] sm:$0xf]
  %v210 = vld [vmem:[%s0 + $0xfc] sm:$0xf]
  %v211 = vld [vmem:[%s1] sm:$0xf]
  %v212 = vld [vmem:[%s1 + $0x4] sm:$0xf]
  %v213 = vld [vmem:[%s1 + $0x8] sm:$0xf]
  %v214 = vld [vmem:[%s1 + $0xc] sm:$0xf]
  %v215 = vld [vmem:[%s1 + $0x10] sm:$0xf]
  %v216 = vld [vmem:[%s1 + $0x14] sm:$0xf]
  %v281 = vunpack.c.l.b16 %v147
  %v282 = vunpack.c.l.b16 %v148
  %v283 = vunpack.c.l.b16 %v149
  %v284 = vunpack.c.l.b16 %v150
  %v285 = vunpack.c.l.b16 %v151
  %v286 = vunpack.c.l.b16 %v152
  %v287 = vunpack.c.l.b16 %v153
  %v288 = vunpack.c.l.b16 %v154
  %v289 = vunpack.c.l.b16 %v155
  %v290 = vunpack.c.l.b16 %v156
  %v291 = vunpack.c.l.b16 %v157
  %v292 = vunpack.c.l.b16 %v158
  %v293 = vunpack.c.l.b16 %v159
  %v294 = vunpack.c.l.b16 %v160
  %v295 = vunpack.c.l.b16 %v161
  %v296 = vunpack.c.l.b16 %v162
  %v297 = vunpack.c.l.b16 %v163
  %v298 = vunpack.c.l.b16 %v164
  %v299 = vunpack.c.l.b16 %v165
  %v300 = vunpack.c.l.b16 %v166
  %v301 = vunpack.c.l.b16 %v167
  %v302 = vunpack.c.l.b16 %v168
  %v303 = vunpack.c.l.b16 %v169
  %v304 = vunpack.c.l.b16 %v170
  %v305 = vunpack.c.l.b16 %v171
  %v306 = vunpack.c.l.b16 %v172
  %v307 = vunpack.c.l.b16 %v173
  %v308 = vunpack.c.l.b16 %v174
  %v309 = vunpack.c.l.b16 %v175
  %v310 = vunpack.c.l.b16 %v176
  %v311 = vunpack.c.l.b16 %v177
  %v312 = vunpack.c.l.b16 %v178
  %v313 = vunpack.c.l.b16 %v179
  %v314 = vunpack.c.l.b16 %v180
  %v315 = vunpack.c.l.b16 %v181
  %v316 = vunpack.c.l.b16 %v182
  %v317 = vunpack.c.l.b16 %v183
  %v318 = vunpack.c.l.b16 %v184
  %v319 = vunpack.c.l.b16 %v185
  %v320 = vunpack.c.l.b16 %v186
  %v321 = vunpack.c.l.b16 %v187
  %v322 = vunpack.c.l.b16 %v188
  %v323 = vunpack.c.l.b16 %v189
  %v324 = vunpack.c.l.b16 %v190
  %v325 = vunpack.c.l.b16 %v191
  %v326 = vunpack.c.l.b16 %v192
  %v327 = vunpack.c.l.b16 %v193
  %v328 = vunpack.c.l.b16 %v194
  %v329 = vunpack.c.l.b16 %v195
  %v330 = vunpack.c.l.b16 %v196
  %v331 = vunpack.c.l.b16 %v197
  %v332 = vunpack.c.l.b16 %v198
  %v333 = vunpack.c.l.b16 %v199
  %v334 = vunpack.c.l.b16 %v200
  %v335 = vunpack.c.l.b16 %v201
  %v336 = vunpack.c.l.b16 %v202
  %v337 = vunpack.c.l.b16 %v203
  %v338 = vunpack.c.l.b16 %v204
  %v339 = vunpack.c.l.b16 %v205
  %v340 = vunpack.c.l.b16 %v206
  %v341 = vunpack.c.l.b16 %v207
  %v342 = vunpack.c.l.b16 %v208
  %v343 = vunpack.c.l.b16 %v209
  %v344 = vunpack.c.l.b16 %v210
  %v345 = vpack.c.b16 %v282, %v281
  %v346 = vpack.c.b16 %v284, %v283
  %v347 = vpack.c.b16 %v286, %v285
  %v348 = vpack.c.b16 %v288, %v287
  %v349 = vpack.c.b16 %v290, %v289
  %v350 = vpack.c.b16 %v292, %v291
  %v351 = vpack.c.b16 %v294, %v293
  %v352 = vpack.c.b16 %v296, %v295
  %v353 = vpack.c.b16 %v298, %v297
  %v354 = vpack.c.b16 %v300, %v299
  %v355 = vpack.c.b16 %v302, %v301
  %v356 = vpack.c.b16 %v304, %v303
  %v357 = vpack.c.b16 %v306, %v305
  %v358 = vpack.c.b16 %v308, %v307
  %v359 = vpack.c.b16 %v310, %v309
  %v360 = vpack.c.b16 %v312, %v311
  %v361 = vpack.c.b16 %v314, %v313
  %v362 = vpack.c.b16 %v316, %v315
  %v363 = vpack.c.b16 %v318, %v317
  %v364 = vpack.c.b16 %v320, %v319
  %v365 = vpack.c.b16 %v322, %v321
  %v366 = vpack.c.b16 %v324, %v323
  %v367 = vpack.c.b16 %v326, %v325
  %v368 = vpack.c.b16 %v328, %v327
  %v369 = vpack.c.b16 %v330, %v329
  %v370 = vpack.c.b16 %v332, %v331
  %v371 = vpack.c.b16 %v334, %v333
  %v372 = vpack.c.b16 %v336, %v335
  %v373 = vpack.c.b16 %v338, %v337
  %v374 = vpack.c.b16 %v340, %v339
  %v375 = vpack.c.b16 %v342, %v341
  %v376 = vpack.c.b16 %v344, %v343
  %v383 = vunpack.c.l.b16 %v211
  %v384 = vunpack.c.l.b16 %v212
  %v385 = vunpack.c.l.b16 %v213
  %v386 = vunpack.c.l.b16 %v214
  %v387 = vunpack.c.l.b16 %v215
  %v388 = vunpack.c.l.b16 %v216
  %v389 = vpack.c.b16 %v384, %v383
  %v390 = vpack.c.b16 %v386, %v385
  %v391 = vpack.c.b16 %v388, %v387
  %vm395 = vcmask 392192
  %v397 = vsel %vm395, %v345, 0
  %v400 = vsel %vm395, %v346, 0
  %v403 = vsel %vm395, %v347, 0
  %v406 = vsel %vm395, %v348, 0
  %v409 = vsel %vm395, %v349, 0
  %v412 = vsel %vm395, %v350, 0
  %v415 = vsel %vm395, %v351, 0
  %v418 = vsel %vm395, %v352, 0
  %v421 = vsel %vm395, %v353, 0
  %v424 = vsel %vm395, %v354, 0
  %v427 = vsel %vm395, %v355, 0
  %v430 = vsel %vm395, %v356, 0
  %v433 = vsel %vm395, %v357, 0
  %v436 = vsel %vm395, %v358, 0
  %v439 = vsel %vm395, %v359, 0
  %v442 = vsel %vm395, %v360, 0
  %v445 = vsel %vm395, %v361, 0
  %v448 = vsel %vm395, %v362, 0
  %v451 = vsel %vm395, %v363, 0
  %v454 = vsel %vm395, %v364, 0
  %v457 = vsel %vm395, %v365, 0
  %v460 = vsel %vm395, %v366, 0
  %v463 = vsel %vm395, %v367, 0
  %v466 = vsel %vm395, %v368, 0
  %v469 = vsel %vm395, %v369, 0
  %v472 = vsel %vm395, %v370, 0
  %v475 = vsel %vm395, %v371, 0
  %v478 = vsel %vm395, %v372, 0
  %v481 = vsel %vm395, %v373, 0
  %v484 = vsel %vm395, %v374, 0
  %v487 = vsel %vm395, %v375, 0
  %v490 = vsel %vm395, %v376, 0
  %492 = vmatprep.subr.bf16.mxu0 0
  %493 = vmatpush1.bf16.msra.mxu0 %v389
  %494 = vmatprep.subr.bf16.mxu0 0
  %495 = vmatpush1.bf16.msra.mxu0 %v390
  %496 = vmatprep.subr.bf16.mxu0 0
  %497 = vmatpush1.bf16.msra.mxu0 %v391
  %498 = vmatprep.subr.bf16.mxu0 0
  %499 = vmatpush1.bf16.msra.mxu0 0
  %500 = vmatprep.subr.bf16.mxu0 0
  %501 = vmatpush1.bf16.msra.mxu0 0
  %502 = vmatprep.subr.bf16.mxu0 0
  %503 = vmatpush1.bf16.msra.mxu0 0
  %504 = vmatprep.subr.bf16.mxu0 0
  %505 = vmatpush1.bf16.msra.mxu0 0
  %506 = vmatprep.subr.bf16.mxu0 0
  %507 = vmatpush1.bf16.msra.mxu0 0
  %508 = vmatprep.subr.bf16.mxu0 0
  %509 = vmatpush1.bf16.msra.mxu0 0
  %510 = vmatprep.subr.bf16.mxu0 0
  %511 = vmatpush1.bf16.msra.mxu0 0
  %512 = vmatprep.subr.bf16.mxu0 0
  %513 = vmatpush1.bf16.msra.mxu0 0
  %514 = vmatprep.subr.bf16.mxu0 0
  %515 = vmatpush1.bf16.msra.mxu0 0
  %516 = vmatprep.subr.bf16.mxu0 0
  %517 = vmatpush1.bf16.msra.mxu0 0
  %518 = vmatprep.subr.bf16.mxu0 0
  %519 = vmatpush1.bf16.msra.mxu0 0
  %520 = vmatprep.subr.bf16.mxu0 0
  %521 = vmatpush1.bf16.msra.mxu0 0
  %522 = vmatprep.subr.bf16.mxu0 0
  %523 = vmatpush1.bf16.msra.mxu0 0
  %524 = vmatprep.mubr.bf16.mxu0 0
  %525 = vmatmul.mubr.bf16.gmra.mrb[0].mxu0 %v397
  %v526 = vpop.f32.mrb[0].mxu0
  %v527 = vadd.f32 0.0, %v526
  %v528 = vpop.f32.mrb[0].mxu0
  %v529 = vpop.f32.mrb[0].mxu0
  %v530 = vadd.f32 0.0, %v529
  %v531 = vpop.f32.mrb[0].mxu0
  %532 = vmatprep.mubr.bf16.mxu0 0
  %533 = vmatmul.mubr.bf16.gmra.mrb[0].mxu0 %v400
  %v534 = vpop.f32.mrb[0].mxu0
  %v535 = vadd.f32 0.0, %v534
  %v536 = vpop.f32.mrb[0].mxu0
  %v537 = vpop.f32.mrb[0].mxu0
  %v538 = vadd.f32 0.0, %v537
  %v539 = vpop.f32.mrb[0].mxu0
  %540 = vmatprep.mubr.bf16.mxu0 0
  %541 = vmatmul.mubr.bf16.gmra.mrb[0].mxu0 %v403
  %v542 = vpop.f32.mrb[0].mxu0
  %v543 = vadd.f32 0.0, %v542
  %v544 = vpop.f32.mrb[0].mxu0
  %v545 = vpop.f32.mrb[0].mxu0
  %v546 = vadd.f32 0.0, %v545
  %v547 = vpop.f32.mrb[0].mxu0
  %548 = vmatprep.mubr.bf16.mxu0 0
  %549 = vmatmul.mubr.bf16.gmra.mrb[0].mxu0 %v406
  %v550 = vpop.f32.mrb[0].mxu0
  %v551 = vadd.f32 0.0, %v550
  %v552 = vpop.f32.mrb[0].mxu0
  %v553 = vpop.f32.mrb[0].mxu0
  %v554 = vadd.f32 0.0, %v553
  %v555 = vpop.f32.mrb[0].mxu0
  %556 = vmatprep.mubr.bf16.mxu0 0
  %557 = vmatmul.mubr.bf16.gmra.mrb[0].mxu0 %v409
  %v558 = vpop.f32.mrb[0].mxu0
  %v559 = vadd.f32 0.0, %v558
  %v560 = vpop.f32.mrb[0].mxu0
  %v561 = vpop.f32.mrb[0].mxu0
  %v562 = vadd.f32 0.0, %v561
  %v563 = vpop.f32.mrb[0].mxu0
  %564 = vmatprep.mubr.bf16.mxu0 0
  %565 = vmatmul.mubr.bf16.gmra.mrb[0].mxu0 %v412
  %v566 = vpop.f32.mrb[0].mxu0
  %v567 = vadd.f32 0.0, %v566
  %v568 = vpop.f32.mrb[0].mxu0
  %v569 = vpop.f32.mrb[0].mxu0
  %v570 = vadd.f32 0.0, %v569
  %v571 = vpop.f32.mrb[0].mxu0
  %572 = vmatprep.mubr.bf16.mxu0 0
  %573 = vmatmul.mubr.bf16.gmra.mrb[0].mxu0 %v415
  %v574 = vpop.f32.mrb[0].mxu0
  %v575 = vadd.f32 0.0, %v574
  %v576 = vpop.f32.mrb[0].mxu0
  %v577 = vpop.f32.mrb[0].mxu0
  %v578 = vadd.f32 0.0, %v577
  %v579 = vpop.f32.mrb[0].mxu0
  %580 = vmatprep.mubr.bf16.mxu0 0
  %581 = vmatmul.mubr.bf16.gmra.mrb[0].mxu0 %v418
  %v582 = vpop.f32.mrb[0].mxu0
  %v583 = vadd.f32 0.0, %v582
  %v584 = vpop.f32.mrb[0].mxu0
  %v585 = vpop.f32.mrb[0].mxu0
  %v586 = vadd.f32 0.0, %v585
  %v587 = vpop.f32.mrb[0].mxu0
  %588 = vmatprep.mubr.bf16.mxu0 0
  %589 = vmatmul.mubr.bf16.gmra.mrb[0].mxu0 %v421
  %v590 = vpop.f32.mrb[0].mxu0
  %v591 = vadd.f32 0.0, %v590
  %v592 = vpop.f32.mrb[0].mxu0
  %v593 = vpop.f32.mrb[0].mxu0
  %v594 = vadd.f32 0.0, %v593
  %v595 = vpop.f32.mrb[0].mxu0
  %596 = vmatprep.mubr.bf16.mxu0 0
  %597 = vmatmul.mubr.bf16.gmra.mrb[0].mxu0 %v424
  %v598 = vpop.f32.mrb[0].mxu0
  %v599 = vadd.f32 0.0, %v598
  %v600 = vpop.f32.mrb[0].mxu0
  %v601 = vpop.f32.mrb[0].mxu0
  %v602 = vadd.f32 0.0, %v601
  %v603 = vpop.f32.mrb[0].mxu0
  %604 = vmatprep.mubr.bf16.mxu0 0
  %605 = vmatmul.mubr.bf16.gmra.mrb[0].mxu0 %v427
  %v606 = vpop.f32.mrb[0].mxu0
  %v607 = vadd.f32 0.0, %v606
  %v608 = vpop.f32.mrb[0].mxu0
  %v609 = vpop.f32.mrb[0].mxu0
  %v610 = vadd.f32 0.0, %v609
  %v611 = vpop.f32.mrb[0].mxu0
  %612 = vmatprep.mubr.bf16.mxu0 0
  %613 = vmatmul.mubr.bf16.gmra.mrb[0].mxu0 %v430
  %v614 = vpop.f32.mrb[0].mxu0
  %v615 = vadd.f32 0.0, %v614
  %v616 = vpop.f32.mrb[0].mxu0
  %v617 = vpop.f32.mrb[0].mxu0
  %v618 = vadd.f32 0.0, %v617
  %v619 = vpop.f32.mrb[0].mxu0
  %620 = vmatprep.mubr.bf16.mxu0 0
  %621 = vmatmul.mubr.bf16.gmra.mrb[0].mxu0 %v433
  %v622 = vpop.f32.mrb[0].mxu0
  %v623 = vadd.f32 0.0, %v622
  %v624 = vpop.f32.mrb[0].mxu0
  %v625 = vpop.f32.mrb[0].mxu0
  %v626 = vadd.f32 0.0, %v625
  %v627 = vpop.f32.mrb[0].mxu0
  %628 = vmatprep.mubr.bf16.mxu0 0
  %629 = vmatmul.mubr.bf16.gmra.mrb[0].mxu0 %v436
  %v630 = vpop.f32.mrb[0].mxu0
  %v631 = vadd.f32 0.0, %v630
  %v632 = vpop.f32.mrb[0].mxu0
  %v633 = vpop.f32.mrb[0].mxu0
  %v634 = vadd.f32 0.0, %v633
  %v635 = vpop.f32.mrb[0].mxu0
  %636 = vmatprep.mubr.bf16.mxu0 0
  %637 = vmatmul.mubr.bf16.gmra.mrb[0].mxu0 %v439
  %v638 = vpop.f32.mrb[0].mxu0
  %v639 = vadd.f32 0.0, %v638
  %v640 = vpop.f32.mrb[0].mxu0
  %v641 = vpop.f32.mrb[0].mxu0
  %v642 = vadd.f32 0.0, %v641
  %v643 = vpop.f32.mrb[0].mxu0
  %644 = vmatprep.mubr.bf16.mxu0 0
  %645 = vmatmul.mubr.bf16.gmra.mrb[0].mxu0 %v442
  %v646 = vpop.f32.mrb[0].mxu0
  %v647 = vadd.f32 0.0, %v646
  %v648 = vpop.f32.mrb[0].mxu0
  %v649 = vpop.f32.mrb[0].mxu0
  %v650 = vadd.f32 0.0, %v649
  %v651 = vpop.f32.mrb[0].mxu0
  %652 = vmatprep.mubr.bf16.mxu0 0
  %653 = vmatmul.mubr.bf16.gmra.mrb[0].mxu0 %v445
  %v654 = vpop.f32.mrb[0].mxu0
  %v655 = vadd.f32 0.0, %v654
  %v656 = vpop.f32.mrb[0].mxu0
  %v657 = vpop.f32.mrb[0].mxu0
  %v658 = vadd.f32 0.0, %v657
  %v659 = vpop.f32.mrb[0].mxu0
  %660 = vmatprep.mubr.bf16.mxu0 0
  %661 = vmatmul.mubr.bf16.gmra.mrb[0].mxu0 %v448
  %v662 = vpop.f32.mrb[0].mxu0
  %v663 = vadd.f32 0.0, %v662
  %v664 = vpop.f32.mrb[0].mxu0
  %v665 = vpop.f32.mrb[0].mxu0
  %v666 = vadd.f32 0.0, %v665
  %v667 = vpop.f32.mrb[0].mxu0
  %668 = vmatprep.mubr.bf16.mxu0 0
  %669 = vmatmul.mubr.bf16.gmra.mrb[0].mxu0 %v451
  %v670 = vpop.f32.mrb[0].mxu0
  %v671 = vadd.f32 0.0, %v670
  %v672 = vpop.f32.mrb[0].mxu0
  %v673 = vpop.f32.mrb[0].mxu0
  %v674 = vadd.f32 0.0, %v673
  %v675 = vpop.f32.mrb[0].mxu0
  %676 = vmatprep.mubr.bf16.mxu0 0
  %677 = vmatmul.mubr.bf16.gmra.mrb[0].mxu0 %v454
  %v678 = vpop.f32.mrb[0].mxu0
  %v679 = vadd.f32 0.0, %v678
  %v680 = vpop.f32.mrb[0].mxu0
  %v681 = vpop.f32.mrb[0].mxu0
  %v682 = vadd.f32 0.0, %v681
  %v683 = vpop.f32.mrb[0].mxu0
  %684 = vmatprep.mubr.bf16.mxu0 0
  %685 = vmatmul.mubr.bf16.gmra.mrb[0].mxu0 %v457
  %v686 = vpop.f32.mrb[0].mxu0
  %v687 = vadd.f32 0.0, %v686
  %v688 = vpop.f32.mrb[0].mxu0
  %v689 = vpop.f32.mrb[0].mxu0
  %v690 = vadd.f32 0.0, %v689
  %v691 = vpop.f32.mrb[0].mxu0
  %692 = vmatprep.mubr.bf16.mxu0 0
  %693 = vmatmul.mubr.bf16.gmra.mrb[0].mxu0 %v460
  %v694 = vpop.f32.mrb[0].mxu0
  %v695 = vadd.f32 0.0, %v694
  %v696 = vpop.f32.mrb[0].mxu0
  %v697 = vpop.f32.mrb[0].mxu0
  %v698 = vadd.f32 0.0, %v697
  %v699 = vpop.f32.mrb[0].mxu0
  %700 = vmatprep.mubr.bf16.mxu0 0
  %701 = vmatmul.mubr.bf16.gmra.mrb[0].mxu0 %v463
  %v702 = vpop.f32.mrb[0].mxu0
  %v703 = vadd.f32 0.0, %v702
  %v704 = vpop.f32.mrb[0].mxu0
  %v705 = vpop.f32.mrb[0].mxu0
  %v706 = vadd.f32 0.0, %v705
  %v707 = vpop.f32.mrb[0].mxu0
  %708 = vmatprep.mubr.bf16.mxu0 0
  %709 = vmatmul.mubr.bf16.gmra.mrb[0].mxu0 %v466
  %v710 = vpop.f32.mrb[0].mxu0
  %v711 = vadd.f32 0.0, %v710
  %v712 = vpop.f32.mrb[0].mxu0
  %v713 = vpop.f32.mrb[0].mxu0
  %v714 = vadd.f32 0.0, %v713
  %v715 = vpop.f32.mrb[0].mxu0
  %716 = vmatprep.mubr.bf16.mxu0 0
  %717 = vmatmul.mubr.bf16.gmra.mrb[0].mxu0 %v469
  %v718 = vpop.f32.mrb[0].mxu0
  %v719 = vadd.f32 0.0, %v718
  %v720 = vpop.f32.mrb[0].mxu0
  %v721 = vpop.f32.mrb[0].mxu0
  %v722 = vadd.f32 0.0, %v721
  %v723 = vpop.f32.mrb[0].mxu0
  %724 = vmatprep.mubr.bf16.mxu0 0
  %725 = vmatmul.mubr.bf16.gmra.mrb[0].mxu0 %v472
  %v726 = vpop.f32.mrb[0].mxu0
  %v727 = vadd.f32 0.0, %v726
  %v728 = vpop.f32.mrb[0].mxu0
  %v729 = vpop.f32.mrb[0].mxu0
  %v730 = vadd.f32 0.0, %v729
  %v731 = vpop.f32.mrb[0].mxu0
  %732 = vmatprep.mubr.bf16.mxu0 0
  %733 = vmatmul.mubr.bf16.gmra.mrb[0].mxu0 %v475
  %v734 = vpop.f32.mrb[0].mxu0
  %v735 = vadd.f32 0.0, %v734
  %v736 = vpop.f32.mrb[0].mxu0
  %v737 = vpop.f32.mrb[0].mxu0
  %v738 = vadd.f32 0.0, %v737
  %v739 = vpop.f32.mrb[0].mxu0
  %740 = vmatprep.mubr.bf16.mxu0 0
  %741 = vmatmul.mubr.bf16.gmra.mrb[0].mxu0 %v478
  %v742 = vpop.f32.mrb[0].mxu0
  %v743 = vadd.f32 0.0, %v742
  %v744 = vpop.f32.mrb[0].mxu0
  %v745 = vpop.f32.mrb[0].mxu0
  %v746 = vadd.f32 0.0, %v745
  %v747 = vpop.f32.mrb[0].mxu0
  %748 = vmatprep.mubr.bf16.mxu0 0
  %749 = vmatmul.mubr.bf16.gmra.mrb[0].mxu0 %v481
  %v750 = vpop.f32.mrb[0].mxu0
  %v751 = vadd.f32 0.0, %v750
  %v752 = vpop.f32.mrb[0].mxu0
  %v753 = vpop.f32.mrb[0].mxu0
  %v754 = vadd.f32 0.0, %v753
  %v755 = vpop.f32.mrb[0].mxu0
  %756 = vmatprep.mubr.bf16.mxu0 0
  %757 = vmatmul.mubr.bf16.gmra.mrb[0].mxu0 %v484
  %v758 = vpop.f32.mrb[0].mxu0
  %v759 = vadd.f32 0.0, %v758
  %v760 = vpop.f32.mrb[0].mxu0
  %v761 = vpop.f32.mrb[0].mxu0
  %v762 = vadd.f32 0.0, %v761
  %v763 = vpop.f32.mrb[0].mxu0
  %764 = vmatprep.mubr.bf16.mxu0 0
  %765 = vmatmul.mubr.bf16.gmra.mrb[0].mxu0 %v487
  %v766 = vpop.f32.mrb[0].mxu0
  %v767 = vadd.f32 0.0, %v766
  %v768 = vpop.f32.mrb[0].mxu0
  %v769 = vpop.f32.mrb[0].mxu0
  %v770 = vadd.f32 0.0, %v769
  %v771 = vpop.f32.mrb[0].mxu0
  %772 = vmatprep.mubr.bf16.mxu0 0
  %773 = vmatmul.mubr.bf16.gmra.mrb[0].mxu0 %v490
  %v774 = vpop.f32.mrb[0].mxu0
  %v775 = vadd.f32 0.0, %v774
  %v776 = vpop.f32.mrb[0].mxu0
  %v777 = vpop.f32.mrb[0].mxu0
  %v778 = vadd.f32 0.0, %v777
  %v779 = vpop.f32.mrb[0].mxu0
  %780 = vdwg.mxu0
  %v781 = vadd.f32 %v83, %v527
  %v782 = vadd.f32 %v84, %v530
  %v783 = vadd.f32 %v85, %v535
  %v784 = vadd.f32 %v86, %v538
  %v785 = vadd.f32 %v87, %v543
  %v786 = vadd.f32 %v88, %v546
  %v787 = vadd.f32 %v89, %v551
  %v788 = vadd.f32 %v90, %v554
  %v789 = vadd.f32 %v91, %v559
  %v790 = vadd.f32 %v92, %v562
  %v791 = vadd.f32 %v93, %v567
  %v792 = vadd.f32 %v94, %v570
  %v793 = vadd.f32 %v95, %v575
  %v794 = vadd.f32 %v96, %v578
  %v795 = vadd.f32 %v97, %v583
  %v796 = vadd.f32 %v98, %v586
  %v797 = vadd.f32 %v99, %v591
  %v798 = vadd.f32 %v100, %v594
  %v799 = vadd.f32 %v101, %v599
  %v800 = vadd.f32 %v102, %v602
  %v801 = vadd.f32 %v103, %v607
  %v802 = vadd.f32 %v104, %v610
  %v803 = vadd.f32 %v105, %v615
  %v804 = vadd.f32 %v106, %v618
  %v805 = vadd.f32 %v107, %v623
  %v806 = vadd.f32 %v108, %v626
  %v807 = vadd.f32 %v109, %v631
  %v808 = vadd.f32 %v110, %v634
  %v809 = vadd.f32 %v111, %v639
  %v810 = vadd.f32 %v112, %v642
  %v811 = vadd.f32 %v113, %v647
  %v812 = vadd.f32 %v114, %v650
  %v813 = vadd.f32 %v115, %v655
  %v814 = vadd.f32 %v116, %v658
  %v815 = vadd.f32 %v117, %v663
  %v816 = vadd.f32 %v118, %v666
  %v817 = vadd.f32 %v119, %v671
  %v818 = vadd.f32 %v120, %v674
  %v819 = vadd.f32 %v121, %v679
  %v820 = vadd.f32 %v122, %v682
  %v821 = vadd.f32 %v123, %v687
  %v822 = vadd.f32 %v124, %v690
  %v823 = vadd.f32 %v125, %v695
  %v824 = vadd.f32 %v126, %v698
  %v825 = vadd.f32 %v127, %v703
  %v826 = vadd.f32 %v128, %v706
  %v827 = vadd.f32 %v129, %v711
  %v828 = vadd.f32 %v130, %v714
  %v829 = vadd.f32 %v131, %v719
  %v830 = vadd.f32 %v132, %v722
  %v831 = vadd.f32 %v133, %v727
  %v832 = vadd.f32 %v134, %v730
  %v833 = vadd.f32 %v135, %v735
  %v834 = vadd.f32 %v136, %v738
  %v835 = vadd.f32 %v137, %v743
  %v836 = vadd.f32 %v138, %v746
  %v837 = vadd.f32 %v139, %v751
  %v838 = vadd.f32 %v140, %v754
  %v839 = vadd.f32 %v141, %v759
  %v840 = vadd.f32 %v142, %v762
  %v841 = vadd.f32 %v143, %v767
  %v842 = vadd.f32 %v144, %v770
  %v843 = vadd.f32 %v145, %v775
  %v844 = vadd.f32 %v146, %v778
  %845 = vst [vmem:[#allocation2] sm:$0xff] %v781
  %846 = vst [vmem:[#allocation2 + $0x8] sm:$0xff] %v782
  %847 = vst [vmem:[#allocation2 + $0x10] sm:$0xff] %v783
  %848 = vst [vmem:[#allocation2 + $0x18] sm:$0xff] %v784
  %849 = vst [vmem:[#allocation2 + $0x20] sm:$0xff] %v785
  %850 = vst [vmem:[#allocation2 + $0x28] sm:$0xff] %v786
  %851 = vst [vmem:[#allocation2 + $0x30] sm:$0xff] %v787
  %852 = vst [vmem:[#allocation2 + $0x38] sm:$0xff] %v788
  %853 = vst [vmem:[#allocation2 + $0x40] sm:$0xff] %v789
  %854 = vst [vmem:[#allocation2 + $0x48] sm:$0xff] %v790
  %855 = vst [vmem:[#allocation2 + $0x50] sm:$0xff] %v791
  %856 = vst [vmem:[#allocation2 + $0x58] sm:$0xff] %v792
  %857 = vst [vmem:[#allocation2 + $0x60] sm:$0xff] %v793
  %858 = vst [vmem:[#allocation2 + $0x68] sm:$0xff] %v794
  %859 = vst [vmem:[#allocation2 + $0x70] sm:$0xff] %v795
  %860 = vst [vmem:[#allocation2 + $0x78] sm:$0xff] %v796
  %861 = vst [vmem:[#allocation2 + $0x80] sm:$0xff] %v797
  %862 = vst [vmem:[#allocation2 + $0x88] sm:$0xff] %v798
  %863 = vst [vmem:[#allocation2 + $0x90] sm:$0xff] %v799
  %864 = vst [vmem:[#allocation2 + $0x98] sm:$0xff] %v800
  %865 = vst [vmem:[#allocation2 + $0xa0] sm:$0xff] %v801
  %866 = vst [vmem:[#allocation2 + $0xa8] sm:$0xff] %v802
  %867 = vst [vmem:[#allocation2 + $0xb0] sm:$0xff] %v803
  %868 = vst [vmem:[#allocation2 + $0xb8] sm:$0xff] %v804
  %869 = vst [vmem:[#allocation2 + $0xc0] sm:$0xff] %v805
  %870 = vst [vmem:[#allocation2 + $0xc8] sm:$0xff] %v806
  %871 = vst [vmem:[#allocation2 + $0xd0] sm:$0xff] %v807
  %872 = vst [vmem:[#allocation2 + $0xd8] sm:$0xff] %v808
  %873 = vst [vmem:[#allocation2 + $0xe0] sm:$0xff] %v809
  %874 = vst [vmem:[#allocation2 + $0xe8] sm:$0xff] %v810
  %875 = vst [vmem:[#allocation2 + $0xf0] sm:$0xff] %v811
  %876 = vst [vmem:[#allocation2 + $0xf8] sm:$0xff] %v812
  %877 = vst [vmem:[#allocation2 + $0x100] sm:$0xff] %v813
  %878 = vst [vmem:[#allocation2 + $0x108] sm:$0xff] %v814
  %879 = vst [vmem:[#allocation2 + $0x110] sm:$0xff] %v815
  %880 = vst [vmem:[#allocation2 + $0x118] sm:$0xff] %v816
  %881 = vst [vmem:[#allocation2 + $0x120] sm:$0xff] %v817
  %882 = vst [vmem:[#allocation2 + $0x128] sm:$0xff] %v818
  %883 = vst [vmem:[#allocation2 + $0x130] sm:$0xff] %v819
  %884 = vst [vmem:[#allocation2 + $0x138] sm:$0xff] %v820
  %885 = vst [vmem:[#allocation2 + $0x140] sm:$0xff] %v821
  %886 = vst [vmem:[#allocation2 + $0x148] sm:$0xff] %v822
  %887 = vst [vmem:[#allocation2 + $0x150] sm:$0xff] %v823
  %888 = vst [vmem:[#allocation2 + $0x158] sm:$0xff] %v824
  %889 = vst [vmem:[#allocation2 + $0x160] sm:$0xff] %v825
  %890 = vst [vmem:[#allocation2 + $0x168] sm:$0xff] %v826
  %891 = vst [vmem:[#allocation2 + $0x170] sm:$0xff] %v827
  %892 = vst [vmem:[#allocation2 + $0x178] sm:$0xff] %v828
  %893 = vst [vmem:[#allocation2 + $0x180] sm:$0xff] %v829
  %894 = vst [vmem:[#allocation2 + $0x188] sm:$0xff] %v830
  %895 = vst [vmem:[#allocation2 + $0x190] sm:$0xff] %v831
  %896 = vst [vmem:[#allocation2 + $0x198] sm:$0xff] %v832
  %897 = vst [vmem:[#allocation2 + $0x1a0] sm:$0xff] %v833
  %898 = vst [vmem:[#allocation2 + $0x1a8] sm:$0xff] %v834
  %899 = vst [vmem:[#allocation2 + $0x1b0] sm:$0xff] %v835
  %900 = vst [vmem:[#allocation2 + $0x1b8] sm:$0xff] %v836
  %901 = vst [vmem:[#allocation2 + $0x1c0] sm:$0xff] %v837
  %902 = vst [vmem:[#allocation2 + $0x1c8] sm:$0xff] %v838
  %903 = vst [vmem:[#allocation2 + $0x1d0] sm:$0xff] %v839
  %904 = vst [vmem:[#allocation2 + $0x1d8] sm:$0xff] %v840
  %905 = vst [vmem:[#allocation2 + $0x1e0] sm:$0xff] %v841
  %906 = vst [vmem:[#allocation2 + $0x1e8] sm:$0xff] %v842
  %907 = vst [vmem:[#allocation2 + $0x1f0] sm:$0xff] %v843
  %908 = vst [vmem:[#allocation2 + $0x1f8] sm:$0xff] %v844
  // Predicated region
  $region18: #{_lambda_.11} parent=0 // pred_check
    %p909 = pneg %p15
  $region19: #{_lambda_.11} parent=0 // pred_check_branch
    %911 = sbr.rel (%p909) target = $region21
  $region20: #{_lambda_.11} parent=0 // pred_region
    %v912 = vld [vmem:[#allocation2] sm:$0xff]
    %v913 = vld [vmem:[#allocation2 + $0x8] sm:$0xff]
    %v914 = vld [vmem:[#allocation2 + $0x10] sm:$0xff]
    %v915 = vld [vmem:[#allocation2 + $0x18] sm:$0xff]
    %v916 = vld [vmem:[#allocation2 + $0x20] sm:$0xff]
    %v917 = vld [vmem:[#allocation2 + $0x28] sm:$0xff]
    %v918 = vld [vmem:[#allocation2 + $0x30] sm:$0xff]
    %v919 = vld [vmem:[#allocation2 + $0x38] sm:$0xff]
    %v920 = vld [vmem:[#allocation2 + $0x40] sm:$0xff]
    %v921 = vld [vmem:[#allocation2 + $0x48] sm:$0xff]
    %v922 = vld [vmem:[#allocation2 + $0x50] sm:$0xff]
    %v923 = vld [vmem:[#allocation2 + $0x58] sm:$0xff]
    %v924 = vld [vmem:[#allocation2 + $0x60] sm:$0xff]
    %v925 = vld [vmem:[#allocation2 + $0x68] sm:$0xff]
    %v926 = vld [vmem:[#allocation2 + $0x70] sm:$0xff]
    %v927 = vld [vmem:[#allocation2 + $0x78] sm:$0xff]
    %v928 = vld [vmem:[#allocation2 + $0x80] sm:$0xff]
    %v929 = vld [vmem:[#allocation2 + $0x88] sm:$0xff]
    %v930 = vld [vmem:[#allocation2 + $0x90] sm:$0xff]
    %v931 = vld [vmem:[#allocation2 + $0x98] sm:$0xff]
    %v932 = vld [vmem:[#allocation2 + $0xa0] sm:$0xff]
    %v933 = vld [vmem:[#allocation2 + $0xa8] sm:$0xff]
    %v934 = vld [vmem:[#allocation2 + $0xb0] sm:$0xff]
    %v935 = vld [vmem:[#allocation2 + $0xb8] sm:$0xff]
    %v936 = vld [vmem:[#allocation2 + $0xc0] sm:$0xff]
    %v937 = vld [vmem:[#allocation2 + $0xc8] sm:$0xff]
    %v938 = vld [vmem:[#allocation2 + $0xd0] sm:$0xff]
    %v939 = vld [vmem:[#allocation2 + $0xd8] sm:$0xff]
    %v940 = vld [vmem:[#allocation2 + $0xe0] sm:$0xff]
    %v941 = vld [vmem:[#allocation2 + $0xe8] sm:$0xff]
    %v942 = vld [vmem:[#allocation2 + $0xf0] sm:$0xff]
    %v943 = vld [vmem:[#allocation2 + $0xf8] sm:$0xff]
    %v944 = vld [vmem:[#allocation2 + $0x100] sm:$0xff]
    %v945 = vld [vmem:[#allocation2 + $0x108] sm:$0xff]
    %v946 = vld [vmem:[#allocation2 + $0x110] sm:$0xff]
    %v947 = vld [vmem:[#allocation2 + $0x118] sm:$0xff]
    %v948 = vld [vmem:[#allocation2 + $0x120] sm:$0xff]
    %v949 = vld [vmem:[#allocation2 + $0x128] sm:$0xff]
    %v950 = vld [vmem:[#allocation2 + $0x130] sm:$0xff]
    %v951 = vld [vmem:[#allocation2 + $0x138] sm:$0xff]
    %v952 = vld [vmem:[#allocation2 + $0x140] sm:$0xff]
    %v953 = vld [vmem:[#allocation2 + $0x148] sm:$0xff]
    %v954 = vld [vmem:[#allocation2 + $0x150] sm:$0xff]
    %v955 = vld [vmem:[#allocation2 + $0x158] sm:$0xff]
    %v956 = vld [vmem:[#allocation2 + $0x160] sm:$0xff]
    %v957 = vld [vmem:[#allocation2 + $0x168] sm:$0xff]
    %v958 = vld [vmem:[#allocation2 + $0x170] sm:$0xff]
    %v959 = vld [vmem:[#allocation2 + $0x178] sm:$0xff]
    %v960 = vld [vmem:[#allocation2 + $0x180] sm:$0xff]
    %v961 = vld [vmem:[#allocation2 + $0x188] sm:$0xff]
    %v962 = vld [vmem:[#allocation2 + $0x190] sm:$0xff]
    %v963 = vld [vmem:[#allocation2 + $0x198] sm:$0xff]
    %v964 = vld [vmem:[#allocation2 + $0x1a0] sm:$0xff]
    %v965 = vld [vmem:[#allocation2 + $0x1a8] sm:$0xff]
    %v966 = vld [vmem:[#allocation2 + $0x1b0] sm:$0xff]
    %v967 = vld [vmem:[#allocation2 + $0x1b8] sm:$0xff]
    %v968 = vld [vmem:[#allocation2 + $0x1c0] sm:$0xff]
    %v969 = vld [vmem:[#allocation2 + $0x1c8] sm:$0xff]
    %v970 = vld [vmem:[#allocation2 + $0x1d0] sm:$0xff]
    %v971 = vld [vmem:[#allocation2 + $0x1d8] sm:$0xff]
    %v972 = vld [vmem:[#allocation2 + $0x1e0] sm:$0xff]
    %v973 = vld [vmem:[#allocation2 + $0x1e8] sm:$0xff]
    %v974 = vld [vmem:[#allocation2 + $0x1f0] sm:$0xff]
    %v975 = vld [vmem:[#allocation2 + $0x1f8] sm:$0xff]
    %v976 = vld [vmem:[%s2] sm:$0x1]
    %v978 = vlaneseq
    %v979 = vshrl.u32 %v978, 7
    %v980 = vsub.s32 0, %v979
    %v981 = vrot.slane %v976, %v980
    %v983 = vadd.f32 %v912, %v981
    %v984 = vadd.f32 %v913, %v981
    %v985 = vadd.f32 %v914, %v981
    %v986 = vadd.f32 %v915, %v981
    %v987 = vadd.f32 %v916, %v981
    %v988 = vadd.f32 %v917, %v981
    %v989 = vadd.f32 %v918, %v981
    %v990 = vadd.f32 %v919, %v981
    %v991 = vadd.f32 %v920, %v981
    %v992 = vadd.f32 %v921, %v981
    %v993 = vadd.f32 %v922, %v981
    %v994 = vadd.f32 %v923, %v981
    %v995 = vadd.f32 %v924, %v981
    %v996 = vadd.f32 %v925, %v981
    %v997 = vadd.f32 %v926, %v981
    %v998 = vadd.f32 %v927, %v981
    %v999 = vadd.f32 %v928, %v981
    %v1000 = vadd.f32 %v929, %v981
    %v1001 = vadd.f32 %v930, %v981
    %v1002 = vadd.f32 %v931, %v981
    %v1003 = vadd.f32 %v932, %v981
    %v1004 = vadd.f32 %v933, %v981
    %v1005 = vadd.f32 %v934, %v981
    %v1006 = vadd.f32 %v935, %v981
    %v1007 = vadd.f32 %v936, %v981
    %v1008 = vadd.f32 %v937, %v981
    %v1009 = vadd.f32 %v938, %v981
    %v1010 = vadd.f32 %v939, %v981
    %v1011 = vadd.f32 %v940, %v981
    %v1012 = vadd.f32 %v941, %v981
    %v1013 = vadd.f32 %v942, %v981
    %v1014 = vadd.f32 %v943, %v981
    %v1015 = vadd.f32 %v944, %v981
    %v1016 = vadd.f32 %v945, %v981
    %v1017 = vadd.f32 %v946, %v981
    %v1018 = vadd.f32 %v947, %v981
    %v1019 = vadd.f32 %v948, %v981
    %v1020 = vadd.f32 %v949, %v981
    %v1021 = vadd.f32 %v950, %v981
    %v1022 = vadd.f32 %v951, %v981
    %v1023 = vadd.f32 %v952, %v981
    %v1024 = vadd.f32 %v953, %v981
    %v1025 = vadd.f32 %v954, %v981
    %v1026 = vadd.f32 %v955, %v981
    %v1027 = vadd.f32 %v956, %v981
    %v1028 = vadd.f32 %v957, %v981
    %v1029 = vadd.f32 %v958, %v981
    %v1030 = vadd.f32 %v959, %v981
    %v1031 = vadd.f32 %v960, %v981
    %v1032 = vadd.f32 %v961, %v981
    %v1033 = vadd.f32 %v962, %v981
    %v1034 = vadd.f32 %v963, %v981
    %v1035 = vadd.f32 %v964, %v981
    %v1036 = vadd.f32 %v965, %v981
    %v1037 = vadd.f32 %v966, %v981
    %v1038 = vadd.f32 %v967, %v981
    %v1039 = vadd.f32 %v968, %v981
    %v1040 = vadd.f32 %v969, %v981
    %v1041 = vadd.f32 %v970, %v981
    %v1042 = vadd.f32 %v971, %v981
    %v1043 = vadd.f32 %v972, %v981
    %v1044 = vadd.f32 %v973, %v981
    %v1045 = vadd.f32 %v974, %v981
    %v1046 = vadd.f32 %v975, %v981
    %vm1047 = vcmp.ge.f32.partialorder %v983, 0.0
    %vm1048 = vcmp.ge.f32.partialorder %v984, 0.0
    %vm1049 = vcmp.ge.f32.partialorder %v985, 0.0
    %vm1050 = vcmp.ge.f32.partialorder %v986, 0.0
    %vm1051 = vcmp.ge.f32.partialorder %v987, 0.0
    %vm1052 = vcmp.ge.f32.partialorder %v988, 0.0
    %vm1053 = vcmp.ge.f32.partialorder %v989, 0.0
    %vm1054 = vcmp.ge.f32.partialorder %v990, 0.0
    %vm1055 = vcmp.ge.f32.partialorder %v991, 0.0
    %vm1056 = vcmp.ge.f32.partialorder %v992, 0.0
    %vm1057 = vcmp.ge.f32.partialorder %v993, 0.0
    %vm1058 = vcmp.ge.f32.partialorder %v994, 0.0
    %vm1059 = vcmp.ge.f32.partialorder %v995, 0.0
    %vm1060 = vcmp.ge.f32.partialorder %v996, 0.0
    %vm1061 = vcmp.ge.f32.partialorder %v997, 0.0
    %vm1062 = vcmp.ge.f32.partialorder %v998, 0.0
    %vm1063 = vcmp.ge.f32.partialorder %v999, 0.0
    %vm1064 = vcmp.ge.f32.partialorder %v1000, 0.0
    %vm1065 = vcmp.ge.f32.partialorder %v1001, 0.0
    %vm1066 = vcmp.ge.f32.partialorder %v1002, 0.0
    %vm1067 = vcmp.ge.f32.partialorder %v1003, 0.0
    %vm1068 = vcmp.ge.f32.partialorder %v1004, 0.0
    %vm1069 = vcmp.ge.f32.partialorder %v1005, 0.0
    %vm1070 = vcmp.ge.f32.partialorder %v1006, 0.0
    %vm1071 = vcmp.ge.f32.partialorder %v1007, 0.0
    %vm1072 = vcmp.ge.f32.partialorder %v1008, 0.0
    %vm1073 = vcmp.ge.f32.partialorder %v1009, 0.0
    %vm1074 = vcmp.ge.f32.partialorder %v1010, 0.0
    %vm1075 = vcmp.ge.f32.partialorder %v1011, 0.0
    %vm1076 = vcmp.ge.f32.partialorder %v1012, 0.0
    %vm1077 = vcmp.ge.f32.partialorder %v1013, 0.0
    %vm1078 = vcmp.ge.f32.partialorder %v1014, 0.0
    %vm1079 = vcmp.ge.f32.partialorder %v1015, 0.0
    %vm1080 = vcmp.ge.f32.partialorder %v1016, 0.0
    %vm1081 = vcmp.ge.f32.partialorder %v1017, 0.0
    %vm1082 = vcmp.ge.f32.partialorder %v1018, 0.0
    %vm1083 = vcmp.ge.f32.partialorder %v1019, 0.0
    %vm1084 = vcmp.ge.f32.partialorder %v1020, 0.0
    %vm1085 = vcmp.ge.f32.partialorder %v1021, 0.0
    %vm1086 = vcmp.ge.f32.partialorder %v1022, 0.0
    %vm1087 = vcmp.ge.f32.partialorder %v1023, 0.0
    %vm1088 = vcmp.ge.f32.partialorder %v1024, 0.0
    %vm1089 = vcmp.ge.f32.partialorder %v1025, 0.0
    %vm1090 = vcmp.ge.f32.partialorder %v1026, 0.0
    %vm1091 = vcmp.ge.f32.partialorder %v1027, 0.0
    %vm1092 = vcmp.ge.f32.partialorder %v1028, 0.0
    %vm1093 = vcmp.ge.f32.partialorder %v1029, 0.0
    %vm1094 = vcmp.ge.f32.partialorder %v1030, 0.0
    %vm1095 = vcmp.ge.f32.partialorder %v1031, 0.0
    %vm1096 = vcmp.ge.f32.partialorder %v1032, 0.0
    %vm1097 = vcmp.ge.f32.partialorder %v1033, 0.0
    %vm1098 = vcmp.ge.f32.partialorder %v1034, 0.0
    %vm1099 = vcmp.ge.f32.partialorder %v1035, 0.0
    %vm1100 = vcmp.ge.f32.partialorder %v1036, 0.0
    %vm1101 = vcmp.ge.f32.partialorder %v1037, 0.0
    %vm1102 = vcmp.ge.f32.partialorder %v1038, 0.0
    %vm1103 = vcmp.ge.f32.partialorder %v1039, 0.0
    %vm1104 = vcmp.ge.f32.partialorder %v1040, 0.0
    %vm1105 = vcmp.ge.f32.partialorder %v1041, 0.0
    %vm1106 = vcmp.ge.f32.partialorder %v1042, 0.0
    %vm1107 = vcmp.ge.f32.partialorder %v1043, 0.0
    %vm1108 = vcmp.ge.f32.partialorder %v1044, 0.0
    %vm1109 = vcmp.ge.f32.partialorder %v1045, 0.0
    %vm1110 = vcmp.ge.f32.partialorder %v1046, 0.0
    %v1111 = vmul.f32 %v983, 0.2
    %v1112 = vmul.f32 %v984, 0.2
    %v1113 = vmul.f32 %v985, 0.2
    %v1114 = vmul.f32 %v986, 0.2
    %v1115 = vmul.f32 %v987, 0.2
    %v1116 = vmul.f32 %v988, 0.2
    %v1117 = vmul.f32 %v989, 0.2
    %v1118 = vmul.f32 %v990, 0.2
    %v1119 = vmul.f32 %v991, 0.2
    %v1120 = vmul.f32 %v992, 0.2
    %v1121 = vmul.f32 %v993, 0.2
    %v1122 = vmul.f32 %v994, 0.2
    %v1123 = vmul.f32 %v995, 0.2
    %v1124 = vmul.f32 %v996, 0.2
    %v1125 = vmul.f32 %v997, 0.2
    %v1126 = vmul.f32 %v998, 0.2
    %v1127 = vmul.f32 %v999, 0.2
    %v1128 = vmul.f32 %v1000, 0.2
    %v1129 = vmul.f32 %v1001, 0.2
    %v1130 = vmul.f32 %v1002, 0.2
    %v1131 = vmul.f32 %v1003, 0.2
    %v1132 = vmul.f32 %v1004, 0.2
    %v1133 = vmul.f32 %v1005, 0.2
    %v1134 = vmul.f32 %v1006, 0.2
    %v1135 = vmul.f32 %v1007, 0.2
    %v1136 = vmul.f32 %v1008, 0.2
    %v1137 = vmul.f32 %v1009, 0.2
    %v1138 = vmul.f32 %v1010, 0.2
    %v1139 = vmul.f32 %v1011, 0.2
    %v1140 = vmul.f32 %v1012, 0.2
    %v1141 = vmul.f32 %v1013, 0.2
    %v1142 = vmul.f32 %v1014, 0.2
    %v1143 = vmul.f32 %v1015, 0.2
    %v1144 = vmul.f32 %v1016, 0.2
    %v1145 = vmul.f32 %v1017, 0.2
    %v1146 = vmul.f32 %v1018, 0.2
    %v1147 = vmul.f32 %v1019, 0.2
    %v1148 = vmul.f32 %v1020, 0.2
    %v1149 = vmul.f32 %v1021, 0.2
    %v1150 = vmul.f32 %v1022, 0.2
    %v1151 = vmul.f32 %v1023, 0.2
    %v1152 = vmul.f32 %v1024, 0.2
    %v1153 = vmul.f32 %v1025, 0.2
    %v1154 = vmul.f32 %v1026, 0.2
    %v1155 = vmul.f32 %v1027, 0.2
    %v1156 = vmul.f32 %v1028, 0.2
    %v1157 = vmul.f32 %v1029, 0.2
    %v1158 = vmul.f32 %v1030, 0.2
    %v1159 = vmul.f32 %v1031, 0.2
    %v1160 = vmul.f32 %v1032, 0.2
    %v1161 = vmul.f32 %v1033, 0.2
    %v1162 = vmul.f32 %v1034, 0.2
    %v1163 = vmul.f32 %v1035, 0.2
    %v1164 = vmul.f32 %v1036, 0.2
    %v1165 = vmul.f32 %v1037, 0.2
    %v1166 = vmul.f32 %v1038, 0.2
    %v1167 = vmul.f32 %v1039, 0.2
    %v1168 = vmul.f32 %v1040, 0.2
    %v1169 = vmul.f32 %v1041, 0.2
    %v1170 = vmul.f32 %v1042, 0.2
    %v1171 = vmul.f32 %v1043, 0.2
    %v1172 = vmul.f32 %v1044, 0.2
    %v1173 = vmul.f32 %v1045, 0.2
    %v1174 = vmul.f32 %v1046, 0.2
    %v1175 = vsel %vm1047, %v983, %v1111
    %v1176 = vsel %vm1048, %v984, %v1112
    %v1177 = vsel %vm1049, %v985, %v1113
    %v1178 = vsel %vm1050, %v986, %v1114
    %v1179 = vsel %vm1051, %v987, %v1115
    %v1180 = vsel %vm1052, %v988, %v1116
    %v1181 = vsel %vm1053, %v989, %v1117
    %v1182 = vsel %vm1054, %v990, %v1118
    %v1183 = vsel %vm1055, %v991, %v1119
    %v1184 = vsel %vm1056, %v992, %v1120
    %v1185 = vsel %vm1057, %v993, %v1121
    %v1186 = vsel %vm1058, %v994, %v1122
    %v1187 = vsel %vm1059, %v995, %v1123
    %v1188 = vsel %vm1060, %v996, %v1124
    %v1189 = vsel %vm1061, %v997, %v1125
    %v1190 = vsel %vm1062, %v998, %v1126
    %v1191 = vsel %vm1063, %v999, %v1127
    %v1192 = vsel %vm1064, %v1000, %v1128
    %v1193 = vsel %vm1065, %v1001, %v1129
    %v1194 = vsel %vm1066, %v1002, %v1130
    %v1195 = vsel %vm1067, %v1003, %v1131
    %v1196 = vsel %vm1068, %v1004, %v1132
    %v1197 = vsel %vm1069, %v1005, %v1133
    %v1198 = vsel %vm1070, %v1006, %v1134
    %v1199 = vsel %vm1071, %v1007, %v1135
    %v1200 = vsel %vm1072, %v1008, %v1136
    %v1201 = vsel %vm1073, %v1009, %v1137
    %v1202 = vsel %vm1074, %v1010, %v1138
    %v1203 = vsel %vm1075, %v1011, %v1139
    %v1204 = vsel %vm1076, %v1012, %v1140
    %v1205 = vsel %vm1077, %v1013, %v1141
    %v1206 = vsel %vm1078, %v1014, %v1142
    %v1207 = vsel %vm1079, %v1015, %v1143
    %v1208 = vsel %vm1080, %v1016, %v1144
    %v1209 = vsel %vm1081, %v1017, %v1145
    %v1210 = vsel %vm1082, %v1018, %v1146
    %v1211 = vsel %vm1083, %v1019, %v1147
    %v1212 = vsel %vm1084, %v1020, %v1148
    %v1213 = vsel %vm1085, %v1021, %v1149
    %v1214 = vsel %vm1086, %v1022, %v1150
    %v1215 = vsel %vm1087, %v1023, %v1151
    %v1216 = vsel %vm1088, %v1024, %v1152
    %v1217 = vsel %vm1089, %v1025, %v1153
    %v1218 = vsel %vm1090, %v1026, %v1154
    %v1219 = vsel %vm1091, %v1027, %v1155
    %v1220 = vsel %vm1092, %v1028, %v1156
    %v1221 = vsel %vm1093, %v1029, %v1157
    %v1222 = vsel %vm1094, %v1030, %v1158
    %v1223 = vsel %vm1095, %v1031, %v1159
    %v1224 = vsel %vm1096, %v1032, %v1160
    %v1225 = vsel %vm1097, %v1033, %v1161
    %v1226 = vsel %vm1098, %v1034, %v1162
    %v1227 = vsel %vm1099, %v1035, %v1163
    %v1228 = vsel %vm1100, %v1036, %v1164
    %v1229 = vsel %vm1101, %v1037, %v1165
    %v1230 = vsel %vm1102, %v1038, %v1166
    %v1231 = vsel %vm1103, %v1039, %v1167
    %v1232 = vsel %vm1104, %v1040, %v1168
    %v1233 = vsel %vm1105, %v1041, %v1169
    %v1234 = vsel %vm1106, %v1042, %v1170
    %v1235 = vsel %vm1107, %v1043, %v1171
    %v1236 = vsel %vm1108, %v1044, %v1172
    %v1237 = vsel %vm1109, %v1045, %v1173
    %v1238 = vsel %vm1110, %v1046, %v1174
    %v1239 = vpack.c.bf16 %v1176, %v1175
    %v1240 = vpack.c.bf16 %v1178, %v1177
    %v1241 = vpack.c.bf16 %v1180, %v1179
    %v1242 = vpack.c.bf16 %v1182, %v1181
    %v1243 = vpack.c.bf16 %v1184, %v1183
    %v1244 = vpack.c.bf16 %v1186, %v1185
    %v1245 = vpack.c.bf16 %v1188, %v1187
    %v1246 = vpack.c.bf16 %v1190, %v1189
    %v1247 = vpack.c.bf16 %v1192, %v1191
    %v1248 = vpack.c.bf16 %v1194, %v1193
    %v1249 = vpack.c.bf16 %v1196, %v1195
    %v1250 = vpack.c.bf16 %v1198, %v1197
    %v1251 = vpack.c.bf16 %v1200, %v1199
    %v1252 = vpack.c.bf16 %v1202, %v1201
    %v1253 = vpack.c.bf16 %v1204, %v1203
    %v1254 = vpack.c.bf16 %v1206, %v1205
    %v1255 = vpack.c.bf16 %v1208, %v1207
    %v1256 = vpack.c.bf16 %v1210, %v1209
    %v1257 = vpack.c.bf16 %v1212, %v1211
    %v1258 = vpack.c.bf16 %v1214, %v1213
    %v1259 = vpack.c.bf16 %v1216, %v1215
    %v1260 = vpack.c.bf16 %v1218, %v1217
    %v1261 = vpack.c.bf16 %v1220, %v1219
    %v1262 = vpack.c.bf16 %v1222, %v1221
    %v1263 = vpack.c.bf16 %v1224, %v1223
    %v1264 = vpack.c.bf16 %v1226, %v1225
    %v1265 = vpack.c.bf16 %v1228, %v1227
    %v1266 = vpack.c.bf16 %v1230, %v1229
    %v1267 = vpack.c.bf16 %v1232, %v1231
    %v1268 = vpack.c.bf16 %v1234, %v1233
    %v1269 = vpack.c.bf16 %v1236, %v1235
    %v1270 = vpack.c.bf16 %v1238, %v1237
    %v1303 = vunpack.c.l.b16 %v1239
    %v1304 = vunpack.c.h.b16 %v1239
    %v1305 = vunpack.c.l.b16 %v1240
    %v1306 = vunpack.c.h.b16 %v1240
    %v1307 = vunpack.c.l.b16 %v1241
    %v1308 = vunpack.c.h.b16 %v1241
    %v1309 = vunpack.c.l.b16 %v1242
    %v1310 = vunpack.c.h.b16 %v1242
    %v1311 = vunpack.c.l.b16 %v1243
    %v1312 = vunpack.c.h.b16 %v1243
    %v1313 = vunpack.c.l.b16 %v1244
    %v1314 = vunpack.c.h.b16 %v1244
    %v1315 = vunpack.c.l.b16 %v1245
    %v1316 = vunpack.c.h.b16 %v1245
    %v1317 = vunpack.c.l.b16 %v1246
    %v1318 = vunpack.c.h.b16 %v1246
    %v1319 = vunpack.c.l.b16 %v1247
    %v1320 = vunpack.c.h.b16 %v1247
    %v1321 = vunpack.c.l.b16 %v1248
    %v1322 = vunpack.c.h.b16 %v1248
    %v1323 = vunpack.c.l.b16 %v1249
    %v1324 = vunpack.c.h.b16 %v1249
    %v1325 = vunpack.c.l.b16 %v1250
    %v1326 = vunpack.c.h.b16 %v1250
    %v1327 = vunpack.c.l.b16 %v1251
    %v1328 = vunpack.c.h.b16 %v1251
    %v1329 = vunpack.c.l.b16 %v1252
    %v1330 = vunpack.c.h.b16 %v1252
    %v1331 = vunpack.c.l.b16 %v1253
    %v1332 = vunpack.c.h.b16 %v1253
    %v1333 = vunpack.c.l.b16 %v1254
    %v1334 = vunpack.c.h.b16 %v1254
    %v1335 = vunpack.c.l.b16 %v1255
    %v1336 = vunpack.c.h.b16 %v1255
    %v1337 = vunpack.c.l.b16 %v1256
    %v1338 = vunpack.c.h.b16 %v1256
    %v1339 = vunpack.c.l.b16 %v1257
    %v1340 = vunpack.c.h.b16 %v1257
    %v1341 = vunpack.c.l.b16 %v1258
    %v1342 = vunpack.c.h.b16 %v1258
    %v1343 = vunpack.c.l.b16 %v1259
    %v1344 = vunpack.c.h.b16 %v1259
    %v1345 = vunpack.c.l.b16 %v1260
    %v1346 = vunpack.c.h.b16 %v1260
    %v1347 = vunpack.c.l.b16 %v1261
    %v1348 = vunpack.c.h.b16 %v1261
    %v1349 = vunpack.c.l.b16 %v1262
    %v1350 = vunpack.c.h.b16 %v1262
    %v1351 = vunpack.c.l.b16 %v1263
    %v1352 = vunpack.c.h.b16 %v1263
    %v1353 = vunpack.c.l.b16 %v1264
    %v1354 = vunpack.c.h.b16 %v1264
    %v1355 = vunpack.c.l.b16 %v1265
    %v1356 = vunpack.c.h.b16 %v1265
    %v1357 = vunpack.c.l.b16 %v1266
    %v1358 = vunpack.c.h.b16 %v1266
    %v1359 = vunpack.c.l.b16 %v1267
    %v1360 = vunpack.c.h.b16 %v1267
    %v1361 = vunpack.c.l.b16 %v1268
    %v1362 = vunpack.c.h.b16 %v1268
    %v1363 = vunpack.c.l.b16 %v1269
    %v1364 = vunpack.c.h.b16 %v1269
    %v1365 = vunpack.c.l.b16 %v1270
    %v1366 = vunpack.c.h.b16 %v1270
    %v1367 = vpack.c.b16 %v1303, %v1303
    %v1368 = vpack.c.b16 %v1304, %v1304
    %v1369 = vpack.c.b16 %v1305, %v1305
    %v1370 = vpack.c.b16 %v1306, %v1306
    %v1371 = vpack.c.b16 %v1307, %v1307
    %v1372 = vpack.c.b16 %v1308, %v1308
    %v1373 = vpack.c.b16 %v1309, %v1309
    %v1374 = vpack.c.b16 %v1310, %v1310
    %v1375 = vpack.c.b16 %v1311, %v1311
    %v1376 = vpack.c.b16 %v1312, %v1312
    %v1377 = vpack.c.b16 %v1313, %v1313
    %v1378 = vpack.c.b16 %v1314, %v1314
    %v1379 = vpack.c.b16 %v1315, %v1315
    %v1380 = vpack.c.b16 %v1316, %v1316
    %v1381 = vpack.c.b16 %v1317, %v1317
    %v1382 = vpack.c.b16 %v1318, %v1318
    %v1383 = vpack.c.b16 %v1319, %v1319
    %v1384 = vpack.c.b16 %v1320, %v1320
    %v1385 = vpack.c.b16 %v1321, %v1321
    %v1386 = vpack.c.b16 %v1322, %v1322
    %v1387 = vpack.c.b16 %v1323, %v1323
    %v1388 = vpack.c.b16 %v1324, %v1324
    %v1389 = vpack.c.b16 %v1325, %v1325
    %v1390 = vpack.c.b16 %v1326, %v1326
    %v1391 = vpack.c.b16 %v1327, %v1327
    %v1392 = vpack.c.b16 %v1328, %v1328
    %v1393 = vpack.c.b16 %v1329, %v1329
    %v1394 = vpack.c.b16 %v1330, %v1330
    %v1395 = vpack.c.b16 %v1331, %v1331
    %v1396 = vpack.c.b16 %v1332, %v1332
    %v1397 = vpack.c.b16 %v1333, %v1333
    %v1398 = vpack.c.b16 %v1334, %v1334
    %v1399 = vpack.c.b16 %v1335, %v1335
    %v1400 = vpack.c.b16 %v1336, %v1336
    %v1401 = vpack.c.b16 %v1337, %v1337
    %v1402 = vpack.c.b16 %v1338, %v1338
    %v1403 = vpack.c.b16 %v1339, %v1339
    %v1404 = vpack.c.b16 %v1340, %v1340
    %v1405 = vpack.c.b16 %v1341, %v1341
    %v1406 = vpack.c.b16 %v1342, %v1342
    %v1407 = vpack.c.b16 %v1343, %v1343
    %v1408 = vpack.c.b16 %v1344, %v1344
    %v1409 = vpack.c.b16 %v1345, %v1345
    %v1410 = vpack.c.b16 %v1346, %v1346
    %v1411 = vpack.c.b16 %v1347, %v1347
    %v1412 = vpack.c.b16 %v1348, %v1348
    %v1413 = vpack.c.b16 %v1349, %v1349
    %v1414 = vpack.c.b16 %v1350, %v1350
    %v1415 = vpack.c.b16 %v1351, %v1351
    %v1416 = vpack.c.b16 %v1352, %v1352
    %v1417 = vpack.c.b16 %v1353, %v1353
    %v1418 = vpack.c.b16 %v1354, %v1354
    %v1419 = vpack.c.b16 %v1355, %v1355
    %v1420 = vpack.c.b16 %v1356, %v1356
    %v1421 = vpack.c.b16 %v1357, %v1357
    %v1422 = vpack.c.b16 %v1358, %v1358
    %v1423 = vpack.c.b16 %v1359, %v1359
    %v1424 = vpack.c.b16 %v1360, %v1360
    %v1425 = vpack.c.b16 %v1361, %v1361
    %v1426 = vpack.c.b16 %v1362, %v1362
    %v1427 = vpack.c.b16 %v1363, %v1363
    %v1428 = vpack.c.b16 %v1364, %v1364
    %v1429 = vpack.c.b16 %v1365, %v1365
    %v1430 = vpack.c.b16 %v1366, %v1366
    %1495 = vst [vmem:[%s3] sm:$0xf] %v1367
    %1496 = vst [vmem:[%s3 + $0x4] sm:$0xf] %v1368
    %1497 = vst [vmem:[%s3 + $0x8] sm:$0xf] %v1369
    %1498 = vst [vmem:[%s3 + $0xc] sm:$0xf] %v1370
    %1499 = vst [vmem:[%s3 + $0x10] sm:$0xf] %v1371
    %1500 = vst [vmem:[%s3 + $0x14] sm:$0xf] %v1372
    %1501 = vst [vmem:[%s3 + $0x18] sm:$0xf] %v1373
    %1502 = vst [vmem:[%s3 + $0x1c] sm:$0xf] %v1374
    %1503 = vst [vmem:[%s3 + $0x20] sm:$0xf] %v1375
    %1504 = vst [vmem:[%s3 + $0x24] sm:$0xf] %v1376
    %1505 = vst [vmem:[%s3 + $0x28] sm:$0xf] %v1377
    %1506 = vst [vmem:[%s3 + $0x2c] sm:$0xf] %v1378
    %1507 = vst [vmem:[%s3 + $0x30] sm:$0xf] %v1379
    %1508 = vst [vmem:[%s3 + $0x34] sm:$0xf] %v1380
    %1509 = vst [vmem:[%s3 + $0x38] sm:$0xf] %v1381
    %1510 = vst [vmem:[%s3 + $0x3c] sm:$0xf] %v1382
    %1511 = vst [vmem:[%s3 + $0x40] sm:$0xf] %v1383
    %1512 = vst [vmem:[%s3 + $0x44] sm:$0xf] %v1384
    %1513 = vst [vmem:[%s3 + $0x48] sm:$0xf] %v1385
    %1514 = vst [vmem:[%s3 + $0x4c] sm:$0xf] %v1386
    %1515 = vst [vmem:[%s3 + $0x50] sm:$0xf] %v1387
    %1516 = vst [vmem:[%s3 + $0x54] sm:$0xf] %v1388
    %1517 = vst [vmem:[%s3 + $0x58] sm:$0xf] %v1389
    %1518 = vst [vmem:[%s3 + $0x5c] sm:$0xf] %v1390
    %1519 = vst [vmem:[%s3 + $0x60] sm:$0xf] %v1391
    %1520 = vst [vmem:[%s3 + $0x64] sm:$0xf] %v1392
    %1521 = vst [vmem:[%s3 + $0x68] sm:$0xf] %v1393
    %1522 = vst [vmem:[%s3 + $0x6c] sm:$0xf] %v1394
    %1523 = vst [vmem:[%s3 + $0x70] sm:$0xf] %v1395
    %1524 = vst [vmem:[%s3 + $0x74] sm:$0xf] %v1396
    %1525 = vst [vmem:[%s3 + $0x78] sm:$0xf] %v1397
    %1526 = vst [vmem:[%s3 + $0x7c] sm:$0xf] %v1398
    %1527 = vst [vmem:[%s3 + $0x80] sm:$0xf] %v1399
    %1528 = vst [vmem:[%s3 + $0x84] sm:$0xf] %v1400
    %1529 = vst [vmem:[%s3 + $0x88] sm:$0xf] %v1401
    %1530 = vst [vmem:[%s3 + $0x8c] sm:$0xf] %v1402
    %1531 = vst [vmem:[%s3 + $0x90] sm:$0xf] %v1403
    %1532 = vst [vmem:[%s3 + $0x94] sm:$0xf] %v1404
    %1533 = vst [vmem:[%s3 + $0x98] sm:$0xf] %v1405
    %1534 = vst [vmem:[%s3 + $0x9c] sm:$0xf] %v1406
    %1535 = vst [vmem:[%s3 + $0xa0] sm:$0xf] %v1407
    %1536 = vst [vmem:[%s3 + $0xa4] sm:$0xf] %v1408
    %1537 = vst [vmem:[%s3 + $0xa8] sm:$0xf] %v1409
    %1538 = vst [vmem:[%s3 + $0xac] sm:$0xf] %v1410
    %1539 = vst [vmem:[%s3 + $0xb0] sm:$0xf] %v1411
    %1540 = vst [vmem:[%s3 + $0xb4] sm:$0xf] %v1412
    %1541 = vst [vmem:[%s3 + $0xb8] sm:$0xf] %v1413
    %1542 = vst [vmem:[%s3 + $0xbc] sm:$0xf] %v1414
    %1543 = vst [vmem:[%s3 + $0xc0] sm:$0xf] %v1415
    %1544 = vst [vmem:[%s3 + $0xc4] sm:$0xf] %v1416
    %1545 = vst [vmem:[%s3 + $0xc8] sm:$0xf] %v1417
    %1546 = vst [vmem:[%s3 + $0xcc] sm:$0xf] %v1418
    %1547 = vst [vmem:[%s3 + $0xd0] sm:$0xf] %v1419
    %1548 = vst [vmem:[%s3 + $0xd4] sm:$0xf] %v1420
    %1549 = vst [vmem:[%s3 + $0xd8] sm:$0xf] %v1421
    %1550 = vst [vmem:[%s3 + $0xdc] sm:$0xf] %v1422
    %1551 = vst [vmem:[%s3 + $0xe0] sm:$0xf] %v1423
    %1552 = vst [vmem:[%s3 + $0xe4] sm:$0xf] %v1424
    %1553 = vst [vmem:[%s3 + $0xe8] sm:$0xf] %v1425
    %1554 = vst [vmem:[%s3 + $0xec] sm:$0xf] %v1426
    %1555 = vst [vmem:[%s3 + $0xf0] sm:$0xf] %v1427
    %1556 = vst [vmem:[%s3 + $0xf4] sm:$0xf] %v1428
    %1557 = vst [vmem:[%s3 + $0xf8] sm:$0xf] %v1429
    %1558 = vst [vmem:[%s3 + $0xfc] sm:$0xf] %v1430
  $region21: #{_lambda_.11} parent=0 // pred_fallthru
    _
  // Predicated region
  $region22: #{_lambda_.11} parent=0 // pred_check
    _
  $region23: #{_lambda_.11} parent=0 // pred_check_branch
    %1560 = sbr.rel (0) target = $region25
  $region24: #{_lambda_.11} parent=0 // pred_region
    _
  $region25: #{_lambda_.11} parent=0 // pred_fallthru
    _
  // Predicated region
  $region26: #{_lambda_.11} parent=0 // pred_check
    _
  $region27: #{_lambda_.11} parent=0 // pred_check_branch
    %1562 = sbr.rel (0) target = $region29
  $region28: #{_lambda_.11} parent=0 // pred_region
    _
  $region29: #{_lambda_.11} parent=0 // pred_fallthru
    _

// kernel: _lambda_.12
$region0: #{_lambda_.12}
  #allocation0 [shape = 'u32[]', space=smem, size = 0x4, offset = 0x4, fixed_abs, tag = 'smem constant byte address 0x4 - core index']
  #allocation1 [shape = 'u32[144,128]{1,0:T(1,128)}', space=vmem, size = 0x12000, scoped, tag = 'internal scratch']
  #allocation2 [shape = 'f32[128,128]{1,0:T(8,128)}', space=vmem, size = 0x10000, scoped, tag = 'scratch operand']
  %s0 = inlined_call_operand.vmem [shape: bf16[128,256], index: 0, kind: input, shape index: {}]
  %s1 = inlined_call_operand.vmem [shape: bf16[256,128], index: 1, kind: input, shape index: {}]
  %s2 = inlined_call_operand.vmem [shape: f32[1,128], index: 2, kind: input, shape index: {}]
  %s3 = inlined_call_operand.vmem [shape: bf16[128,128], index: 3, kind: output, shape index: {0}]
  %s4 = inlined_call_operand.vmem [shape: f32[8,128], index: 4, kind: output, shape index: {1}]
  %5 = xla_tuple %s3, %s4
  %s6 = sld [smem:[#allocation0]]
  $region38: #{_lambda_.12} parent=0
    _
  %s8 = ssub.s32 1, %s6
  %s9 = scalar_select 0, %s8, %s6
  // Predicated region
  $region2: #{_lambda_.12} parent=0 // pred_check
    _
  $region3: #{_lambda_.12} parent=0 // pred_check_branch
    %11 = sbr.rel (0) target = $region5
  $region4: #{_lambda_.12} parent=0 // pred_region
    _
  $region5: #{_lambda_.12} parent=0 // pred_fallthru
    _
  // Predicated region
  $region6: #{_lambda_.12} parent=0 // pred_check
    _
  $region7: #{_lambda_.12} parent=0 // pred_check_branch
    %13 = sbr.rel (0) target = $region9
  $region8: #{_lambda_.12} parent=0 // pred_region
    _
  $region9: #{_lambda_.12} parent=0 // pred_fallthru
    _
  // Predicated region
  $region10: #{_lambda_.12} parent=0 // pred_check
    _
  $region11: #{_lambda_.12} parent=0 // pred_check_branch
    %15 = sbr.rel (0) target = $region13
  $region12: #{_lambda_.12} parent=0 // pred_region
    _
  $region13: #{_lambda_.12} parent=0 // pred_fallthru
    _
  %p17 = scmp.eq.s32.totalorder 0, 0
  // Predicated region
  $region14: #{_lambda_.12} parent=0 // pred_check
    %p18 = pneg %p17
  $region15: #{_lambda_.12} parent=0 // pred_check_branch
    %20 = sbr.rel (%p18) target = $region17
  $region16: #{_lambda_.12} parent=0 // pred_region
    %21 = vst [vmem:[#allocation2] sm:$0xff] 0.0
    %22 = vst [vmem:[#allocation2 + $0x8] sm:$0xff] 0.0
    %23 = vst [vmem:[#allocation2 + $0x10] sm:$0xff] 0.0
    %24 = vst [vmem:[#allocation2 + $0x18] sm:$0xff] 0.0
    %25 = vst [vmem:[#allocation2 + $0x20] sm:$0xff] 0.0
    %26 = vst [vmem:[#allocation2 + $0x28] sm:$0xff] 0.0
    %27 = vst [vmem:[#allocation2 + $0x30] sm:$0xff] 0.0
    %28 = vst [vmem:[#allocation2 + $0x38] sm:$0xff] 0.0
    %29 = vst [vmem:[#allocation2 + $0x40] sm:$0xff] 0.0
    %30 = vst [vmem:[#allocation2 + $0x48] sm:$0xff] 0.0
    %31 = vst [vmem:[#allocation2 + $0x50] sm:$0xff] 0.0
    %32 = vst [vmem:[#allocation2 + $0x58] sm:$0xff] 0.0
    %33 = vst [vmem:[#allocation2 + $0x60] sm:$0xff] 0.0
    %34 = vst [vmem:[#allocation2 + $0x68] sm:$0xff] 0.0
    %35 = vst [vmem:[#allocation2 + $0x70] sm:$0xff] 0.0
    %36 = vst [vmem:[#allocation2 + $0x78] sm:$0xff] 0.0
  $region17: #{_lambda_.12} parent=0 // pred_fallthru
    _
  %v37 = vld [vmem:[#allocation2] sm:$0xff]
  %v38 = vld [vmem:[#allocation2 + $0x8] sm:$0xff]
  %v39 = vld [vmem:[#allocation2 + $0x10] sm:$0xff]
  %v40 = vld [vmem:[#allocation2 + $0x18] sm:$0xff]
  %v41 = vld [vmem:[#allocation2 + $0x20] sm:$0xff]
  %v42 = vld [vmem:[#allocation2 + $0x28] sm:$0xff]
  %v43 = vld [vmem:[#allocation2 + $0x30] sm:$0xff]
  %v44 = vld [vmem:[#allocation2 + $0x38] sm:$0xff]
  %v45 = vld [vmem:[#allocation2 + $0x40] sm:$0xff]
  %v46 = vld [vmem:[#allocation2 + $0x48] sm:$0xff]
  %v47 = vld [vmem:[#allocation2 + $0x50] sm:$0xff]
  %v48 = vld [vmem:[#allocation2 + $0x58] sm:$0xff]
  %v49 = vld [vmem:[#allocation2 + $0x60] sm:$0xff]
  %v50 = vld [vmem:[#allocation2 + $0x68] sm:$0xff]
  %v51 = vld [vmem:[#allocation2 + $0x70] sm:$0xff]
  %v52 = vld [vmem:[#allocation2 + $0x78] sm:$0xff]
  %v53 = vld [vmem:[%s0] sm:$0xff]
  %v54 = vld [vmem:[%s0 + $0x8] sm:$0xff]
  %v55 = vld [vmem:[%s0 + $0x10] sm:$0xff]
  %v56 = vld [vmem:[%s0 + $0x18] sm:$0xff]
  %v57 = vld [vmem:[%s0 + $0x20] sm:$0xff]
  %v58 = vld [vmem:[%s0 + $0x28] sm:$0xff]
  %v59 = vld [vmem:[%s0 + $0x30] sm:$0xff]
  %v60 = vld [vmem:[%s0 + $0x38] sm:$0xff]
  %v61 = vld [vmem:[%s0 + $0x40] sm:$0xff]
  %v62 = vld [vmem:[%s0 + $0x48] sm:$0xff]
  %v63 = vld [vmem:[%s0 + $0x50] sm:$0xff]
  %v64 = vld [vmem:[%s0 + $0x58] sm:$0xff]
  %v65 = vld [vmem:[%s0 + $0x60] sm:$0xff]
  %v66 = vld [vmem:[%s0 + $0x68] sm:$0xff]
  %v67 = vld [vmem:[%s0 + $0x70] sm:$0xff]
  %v68 = vld [vmem:[%s0 + $0x78] sm:$0xff]
  %v69 = vld [vmem:[%s1] sm:$0xf]
  %v70 = vld [vmem:[%s1 + $0x4] sm:$0xf]
  %v71 = vld [vmem:[%s1 + $0x8] sm:$0xf]
  %v72 = vld [vmem:[%s1 + $0xc] sm:$0xf]
  %v73 = vld [vmem:[%s1 + $0x10] sm:$0xf]
  %v74 = vld [vmem:[%s1 + $0x14] sm:$0xf]
  %v75 = vld [vmem:[%s1 + $0x18] sm:$0xf]
  %v76 = vld [vmem:[%s1 + $0x1c] sm:$0xf]
  %v77 = vld [vmem:[%s1 + $0x20] sm:$0xf]
  %v78 = vld [vmem:[%s1 + $0x24] sm:$0xf]
  %v79 = vld [vmem:[%s1 + $0x28] sm:$0xf]
  %v80 = vld [vmem:[%s1 + $0x2c] sm:$0xf]
  %v81 = vld [vmem:[%s1 + $0x30] sm:$0xf]
  %v82 = vld [vmem:[%s1 + $0x34] sm:$0xf]
  %v83 = vld [vmem:[%s1 + $0x38] sm:$0xf]
  %v84 = vld [vmem:[%s1 + $0x3c] sm:$0xf]
  %v85 = vld [vmem:[%s1 + $0x40] sm:$0xf]
  %v86 = vld [vmem:[%s1 + $0x44] sm:$0xf]
  %v87 = vld [vmem:[%s1 + $0x48] sm:$0xf]
  %v88 = vld [vmem:[%s1 + $0x4c] sm:$0xf]
  %v89 = vld [vmem:[%s1 + $0x50] sm:$0xf]
  %v90 = vld [vmem:[%s1 + $0x54] sm:$0xf]
  %v91 = vld [vmem:[%s1 + $0x58] sm:$0xf]
  %v92 = vld [vmem:[%s1 + $0x5c] sm:$0xf]
  %v93 = vld [vmem:[%s1 + $0x60] sm:$0xf]
  %v94 = vld [vmem:[%s1 + $0x64] sm:$0xf]
  %v95 = vld [vmem:[%s1 + $0x68] sm:$0xf]
  %v96 = vld [vmem:[%s1 + $0x6c] sm:$0xf]
  %v97 = vld [vmem:[%s1 + $0x70] sm:$0xf]
  %v98 = vld [vmem:[%s1 + $0x74] sm:$0xf]
  %v99 = vld [vmem:[%s1 + $0x78] sm:$0xf]
  %v100 = vld [vmem:[%s1 + $0x7c] sm:$0xf]
  %v117 = vunpack.c.l.b16 %v53
  %v118 = vunpack.c.h.b16 %v53
  %v119 = vunpack.c.l.b16 %v54
  %v120 = vunpack.c.h.b16 %v54
  %v121 = vunpack.c.l.b16 %v55
  %v122 = vunpack.c.h.b16 %v55
  %v123 = vunpack.c.l.b16 %v56
  %v124 = vunpack.c.h.b16 %v56
  %v125 = vunpack.c.l.b16 %v57
  %v126 = vunpack.c.h.b16 %v57
  %v127 = vunpack.c.l.b16 %v58
  %v128 = vunpack.c.h.b16 %v58
  %v129 = vunpack.c.l.b16 %v59
  %v130 = vunpack.c.h.b16 %v59
  %v131 = vunpack.c.l.b16 %v60
  %v132 = vunpack.c.h.b16 %v60
  %v133 = vunpack.c.l.b16 %v61
  %v134 = vunpack.c.h.b16 %v61
  %v135 = vunpack.c.l.b16 %v62
  %v136 = vunpack.c.h.b16 %v62
  %v137 = vunpack.c.l.b16 %v63
  %v138 = vunpack.c.h.b16 %v63
  %v139 = vunpack.c.l.b16 %v64
  %v140 = vunpack.c.h.b16 %v64
  %v141 = vunpack.c.l.b16 %v65
  %v142 = vunpack.c.h.b16 %v65
  %v143 = vunpack.c.l.b16 %v66
  %v144 = vunpack.c.h.b16 %v66
  %v145 = vunpack.c.l.b16 %v67
  %v146 = vunpack.c.h.b16 %v67
  %v147 = vunpack.c.l.b16 %v68
  %v148 = vunpack.c.h.b16 %v68
  %v149 = vpack.c.b16 %v119, %v117
  %v150 = vpack.c.b16 %v120, %v118
  %v151 = vpack.c.b16 %v123, %v121
  %v152 = vpack.c.b16 %v124, %v122
  %v153 = vpack.c.b16 %v127, %v125
  %v154 = vpack.c.b16 %v128, %v126
  %v155 = vpack.c.b16 %v131, %v129
  %v156 = vpack.c.b16 %v132, %v130
  %v157 = vpack.c.b16 %v135, %v133
  %v158 = vpack.c.b16 %v136, %v134
  %v159 = vpack.c.b16 %v139, %v137
  %v160 = vpack.c.b16 %v140, %v138
  %v161 = vpack.c.b16 %v143, %v141
  %v162 = vpack.c.b16 %v144, %v142
  %v163 = vpack.c.b16 %v147, %v145
  %v164 = vpack.c.b16 %v148, %v146
  %v213 = vunpack.c.l.b16 %v69
  %v214 = vunpack.c.l.b16 %v70
  %v215 = vunpack.c.l.b16 %v71
  %v216 = vunpack.c.l.b16 %v72
  %v217 = vunpack.c.l.b16 %v73
  %v218 = vunpack.c.l.b16 %v74
  %v219 = vunpack.c.l.b16 %v75
  %v220 = vunpack.c.l.b16 %v76
  %v221 = vunpack.c.l.b16 %v77
  %v222 = vunpack.c.l.b16 %v78
  %v223 = vunpack.c.l.b16 %v79
  %v224 = vunpack.c.l.b16 %v80
  %v225 = vunpack.c.l.b16 %v81
  %v226 = vunpack.c.l.b16 %v82
  %v227 = vunpack.c.l.b16 %v83
  %v228 = vunpack.c.l.b16 %v84
  %v229 = vunpack.c.l.b16 %v85
  %v230 = vunpack.c.l.b16 %v86
  %v231 = vunpack.c.l.b16 %v87
  %v232 = vunpack.c.l.b16 %v88
  %v233 = vunpack.c.l.b16 %v89
  %v234 = vunpack.c.l.b16 %v90
  %v235 = vunpack.c.l.b16 %v91
  %v236 = vunpack.c.l.b16 %v92
  %v237 = vunpack.c.l.b16 %v93
  %v238 = vunpack.c.l.b16 %v94
  %v239 = vunpack.c.l.b16 %v95
  %v240 = vunpack.c.l.b16 %v96
  %v241 = vunpack.c.l.b16 %v97
  %v242 = vunpack.c.l.b16 %v98
  %v243 = vunpack.c.l.b16 %v99
  %v244 = vunpack.c.l.b16 %v100
  %v245 = vpack.c.b16 %v214, %v213
  %v246 = vpack.c.b16 %v216, %v215
  %v247 = vpack.c.b16 %v218, %v217
  %v248 = vpack.c.b16 %v220, %v219
  %v249 = vpack.c.b16 %v222, %v221
  %v250 = vpack.c.b16 %v224, %v223
  %v251 = vpack.c.b16 %v226, %v225
  %v252 = vpack.c.b16 %v228, %v227
  %v253 = vpack.c.b16 %v230, %v229
  %v254 = vpack.c.b16 %v232, %v231
  %v255 = vpack.c.b16 %v234, %v233
  %v256 = vpack.c.b16 %v236, %v235
  %v257 = vpack.c.b16 %v238, %v237
  %v258 = vpack.c.b16 %v240, %v239
  %v259 = vpack.c.b16 %v242, %v241
  %v260 = vpack.c.b16 %v244, %v243
  %277 = vmatprep.subr.bf16.mxu0 0
  %278 = vmatpush1.bf16.msra.mxu0 %v245
  %279 = vmatprep.subr.bf16.mxu0 0
  %280 = vmatpush1.bf16.msra.mxu0 %v246
  %281 = vmatprep.subr.bf16.mxu0 0
  %282 = vmatpush1.bf16.msra.mxu0 %v247
  %283 = vmatprep.subr.bf16.mxu0 0
  %284 = vmatpush1.bf16.msra.mxu0 %v248
  %285 = vmatprep.subr.bf16.mxu0 0
  %286 = vmatpush1.bf16.msra.mxu0 %v249
  %287 = vmatprep.subr.bf16.mxu0 0
  %288 = vmatpush1.bf16.msra.mxu0 %v250
  %289 = vmatprep.subr.bf16.mxu0 0
  %290 = vmatpush1.bf16.msra.mxu0 %v251
  %291 = vmatprep.subr.bf16.mxu0 0
  %292 = vmatpush1.bf16.msra.mxu0 %v252
  %293 = vmatprep.subr.bf16.mxu0 0
  %294 = vmatpush1.bf16.msra.mxu0 %v253
  %295 = vmatprep.subr.bf16.mxu0 0
  %296 = vmatpush1.bf16.msra.mxu0 %v254
  %297 = vmatprep.subr.bf16.mxu0 0
  %298 = vmatpush1.bf16.msra.mxu0 %v255
  %299 = vmatprep.subr.bf16.mxu0 0
  %300 = vmatpush1.bf16.msra.mxu0 %v256
  %301 = vmatprep.subr.bf16.mxu0 0
  %302 = vmatpush1.bf16.msra.mxu0 %v257
  %303 = vmatprep.subr.bf16.mxu0 0
  %304 = vmatpush1.bf16.msra.mxu0 %v258
  %305 = vmatprep.subr.bf16.mxu0 0
  %306 = vmatpush1.bf16.msra.mxu0 %v259
  %307 = vmatprep.subr.bf16.mxu0 0
  %308 = vmatpush1.bf16.msra.mxu0 %v260
  %309 = vmatprep.mubr.bf16.mxu0 %v150
  %310 = vmatmul.mubr.bf16.gmra.mrb[0].mxu0 %v149
  %v311 = vpop.f32.mrb[0].mxu0
  %v312 = vadd.f32 0.0, %v311
  %v313 = vpop.f32.mrb[0].mxu0
  %v314 = vpop.f32.mrb[0].mxu0
  %v315 = vadd.f32 0.0, %v314
  %v316 = vpop.f32.mrb[0].mxu0
  %317 = vmatprep.mubr.bf16.mxu0 %v152
  %318 = vmatmul.mubr.bf16.gmra.mrb[0].mxu0 %v151
  %v319 = vpop.f32.mrb[0].mxu0
  %v320 = vadd.f32 0.0, %v319
  %v321 = vpop.f32.mrb[0].mxu0
  %v322 = vpop.f32.mrb[0].mxu0
  %v323 = vadd.f32 0.0, %v322
  %v324 = vpop.f32.mrb[0].mxu0
  %325 = vmatprep.mubr.bf16.mxu0 %v154
  %326 = vmatmul.mubr.bf16.gmra.mrb[0].mxu0 %v153
  %v327 = vpop.f32.mrb[0].mxu0
  %v328 = vadd.f32 0.0, %v327
  %v329 = vpop.f32.mrb[0].mxu0
  %v330 = vpop.f32.mrb[0].mxu0
  %v331 = vadd.f32 0.0, %v330
  %v332 = vpop.f32.mrb[0].mxu0
  %333 = vmatprep.mubr.bf16.mxu0 %v156
  %334 = vmatmul.mubr.bf16.gmra.mrb[0].mxu0 %v155
  %v335 = vpop.f32.mrb[0].mxu0
  %v336 = vadd.f32 0.0, %v335
  %v337 = vpop.f32.mrb[0].mxu0
  %v338 = vpop.f32.mrb[0].mxu0
  %v339 = vadd.f32 0.0, %v338
  %v340 = vpop.f32.mrb[0].mxu0
  %341 = vmatprep.mubr.bf16.mxu0 %v158
  %342 = vmatmul.mubr.bf16.gmra.mrb[0].mxu0 %v157
  %v343 = vpop.f32.mrb[0].mxu0
  %v344 = vadd.f32 0.0, %v343
  %v345 = vpop.f32.mrb[0].mxu0
  %v346 = vpop.f32.mrb[0].mxu0
  %v347 = vadd.f32 0.0, %v346
  %v348 = vpop.f32.mrb[0].mxu0
  %349 = vmatprep.mubr.bf16.mxu0 %v160
  %350 = vmatmul.mubr.bf16.gmra.mrb[0].mxu0 %v159
  %v351 = vpop.f32.mrb[0].mxu0
  %v352 = vadd.f32 0.0, %v351
  %v353 = vpop.f32.mrb[0].mxu0
  %v354 = vpop.f32.mrb[0].mxu0
  %v355 = vadd.f32 0.0, %v354
  %v356 = vpop.f32.mrb[0].mxu0
  %357 = vmatprep.mubr.bf16.mxu0 %v162
  %358 = vmatmul.mubr.bf16.gmra.mrb[0].mxu0 %v161
  %v359 = vpop.f32.mrb[0].mxu0
  %v360 = vadd.f32 0.0, %v359
  %v361 = vpop.f32.mrb[0].mxu0
  %v362 = vpop.f32.mrb[0].mxu0
  %v363 = vadd.f32 0.0, %v362
  %v364 = vpop.f32.mrb[0].mxu0
  %365 = vmatprep.mubr.bf16.mxu0 %v164
  %366 = vmatmul.mubr.bf16.gmra.mrb[0].mxu0 %v163
  %v367 = vpop.f32.mrb[0].mxu0
  %v368 = vadd.f32 0.0, %v367
  %v369 = vpop.f32.mrb[0].mxu0
  %v370 = vpop.f32.mrb[0].mxu0
  %v371 = vadd.f32 0.0, %v370
  %v372 = vpop.f32.mrb[0].mxu0
  %373 = vdwg.mxu0
  %v374 = vadd.f32 %v37, %v312
  %v375 = vadd.f32 %v38, %v315
  %v376 = vadd.f32 %v39, %v320
  %v377 = vadd.f32 %v40, %v323
  %v378 = vadd.f32 %v41, %v328
  %v379 = vadd.f32 %v42, %v331
  %v380 = vadd.f32 %v43, %v336
  %v381 = vadd.f32 %v44, %v339
  %v382 = vadd.f32 %v45, %v344
  %v383 = vadd.f32 %v46, %v347
  %v384 = vadd.f32 %v47, %v352
  %v385 = vadd.f32 %v48, %v355
  %v386 = vadd.f32 %v49, %v360
  %v387 = vadd.f32 %v50, %v363
  %v388 = vadd.f32 %v51, %v368
  %v389 = vadd.f32 %v52, %v371
  %390 = vst [vmem:[#allocation2] sm:$0xff] %v374
  %391 = vst [vmem:[#allocation2 + $0x8] sm:$0xff] %v375
  %392 = vst [vmem:[#allocation2 + $0x10] sm:$0xff] %v376
  %393 = vst [vmem:[#allocation2 + $0x18] sm:$0xff] %v377
  %394 = vst [vmem:[#allocation2 + $0x20] sm:$0xff] %v378
  %395 = vst [vmem:[#allocation2 + $0x28] sm:$0xff] %v379
  %396 = vst [vmem:[#allocation2 + $0x30] sm:$0xff] %v380
  %397 = vst [vmem:[#allocation2 + $0x38] sm:$0xff] %v381
  %398 = vst [vmem:[#allocation2 + $0x40] sm:$0xff] %v382
  %399 = vst [vmem:[#allocation2 + $0x48] sm:$0xff] %v383
  %400 = vst [vmem:[#allocation2 + $0x50] sm:$0xff] %v384
  %401 = vst [vmem:[#allocation2 + $0x58] sm:$0xff] %v385
  %402 = vst [vmem:[#allocation2 + $0x60] sm:$0xff] %v386
  %403 = vst [vmem:[#allocation2 + $0x68] sm:$0xff] %v387
  %404 = vst [vmem:[#allocation2 + $0x70] sm:$0xff] %v388
  %405 = vst [vmem:[#allocation2 + $0x78] sm:$0xff] %v389
  // Predicated region
  $region18: #{_lambda_.12} parent=0 // pred_check
    %p406 = pneg %p17
  $region19: #{_lambda_.12} parent=0 // pred_check_branch
    %408 = sbr.rel (%p406) target = $region21
  $region20: #{_lambda_.12} parent=0 // pred_region
    %v409 = vld [vmem:[#allocation2] sm:$0xff]
    %v410 = vld [vmem:[#allocation2 + $0x8] sm:$0xff]
    %v411 = vld [vmem:[#allocation2 + $0x10] sm:$0xff]
    %v412 = vld [vmem:[#allocation2 + $0x18] sm:$0xff]
    %v413 = vld [vmem:[#allocation2 + $0x20] sm:$0xff]
    %v414 = vld [vmem:[#allocation2 + $0x28] sm:$0xff]
    %v415 = vld [vmem:[#allocation2 + $0x30] sm:$0xff]
    %v416 = vld [vmem:[#allocation2 + $0x38] sm:$0xff]
    %v417 = vld [vmem:[#allocation2 + $0x40] sm:$0xff]
    %v418 = vld [vmem:[#allocation2 + $0x48] sm:$0xff]
    %v419 = vld [vmem:[#allocation2 + $0x50] sm:$0xff]
    %v420 = vld [vmem:[#allocation2 + $0x58] sm:$0xff]
    %v421 = vld [vmem:[#allocation2 + $0x60] sm:$0xff]
    %v422 = vld [vmem:[#allocation2 + $0x68] sm:$0xff]
    %v423 = vld [vmem:[#allocation2 + $0x70] sm:$0xff]
    %v424 = vld [vmem:[#allocation2 + $0x78] sm:$0xff]
    %v425 = vld [vmem:[%s2] sm:$0x1]
    %v427 = vlaneseq
    %v428 = vshrl.u32 %v427, 7
    %v429 = vsub.s32 0, %v428
    %v430 = vrot.slane %v425, %v429
    %v432 = vadd.f32 %v409, %v430
    %v433 = vadd.f32 %v410, %v430
    %v434 = vadd.f32 %v411, %v430
    %v435 = vadd.f32 %v412, %v430
    %v436 = vadd.f32 %v413, %v430
    %v437 = vadd.f32 %v414, %v430
    %v438 = vadd.f32 %v415, %v430
    %v439 = vadd.f32 %v416, %v430
    %v440 = vadd.f32 %v417, %v430
    %v441 = vadd.f32 %v418, %v430
    %v442 = vadd.f32 %v419, %v430
    %v443 = vadd.f32 %v420, %v430
    %v444 = vadd.f32 %v421, %v430
    %v445 = vadd.f32 %v422, %v430
    %v446 = vadd.f32 %v423, %v430
    %v447 = vadd.f32 %v424, %v430
    %v448 = vpack.c.bf16 %v433, %v432
    %v449 = vpack.c.bf16 %v435, %v434
    %v450 = vpack.c.bf16 %v437, %v436
    %v451 = vpack.c.bf16 %v439, %v438
    %v452 = vpack.c.bf16 %v441, %v440
    %v453 = vpack.c.bf16 %v443, %v442
    %v454 = vpack.c.bf16 %v445, %v444
    %v455 = vpack.c.bf16 %v447, %v446
    %v464 = vunpack.c.l.b16 %v448
    %v465 = vunpack.c.h.b16 %v448
    %v466 = vunpack.c.l.b16 %v449
    %v467 = vunpack.c.h.b16 %v449
    %v468 = vunpack.c.l.b16 %v450
    %v469 = vunpack.c.h.b16 %v450
    %v470 = vunpack.c.l.b16 %v451
    %v471 = vunpack.c.h.b16 %v451
    %v472 = vunpack.c.l.b16 %v452
    %v473 = vunpack.c.h.b16 %v452
    %v474 = vunpack.c.l.b16 %v453
    %v475 = vunpack.c.h.b16 %v453
    %v476 = vunpack.c.l.b16 %v454
    %v477 = vunpack.c.h.b16 %v454
    %v478 = vunpack.c.l.b16 %v455
    %v479 = vunpack.c.h.b16 %v455
    %v480 = vpack.c.b16 %v464, %v464
    %v481 = vpack.c.b16 %v465, %v465
    %v482 = vpack.c.b16 %v466, %v466
    %v483 = vpack.c.b16 %v467, %v467
    %v484 = vpack.c.b16 %v468, %v468
    %v485 = vpack.c.b16 %v469, %v469
    %v486 = vpack.c.b16 %v470, %v470
    %v487 = vpack.c.b16 %v471, %v471
    %v488 = vpack.c.b16 %v472, %v472
    %v489 = vpack.c.b16 %v473, %v473
    %v490 = vpack.c.b16 %v474, %v474
    %v491 = vpack.c.b16 %v475, %v475
    %v492 = vpack.c.b16 %v476, %v476
    %v493 = vpack.c.b16 %v477, %v477
    %v494 = vpack.c.b16 %v478, %v478
    %v495 = vpack.c.b16 %v479, %v479
    %512 = vst [vmem:[%s3] sm:$0xf] %v480
    %513 = vst [vmem:[%s3 + $0x4] sm:$0xf] %v481
    %514 = vst [vmem:[%s3 + $0x8] sm:$0xf] %v482
    %515 = vst [vmem:[%s3 + $0xc] sm:$0xf] %v483
    %516 = vst [vmem:[%s3 + $0x10] sm:$0xf] %v484
    %517 = vst [vmem:[%s3 + $0x14] sm:$0xf] %v485
    %518 = vst [vmem:[%s3 + $0x18] sm:$0xf] %v486
    %519 = vst [vmem:[%s3 + $0x1c] sm:$0xf] %v487
    %520 = vst [vmem:[%s3 + $0x20] sm:$0xf] %v488
    %521 = vst [vmem:[%s3 + $0x24] sm:$0xf] %v489
    %522 = vst [vmem:[%s3 + $0x28] sm:$0xf] %v490
    %523 = vst [vmem:[%s3 + $0x2c] sm:$0xf] %v491
    %524 = vst [vmem:[%s3 + $0x30] sm:$0xf] %v492
    %525 = vst [vmem:[%s3 + $0x34] sm:$0xf] %v493
    %526 = vst [vmem:[%s3 + $0x38] sm:$0xf] %v494
    %527 = vst [vmem:[%s3 + $0x3c] sm:$0xf] %v495
    %v528 = vadd.f32 %v432, %v433
    %v529 = vadd.f32 %v528, %v434
    %v530 = vadd.f32 %v529, %v435
    %v531 = vadd.f32 %v530, %v436
    %v532 = vadd.f32 %v531, %v437
    %v533 = vadd.f32 %v532, %v438
    %v534 = vadd.f32 %v533, %v439
    %v535 = vadd.f32 %v534, %v440
    %v536 = vadd.f32 %v535, %v441
    %v537 = vadd.f32 %v536, %v442
    %v538 = vadd.f32 %v537, %v443
    %v539 = vadd.f32 %v538, %v444
    %v540 = vadd.f32 %v539, %v445
    %v541 = vadd.f32 %v540, %v446
    %v542 = vadd.f32 %v541, %v447
    %v543 = vrot.slane %v542, 4
    %v544 = vadd.f32 %v542, %v543
    %v545 = vrot.slane %v544, 2
    %v546 = vadd.f32 %v544, %v545
    %v547 = vrot.slane %v546, 1
    %v548 = vadd.f32 %v546, %v547
    %v549 = vmul.f32 %v432, %v432
    %v550 = vmul.f32 %v433, %v433
    %v551 = vmul.f32 %v434, %v434
    %v552 = vmul.f32 %v435, %v435
    %v553 = vmul.f32 %v436, %v436
    %v554 = vmul.f32 %v437, %v437
    %v555 = vmul.f32 %v438, %v438
    %v556 = vmul.f32 %v439, %v439
    %v557 = vmul.f32 %v440, %v440
    %v558 = vmul.f32 %v441, %v441
    %v559 = vmul.f32 %v442, %v442
    %v560 = vmul.f32 %v443, %v443
    %v561 = vmul.f32 %v444, %v444
    %v562 = vmul.f32 %v445, %v445
    %v563 = vmul.f32 %v446, %v446
    %v564 = vmul.f32 %v447, %v447
    %v565 = vadd.f32 %v549, %v550
    %v566 = vadd.f32 %v565, %v551
    %v567 = vadd.f32 %v566, %v552
    %v568 = vadd.f32 %v567, %v553
    %v569 = vadd.f32 %v568, %v554
    %v570 = vadd.f32 %v569, %v555
    %v571 = vadd.f32 %v570, %v556
    %v572 = vadd.f32 %v571, %v557
    %v573 = vadd.f32 %v572, %v558
    %v574 = vadd.f32 %v573, %v559
    %v575 = vadd.f32 %v574, %v560
    %v576 = vadd.f32 %v575, %v561
    %v577 = vadd.f32 %v576, %v562
    %v578 = vadd.f32 %v577, %v563
    %v579 = vadd.f32 %v578, %v564
    %v580 = vrot.slane %v579, 4
    %v581 = vadd.f32 %v579, %v580
    %v582 = vrot.slane %v581, 2
    %v583 = vadd.f32 %v581, %v582
    %v584 = vrot.slane %v583, 1
    %v585 = vadd.f32 %v583, %v584
    %v586 = vlaneseq
    %v587 = vshrl.u32 %v586, 7
    %vm588 = vcmp.eq.s32.totalorder %v587, 0
    %vm589 = vcmp.eq.s32.totalorder %v587, 1
    %v590 = vsel %vm589, %v585, 0.0
    %v591 = vsel %vm588, %v548, %v590
    %592 = vst [vmem:[%s4] sm:$0xff] %v591
  $region21: #{_lambda_.12} parent=0 // pred_fallthru
    _
  // Predicated region
  $region22: #{_lambda_.12} parent=0 // pred_check
    _
  $region23: #{_lambda_.12} parent=0 // pred_check_branch
    %594 = sbr.rel (0) target = $region25
  $region24: #{_lambda_.12} parent=0 // pred_region
    _
  $region25: #{_lambda_.12} parent=0 // pred_fallthru
    _
  // Predicated region
  $region26: #{_lambda_.12} parent=0 // pred_check
    _
  $region27: #{_lambda_.12} parent=0 // pred_check_branch
    %596 = sbr.rel (0) target = $region29
  $region28: #{_lambda_.12} parent=0 // pred_region
    _
  $region29: #{_lambda_.12} parent=0 // pred_fallthru
    _
  // Predicated region
  $region30: #{_lambda_.12} parent=0 // pred_check
    _
  $region31: #{_lambda_.12} parent=0 // pred_check_branch
    %598 = sbr.rel (0) target = $region33
  $region32: #{_lambda_.12} parent=0 // pred_region
    _
  $region33: #{_lambda_.12} parent=0 // pred_fallthru
    _
  // Predicated region
  $region34: #{_lambda_.12} parent=0 // pred_check
    _
  $region35: #{_lambda_.12} parent=0 // pred_check_branch
    %600 = sbr.rel (0) target = $region37
  $region36: #{_lambda_.12} parent=0 // pred_region
    _
  $region37: #{_lambda_.12} parent=0 // pred_fallthru
    _

// kernel: _lambda_.13
$region0: #{_lambda_.13}
  #allocation0 [shape = 'u32[]', space=smem, size = 0x4, offset = 0x4, fixed_abs, tag = 'smem constant byte address 0x4 - core index']
  #allocation1 [shape = 'u32[144,128]{1,0:T(1,128)}', space=vmem, size = 0x12000, scoped, tag = 'internal scratch']
  %s0 = inlined_call_operand.vmem [shape: f32[8,128], index: 0, kind: input, shape index: {}]
  %s1 = inlined_call_operand.vmem [shape: f32[1,128], index: 1, kind: output, shape index: {0}]
  %s2 = inlined_call_operand.vmem [shape: f32[1,128], index: 2, kind: output, shape index: {1}]
  %3 = xla_tuple %s1, %s2
  %s4 = sld [smem:[#allocation0]]
  $region22: #{_lambda_.13} parent=0
    _
  %s6 = ssub.s32 1, %s4
  %s7 = scalar_select 0, %s6, %s4
  // Predicated region
  $region2: #{_lambda_.13} parent=0 // pred_check
    _
  $region3: #{_lambda_.13} parent=0 // pred_check_branch
    %9 = sbr.rel (0) target = $region5
  $region4: #{_lambda_.13} parent=0 // pred_region
    _
  $region5: #{_lambda_.13} parent=0 // pred_fallthru
    _
  %v10 = vld [vmem:[%s0] sm:$0xff]
  %v11 = vlaneseq
  %v12 = vshrl.u32 %v11, 7
  %vm13 = vcmp.lt.s32.totalorder %v12, 0
  %v14 = vsub.s32 0, %v12
  %v15 = vsel %vm13, %v14, %v12
  %v16 = vshrl.u32 %v15, 3
  %v17 = vand.u32 %v15, 7
  %v18 = vsub.s32 0, %v17
  %v19 = vsel %vm13, %v18, %v17
  %vm20 = vcmp.ne.s32.totalorder %v19, 0
  %vm21 = vcmp.lt.s32.totalorder %v19, 0
  %vm22 = vmand %vm21, %vm20
  %v23 = vadd.s32 %v19, 8
  %v24 = vsel %vm22, %v23, %v19
  %vm25 = vcmp.eq.s32.totalorder %v24, 0
  %v26 = vsel %vm25, %v10, 0.0
  %v27 = vrot.slane %v26, 4
  %v28 = vadd.f32 %v26, %v27
  %v29 = vrot.slane %v28, 2
  %v30 = vadd.f32 %v28, %v29
  %v31 = vrot.slane %v30, 1
  %v32 = vadd.f32 %v30, %v31
  %vm33 = vcmp.eq.s32.totalorder %v24, 1
  %v34 = vsel %vm33, %v10, 0.0
  %v35 = vrot.slane %v34, 4
  %v36 = vadd.f32 %v34, %v35
  %v37 = vrot.slane %v36, 2
  %v38 = vadd.f32 %v36, %v37
  %v39 = vrot.slane %v38, 1
  %v40 = vadd.f32 %v38, %v39
  %v41 = vmul.f32 %v32, 0.0078125
  %v42 = vmul.f32 %v40, 0.0078125
  %v43 = vmul.f32 %v41, %v41
  %v44 = vsub.f32 %v42, %v43
  %v45 = vmax.f32 %v44, 0.0
  %v46 = vadd.f32 %v45, 1e-05
  %v47 = vrsqrt.pop %v46
  %48 = vst [vmem:[%s1] sm:$0x1] %v47
  %v49 = vsub.f32 0.0, %v41
  %v50 = vmul.f32 %v49, %v47
  %51 = vst [vmem:[%s2] sm:$0x1] %v50
  // Predicated region
  $region6: #{_lambda_.13} parent=0 // pred_check
    _
  $region7: #{_lambda_.13} parent=0 // pred_check_branch
    %53 = sbr.rel (0) target = $region9
  $region8: #{_lambda_.13} parent=0 // pred_region
    _
  $region9: #{_lambda_.13} parent=0 // pred_fallthru
    _
  // Predicated region
  $region10: #{_lambda_.13} parent=0 // pred_check
    _
  $region11: #{_lambda_.13} parent=0 // pred_check_branch
    %55 = sbr.rel (0) target = $region13
  $region12: #{_lambda_.13} parent=0 // pred_region
    _
  $region13: #{_lambda_.13} parent=0 // pred_fallthru
    _
  // Predicated region
  $region14: #{_lambda_.13} parent=0 // pred_check
    _
  $region15: #{_lambda_.13} parent=0 // pred_check_branch
    %57 = sbr.rel (0) target = $region17
  $region16: #{_lambda_.13} parent=0 // pred_region
    _
  $region17: #{_lambda_.13} parent=0 // pred_fallthru
    _
  // Predicated region
  $region18: #{_lambda_.13} parent=0 // pred_check
    _
  $region19: #{_lambda_.13} parent=0 // pred_check_branch
    %59 = sbr.rel (0) target = $region21
  $region20: #{_lambda_.13} parent=0 // pred_region
    _
  $region21: #{_lambda_.13} parent=0 // pred_fallthru
    _

// kernel: _lambda_.14
$region0: #{_lambda_.14}
  #allocation0 [shape = 'u32[]', space=smem, size = 0x4, offset = 0x4, fixed_abs, tag = 'smem constant byte address 0x4 - core index']
  #allocation1 [shape = 'u32[144,128]{1,0:T(1,128)}', space=vmem, size = 0x12000, scoped, tag = 'internal scratch']
  %s0 = inlined_call_operand.vmem [shape: bf16[128,128], index: 0, kind: input, shape index: {}]
  %s1 = inlined_call_operand.vmem [shape: f32[1,128], index: 1, kind: input, shape index: {}]
  %s2 = inlined_call_operand.vmem [shape: f32[1,128], index: 2, kind: input, shape index: {}]
  %s3 = inlined_call_operand.vmem [shape: bf16[128,128], index: 3, kind: output, shape index: {}]
  %s4 = sld [smem:[#allocation0]]
  $region22: #{_lambda_.14} parent=0
    _
  %s6 = ssub.s32 1, %s4
  %s7 = scalar_select 0, %s6, %s4
  // Predicated region
  $region2: #{_lambda_.14} parent=0 // pred_check
    _
  $region3: #{_lambda_.14} parent=0 // pred_check_branch
    %9 = sbr.rel (0) target = $region5
  $region4: #{_lambda_.14} parent=0 // pred_region
    _
  $region5: #{_lambda_.14} parent=0 // pred_fallthru
    _
  // Predicated region
  $region6: #{_lambda_.14} parent=0 // pred_check
    _
  $region7: #{_lambda_.14} parent=0 // pred_check_branch
    %11 = sbr.rel (0) target = $region9
  $region8: #{_lambda_.14} parent=0 // pred_region
    _
  $region9: #{_lambda_.14} parent=0 // pred_fallthru
    _
  // Predicated region
  $region10: #{_lambda_.14} parent=0 // pred_check
    _
  $region11: #{_lambda_.14} parent=0 // pred_check_branch
    %13 = sbr.rel (0) target = $region13
  $region12: #{_lambda_.14} parent=0 // pred_region
    _
  $region13: #{_lambda_.14} parent=0 // pred_fallthru
    _
  %v14 = vld [vmem:[%s0] sm:$0xf]
  %v15 = vld [vmem:[%s0 + $0x4] sm:$0xf]
  %v16 = vld [vmem:[%s0 + $0x8] sm:$0xf]
  %v17 = vld [vmem:[%s0 + $0xc] sm:$0xf]
  %v18 = vld [vmem:[%s0 + $0x10] sm:$0xf]
  %v19 = vld [vmem:[%s0 + $0x14] sm:$0xf]
  %v20 = vld [vmem:[%s0 + $0x18] sm:$0xf]
  %v21 = vld [vmem:[%s0 + $0x1c] sm:$0xf]
  %v22 = vld [vmem:[%s0 + $0x20] sm:$0xf]
  %v23 = vld [vmem:[%s0 + $0x24] sm:$0xf]
  %v24 = vld [vmem:[%s0 + $0x28] sm:$0xf]
  %v25 = vld [vmem:[%s0 + $0x2c] sm:$0xf]
  %v26 = vld [vmem:[%s0 + $0x30] sm:$0xf]
  %v27 = vld [vmem:[%s0 + $0x34] sm:$0xf]
  %v28 = vld [vmem:[%s0 + $0x38] sm:$0xf]
  %v29 = vld [vmem:[%s0 + $0x3c] sm:$0xf]
  %v30 = vunpack.c.l.bf16 %v14
  %v31 = vunpack.c.l.bf16 %v15
  %v32 = vunpack.c.l.bf16 %v16
  %v33 = vunpack.c.l.bf16 %v17
  %v34 = vunpack.c.l.bf16 %v18
  %v35 = vunpack.c.l.bf16 %v19
  %v36 = vunpack.c.l.bf16 %v20
  %v37 = vunpack.c.l.bf16 %v21
  %v38 = vunpack.c.l.bf16 %v22
  %v39 = vunpack.c.l.bf16 %v23
  %v40 = vunpack.c.l.bf16 %v24
  %v41 = vunpack.c.l.bf16 %v25
  %v42 = vunpack.c.l.bf16 %v26
  %v43 = vunpack.c.l.bf16 %v27
  %v44 = vunpack.c.l.bf16 %v28
  %v45 = vunpack.c.l.bf16 %v29
  %v46 = vld [vmem:[%s1] sm:$0x1]
  %v48 = vlaneseq
  %v49 = vshrl.u32 %v48, 7
  %v50 = vsub.s32 0, %v49
  %v51 = vrot.slane %v46, %v50
  %v53 = vmul.f32 %v30, %v51
  %v54 = vmul.f32 %v31, %v51
  %v55 = vmul.f32 %v32, %v51
  %v56 = vmul.f32 %v33, %v51
  %v57 = vmul.f32 %v34, %v51
  %v58 = vmul.f32 %v35, %v51
  %v59 = vmul.f32 %v36, %v51
  %v60 = vmul.f32 %v37, %v51
  %v61 = vmul.f32 %v38, %v51
  %v62 = vmul.f32 %v39, %v51
  %v63 = vmul.f32 %v40, %v51
  %v64 = vmul.f32 %v41, %v51
  %v65 = vmul.f32 %v42, %v51
  %v66 = vmul.f32 %v43, %v51
  %v67 = vmul.f32 %v44, %v51
  %v68 = vmul.f32 %v45, %v51
  %v69 = vld [vmem:[%s2] sm:$0x1]
  %v71 = vlaneseq
  %v72 = vshrl.u32 %v71, 7
  %v73 = vsub.s32 0, %v72
  %v74 = vrot.slane %v69, %v73
  %v76 = vadd.f32 %v53, %v74
  %v77 = vadd.f32 %v54, %v74
  %v78 = vadd.f32 %v55, %v74
  %v79 = vadd.f32 %v56, %v74
  %v80 = vadd.f32 %v57, %v74
  %v81 = vadd.f32 %v58, %v74
  %v82 = vadd.f32 %v59, %v74
  %v83 = vadd.f32 %v60, %v74
  %v84 = vadd.f32 %v61, %v74
  %v85 = vadd.f32 %v62, %v74
  %v86 = vadd.f32 %v63, %v74
  %v87 = vadd.f32 %v64, %v74
  %v88 = vadd.f32 %v65, %v74
  %v89 = vadd.f32 %v66, %v74
  %v90 = vadd.f32 %v67, %v74
  %v91 = vadd.f32 %v68, %v74
  %vm92 = vcmp.ge.f32.partialorder %v76, 0.0
  %vm93 = vcmp.ge.f32.partialorder %v77, 0.0
  %vm94 = vcmp.ge.f32.partialorder %v78, 0.0
  %vm95 = vcmp.ge.f32.partialorder %v79, 0.0
  %vm96 = vcmp.ge.f32.partialorder %v80, 0.0
  %vm97 = vcmp.ge.f32.partialorder %v81, 0.0
  %vm98 = vcmp.ge.f32.partialorder %v82, 0.0
  %vm99 = vcmp.ge.f32.partialorder %v83, 0.0
  %vm100 = vcmp.ge.f32.partialorder %v84, 0.0
  %vm101 = vcmp.ge.f32.partialorder %v85, 0.0
  %vm102 = vcmp.ge.f32.partialorder %v86, 0.0
  %vm103 = vcmp.ge.f32.partialorder %v87, 0.0
  %vm104 = vcmp.ge.f32.partialorder %v88, 0.0
  %vm105 = vcmp.ge.f32.partialorder %v89, 0.0
  %vm106 = vcmp.ge.f32.partialorder %v90, 0.0
  %vm107 = vcmp.ge.f32.partialorder %v91, 0.0
  %v108 = vmul.f32 %v76, 0.2
  %v109 = vmul.f32 %v77, 0.2
  %v110 = vmul.f32 %v78, 0.2
  %v111 = vmul.f32 %v79, 0.2
  %v112 = vmul.f32 %v80, 0.2
  %v113 = vmul.f32 %v81, 0.2
  %v114 = vmul.f32 %v82, 0.2
  %v115 = vmul.f32 %v83, 0.2
  %v116 = vmul.f32 %v84, 0.2
  %v117 = vmul.f32 %v85, 0.2
  %v118 = vmul.f32 %v86, 0.2
  %v119 = vmul.f32 %v87, 0.2
  %v120 = vmul.f32 %v88, 0.2
  %v121 = vmul.f32 %v89, 0.2
  %v122 = vmul.f32 %v90, 0.2
  %v123 = vmul.f32 %v91, 0.2
  %v124 = vsel %vm92, %v76, %v108
  %v125 = vsel %vm93, %v77, %v109
  %v126 = vsel %vm94, %v78, %v110
  %v127 = vsel %vm95, %v79, %v111
  %v128 = vsel %vm96, %v80, %v112
  %v129 = vsel %vm97, %v81, %v113
  %v130 = vsel %vm98, %v82, %v114
  %v131 = vsel %vm99, %v83, %v115
  %v132 = vsel %vm100, %v84, %v116
  %v133 = vsel %vm101, %v85, %v117
  %v134 = vsel %vm102, %v86, %v118
  %v135 = vsel %vm103, %v87, %v119
  %v136 = vsel %vm104, %v88, %v120
  %v137 = vsel %vm105, %v89, %v121
  %v138 = vsel %vm106, %v90, %v122
  %v139 = vsel %vm107, %v91, %v123
  %v140 = vpack.c.bf16 %v125, %v124
  %v141 = vpack.c.bf16 %v127, %v126
  %v142 = vpack.c.bf16 %v129, %v128
  %v143 = vpack.c.bf16 %v131, %v130
  %v144 = vpack.c.bf16 %v133, %v132
  %v145 = vpack.c.bf16 %v135, %v134
  %v146 = vpack.c.bf16 %v137, %v136
  %v147 = vpack.c.bf16 %v139, %v138
  %v156 = vunpack.c.l.b16 %v140
  %v157 = vunpack.c.h.b16 %v140
  %v158 = vunpack.c.l.b16 %v141
  %v159 = vunpack.c.h.b16 %v141
  %v160 = vunpack.c.l.b16 %v142
  %v161 = vunpack.c.h.b16 %v142
  %v162 = vunpack.c.l.b16 %v143
  %v163 = vunpack.c.h.b16 %v143
  %v164 = vunpack.c.l.b16 %v144
  %v165 = vunpack.c.h.b16 %v144
  %v166 = vunpack.c.l.b16 %v145
  %v167 = vunpack.c.h.b16 %v145
  %v168 = vunpack.c.l.b16 %v146
  %v169 = vunpack.c.h.b16 %v146
  %v170 = vunpack.c.l.b16 %v147
  %v171 = vunpack.c.h.b16 %v147
  %v172 = vpack.c.b16 %v156, %v156
  %v173 = vpack.c.b16 %v157, %v157
  %v174 = vpack.c.b16 %v158, %v158
  %v175 = vpack.c.b16 %v159, %v159
  %v176 = vpack.c.b16 %v160, %v160
  %v177 = vpack.c.b16 %v161, %v161
  %v178 = vpack.c.b16 %v162, %v162
  %v179 = vpack.c.b16 %v163, %v163
  %v180 = vpack.c.b16 %v164, %v164
  %v181 = vpack.c.b16 %v165, %v165
  %v182 = vpack.c.b16 %v166, %v166
  %v183 = vpack.c.b16 %v167, %v167
  %v184 = vpack.c.b16 %v168, %v168
  %v185 = vpack.c.b16 %v169, %v169
  %v186 = vpack.c.b16 %v170, %v170
  %v187 = vpack.c.b16 %v171, %v171
  %204 = vst [vmem:[%s3] sm:$0xf] %v172
  %205 = vst [vmem:[%s3 + $0x4] sm:$0xf] %v173
  %206 = vst [vmem:[%s3 + $0x8] sm:$0xf] %v174
  %207 = vst [vmem:[%s3 + $0xc] sm:$0xf] %v175
  %208 = vst [vmem:[%s3 + $0x10] sm:$0xf] %v176
  %209 = vst [vmem:[%s3 + $0x14] sm:$0xf] %v177
  %210 = vst [vmem:[%s3 + $0x18] sm:$0xf] %v178
  %211 = vst [vmem:[%s3 + $0x1c] sm:$0xf] %v179
  %212 = vst [vmem:[%s3 + $0x20] sm:$0xf] %v180
  %213 = vst [vmem:[%s3 + $0x24] sm:$0xf] %v181
  %214 = vst [vmem:[%s3 + $0x28] sm:$0xf] %v182
  %215 = vst [vmem:[%s3 + $0x2c] sm:$0xf] %v183
  %216 = vst [vmem:[%s3 + $0x30] sm:$0xf] %v184
  %217 = vst [vmem:[%s3 + $0x34] sm:$0xf] %v185
  %218 = vst [vmem:[%s3 + $0x38] sm:$0xf] %v186
  %219 = vst [vmem:[%s3 + $0x3c] sm:$0xf] %v187
  // Predicated region
  $region14: #{_lambda_.14} parent=0 // pred_check
    _
  $region15: #{_lambda_.14} parent=0 // pred_check_branch
    %221 = sbr.rel (0) target = $region17
  $region16: #{_lambda_.14} parent=0 // pred_region
    _
  $region17: #{_lambda_.14} parent=0 // pred_fallthru
    _
  // Predicated region
  $region18: #{_lambda_.14} parent=0 // pred_check
    _
  $region19: #{_lambda_.14} parent=0 // pred_check_branch
    %223 = sbr.rel (0) target = $region21
  $region20: #{_lambda_.14} parent=0 // pred_region
    _
  $region21: #{_lambda_.14} parent=0 // pred_fallthru
    _

// kernel: _lambda_.16
$region0: #{_lambda_.16}
  #allocation0 [shape = 'u32[]', space=smem, size = 0x4, offset = 0x4, fixed_abs, tag = 'smem constant byte address 0x4 - core index']
  #allocation1 [shape = 'u32[144,128]{1,0:T(1,128)}', space=vmem, size = 0x12000, scoped, tag = 'internal scratch']
  %s0 = inlined_call_operand.vmem [shape: f32[8,128], index: 0, kind: input, shape index: {}]
  %s1 = inlined_call_operand.vmem [shape: f32[1,128], index: 1, kind: output, shape index: {0}]
  %s2 = inlined_call_operand.vmem [shape: f32[1,128], index: 2, kind: output, shape index: {1}]
  %3 = xla_tuple %s1, %s2
  %s4 = sld [smem:[#allocation0]]
  $region22: #{_lambda_.16} parent=0
    _
  %s6 = ssub.s32 1, %s4
  %s7 = scalar_select 0, %s6, %s4
  // Predicated region
  $region2: #{_lambda_.16} parent=0 // pred_check
    _
  $region3: #{_lambda_.16} parent=0 // pred_check_branch
    %9 = sbr.rel (0) target = $region5
  $region4: #{_lambda_.16} parent=0 // pred_region
    _
  $region5: #{_lambda_.16} parent=0 // pred_fallthru
    _
  %v10 = vld [vmem:[%s0] sm:$0xff]
  %v11 = vlaneseq
  %v12 = vshrl.u32 %v11, 7
  %vm13 = vcmp.lt.s32.totalorder %v12, 0
  %v14 = vsub.s32 0, %v12
  %v15 = vsel %vm13, %v14, %v12
  %v16 = vshrl.u32 %v15, 3
  %v17 = vand.u32 %v15, 7
  %v18 = vsub.s32 0, %v17
  %v19 = vsel %vm13, %v18, %v17
  %vm20 = vcmp.ne.s32.totalorder %v19, 0
  %vm21 = vcmp.lt.s32.totalorder %v19, 0
  %vm22 = vmand %vm21, %vm20
  %v23 = vadd.s32 %v19, 8
  %v24 = vsel %vm22, %v23, %v19
  %vm25 = vcmp.eq.s32.totalorder %v24, 0
  %v26 = vsel %vm25, %v10, 0.0
  %v27 = vrot.slane %v26, 4
  %v28 = vadd.f32 %v26, %v27
  %v29 = vrot.slane %v28, 2
  %v30 = vadd.f32 %v28, %v29
  %v31 = vrot.slane %v30, 1
  %v32 = vadd.f32 %v30, %v31
  %vm33 = vcmp.eq.s32.totalorder %v24, 1
  %v34 = vsel %vm33, %v10, 0.0
  %v35 = vrot.slane %v34, 4
  %v36 = vadd.f32 %v34, %v35
  %v37 = vrot.slane %v36, 2
  %v38 = vadd.f32 %v36, %v37
  %v39 = vrot.slane %v38, 1
  %v40 = vadd.f32 %v38, %v39
  %v41 = vmul.f32 %v32, 0.03125
  %v42 = vmul.f32 %v40, 0.03125
  %v43 = vmul.f32 %v41, %v41
  %v44 = vsub.f32 %v42, %v43
  %v45 = vmax.f32 %v44, 0.0
  %v46 = vadd.f32 %v45, 1e-05
  %v47 = vrsqrt.pop %v46
  %48 = vst [vmem:[%s1] sm:$0x1] %v47
  %v49 = vsub.f32 0.0, %v41
  %v50 = vmul.f32 %v49, %v47
  %51 = vst [vmem:[%s2] sm:$0x1] %v50
  // Predicated region
  $region6: #{_lambda_.16} parent=0 // pred_check
    _
  $region7: #{_lambda_.16} parent=0 // pred_check_branch
    %53 = sbr.rel (0) target = $region9
  $region8: #{_lambda_.16} parent=0 // pred_region
    _
  $region9: #{_lambda_.16} parent=0 // pred_fallthru
    _
  // Predicated region
  $region10: #{_lambda_.16} parent=0 // pred_check
    _
  $region11: #{_lambda_.16} parent=0 // pred_check_branch
    %55 = sbr.rel (0) target = $region13
  $region12: #{_lambda_.16} parent=0 // pred_region
    _
  $region13: #{_lambda_.16} parent=0 // pred_fallthru
    _
  // Predicated region
  $region14: #{_lambda_.16} parent=0 // pred_check
    _
  $region15: #{_lambda_.16} parent=0 // pred_check_branch
    %57 = sbr.rel (0) target = $region17
  $region16: #{_lambda_.16} parent=0 // pred_region
    _
  $region17: #{_lambda_.16} parent=0 // pred_fallthru
    _
  // Predicated region
  $region18: #{_lambda_.16} parent=0 // pred_check
    _
  $region19: #{_lambda_.16} parent=0 // pred_check_branch
    %59 = sbr.rel (0) target = $region21
  $region20: #{_lambda_.16} parent=0 // pred_region
    _
  $region21: #{_lambda_.16} parent=0 // pred_fallthru
    _

// kernel: _lambda_.17
$region0: #{_lambda_.17}
  #allocation0 [shape = 'u32[]', space=smem, size = 0x4, offset = 0x4, fixed_abs, tag = 'smem constant byte address 0x4 - core index']
  #allocation1 [shape = 'u32[144,128]{1,0:T(1,128)}', space=vmem, size = 0x12000, scoped, tag = 'internal scratch']
  %s0 = inlined_call_operand.vmem [shape: bf16[32,128], index: 0, kind: input, shape index: {}]
  %s1 = inlined_call_operand.vmem [shape: f32[1,128], index: 1, kind: input, shape index: {}]
  %s2 = inlined_call_operand.vmem [shape: f32[1,128], index: 2, kind: input, shape index: {}]
  %s3 = inlined_call_operand.vmem [shape: bf16[32,128], index: 3, kind: output, shape index: {}]
  %s4 = sld [smem:[#allocation0]]
  $region22: #{_lambda_.17} parent=0
    _
  %s6 = ssub.s32 1, %s4
  %s7 = scalar_select 0, %s6, %s4
  // Predicated region
  $region2: #{_lambda_.17} parent=0 // pred_check
    _
  $region3: #{_lambda_.17} parent=0 // pred_check_branch
    %9 = sbr.rel (0) target = $region5
  $region4: #{_lambda_.17} parent=0 // pred_region
    _
  $region5: #{_lambda_.17} parent=0 // pred_fallthru
    _
  // Predicated region
  $region6: #{_lambda_.17} parent=0 // pred_check
    _
  $region7: #{_lambda_.17} parent=0 // pred_check_branch
    %11 = sbr.rel (0) target = $region9
  $region8: #{_lambda_.17} parent=0 // pred_region
    _
  $region9: #{_lambda_.17} parent=0 // pred_fallthru
    _
  // Predicated region
  $region10: #{_lambda_.17} parent=0 // pred_check
    _
  $region11: #{_lambda_.17} parent=0 // pred_check_branch
    %13 = sbr.rel (0) target = $region13
  $region12: #{_lambda_.17} parent=0 // pred_region
    _
  $region13: #{_lambda_.17} parent=0 // pred_fallthru
    _
  %v14 = vld [vmem:[%s0] sm:$0xf]
  %v15 = vld [vmem:[%s0 + $0x4] sm:$0xf]
  %v16 = vld [vmem:[%s0 + $0x8] sm:$0xf]
  %v17 = vld [vmem:[%s0 + $0xc] sm:$0xf]
  %v18 = vunpack.c.l.bf16 %v14
  %v19 = vunpack.c.l.bf16 %v15
  %v20 = vunpack.c.l.bf16 %v16
  %v21 = vunpack.c.l.bf16 %v17
  %v22 = vld [vmem:[%s1] sm:$0x1]
  %v24 = vlaneseq
  %v25 = vshrl.u32 %v24, 7
  %v26 = vsub.s32 0, %v25
  %v27 = vrot.slane %v22, %v26
  %v29 = vmul.f32 %v18, %v27
  %v30 = vmul.f32 %v19, %v27
  %v31 = vmul.f32 %v20, %v27
  %v32 = vmul.f32 %v21, %v27
  %v33 = vld [vmem:[%s2] sm:$0x1]
  %v35 = vlaneseq
  %v36 = vshrl.u32 %v35, 7
  %v37 = vsub.s32 0, %v36
  %v38 = vrot.slane %v33, %v37
  %v40 = vadd.f32 %v29, %v38
  %v41 = vadd.f32 %v30, %v38
  %v42 = vadd.f32 %v31, %v38
  %v43 = vadd.f32 %v32, %v38
  %vm44 = vcmp.ge.f32.partialorder %v40, 0.0
  %vm45 = vcmp.ge.f32.partialorder %v41, 0.0
  %vm46 = vcmp.ge.f32.partialorder %v42, 0.0
  %vm47 = vcmp.ge.f32.partialorder %v43, 0.0
  %v48 = vmul.f32 %v40, 0.2
  %v49 = vmul.f32 %v41, 0.2
  %v50 = vmul.f32 %v42, 0.2
  %v51 = vmul.f32 %v43, 0.2
  %v52 = vsel %vm44, %v40, %v48
  %v53 = vsel %vm45, %v41, %v49
  %v54 = vsel %vm46, %v42, %v50
  %v55 = vsel %vm47, %v43, %v51
  %v56 = vpack.c.bf16 %v53, %v52
  %v57 = vpack.c.bf16 %v55, %v54
  %v60 = vunpack.c.l.b16 %v56
  %v61 = vunpack.c.h.b16 %v56
  %v62 = vunpack.c.l.b16 %v57
  %v63 = vunpack.c.h.b16 %v57
  %v64 = vpack.c.b16 %v60, %v60
  %v65 = vpack.c.b16 %v61, %v61
  %v66 = vpack.c.b16 %v62, %v62
  %v67 = vpack.c.b16 %v63, %v63
  %72 = vst [vmem:[%s3] sm:$0xf] %v64
  %73 = vst [vmem:[%s3 + $0x4] sm:$0xf] %v65
  %74 = vst [vmem:[%s3 + $0x8] sm:$0xf] %v66
  %75 = vst [vmem:[%s3 + $0xc] sm:$0xf] %v67
  // Predicated region
  $region14: #{_lambda_.17} parent=0 // pred_check
    _
  $region15: #{_lambda_.17} parent=0 // pred_check_branch
    %77 = sbr.rel (0) target = $region17
  $region16: #{_lambda_.17} parent=0 // pred_region
    _
  $region17: #{_lambda_.17} parent=0 // pred_fallthru
    _
  // Predicated region
  $region18: #{_lambda_.17} parent=0 // pred_check
    _
  $region19: #{_lambda_.17} parent=0 // pred_check_branch
    %79 = sbr.rel (0) target = $region21
  $region20: #{_lambda_.17} parent=0 // pred_region
    _
  $region21: #{_lambda_.17} parent=0 // pred_fallthru
    _

// kernel: _lambda_.15
$region0: #{_lambda_.15}
  #allocation0 [shape = 'u32[]', space=smem, size = 0x4, offset = 0x4, fixed_abs, tag = 'smem constant byte address 0x4 - core index']
  #allocation1 [shape = 'u32[144,128]{1,0:T(1,128)}', space=vmem, size = 0x12000, scoped, tag = 'internal scratch']
  #allocation2 [shape = 'f32[32,128]{1,0:T(8,128)}', space=vmem, size = 0x4000, scoped, tag = 'scratch operand']
  %s0 = inlined_call_operand.vmem [shape: bf16[32,512], index: 0, kind: input, shape index: {}]
  %s1 = inlined_call_operand.vmem [shape: bf16[512,128], index: 1, kind: input, shape index: {}]
  %s2 = inlined_call_operand.vmem [shape: f32[1,128], index: 2, kind: input, shape index: {}]
  %s3 = inlined_call_operand.vmem [shape: bf16[32,128], index: 3, kind: output, shape index: {0}]
  %s4 = inlined_call_operand.vmem [shape: f32[8,128], index: 4, kind: output, shape index: {1}]
  %5 = xla_tuple %s3, %s4
  %s6 = sld [smem:[#allocation0]]
  $region38: #{_lambda_.15} parent=0
    _
  %s8 = ssub.s32 1, %s6
  %s9 = scalar_select 0, %s8, %s6
  // Predicated region
  $region2: #{_lambda_.15} parent=0 // pred_check
    _
  $region3: #{_lambda_.15} parent=0 // pred_check_branch
    %11 = sbr.rel (0) target = $region5
  $region4: #{_lambda_.15} parent=0 // pred_region
    _
  $region5: #{_lambda_.15} parent=0 // pred_fallthru
    _
  // Predicated region
  $region6: #{_lambda_.15} parent=0 // pred_check
    _
  $region7: #{_lambda_.15} parent=0 // pred_check_branch
    %13 = sbr.rel (0) target = $region9
  $region8: #{_lambda_.15} parent=0 // pred_region
    _
  $region9: #{_lambda_.15} parent=0 // pred_fallthru
    _
  // Predicated region
  $region10: #{_lambda_.15} parent=0 // pred_check
    _
  $region11: #{_lambda_.15} parent=0 // pred_check_branch
    %15 = sbr.rel (0) target = $region13
  $region12: #{_lambda_.15} parent=0 // pred_region
    _
  $region13: #{_lambda_.15} parent=0 // pred_fallthru
    _
  %p17 = scmp.eq.s32.totalorder 0, 0
  // Predicated region
  $region14: #{_lambda_.15} parent=0 // pred_check
    %p18 = pneg %p17
  $region15: #{_lambda_.15} parent=0 // pred_check_branch
    %20 = sbr.rel (%p18) target = $region17
  $region16: #{_lambda_.15} parent=0 // pred_region
    %21 = vst [vmem:[#allocation2] sm:$0xff] 0.0
    %22 = vst [vmem:[#allocation2 + $0x8] sm:$0xff] 0.0
    %23 = vst [vmem:[#allocation2 + $0x10] sm:$0xff] 0.0
    %24 = vst [vmem:[#allocation2 + $0x18] sm:$0xff] 0.0
  $region17: #{_lambda_.15} parent=0 // pred_fallthru
    _
  %v25 = vld [vmem:[#allocation2] sm:$0xff]
  %v26 = vld [vmem:[#allocation2 + $0x8] sm:$0xff]
  %v27 = vld [vmem:[#allocation2 + $0x10] sm:$0xff]
  %v28 = vld [vmem:[#allocation2 + $0x18] sm:$0xff]
  %v29 = vld [vmem:[%s0] sm:$0xff]
  %v30 = vld [vmem:[%s0 + $0x8] sm:$0xff]
  %v31 = vld [vmem:[%s0 + $0x10] sm:$0xff]
  %v32 = vld [vmem:[%s0 + $0x18] sm:$0xff]
  %v33 = vld [vmem:[%s0 + $0x20] sm:$0xff]
  %v34 = vld [vmem:[%s0 + $0x28] sm:$0xff]
  %v35 = vld [vmem:[%s0 + $0x30] sm:$0xff]
  %v36 = vld [vmem:[%s0 + $0x38] sm:$0xff]
  %v37 = vld [vmem:[%s1] sm:$0xf]
  %v38 = vld [vmem:[%s1 + $0x4] sm:$0xf]
  %v39 = vld [vmem:[%s1 + $0x8] sm:$0xf]
  %v40 = vld [vmem:[%s1 + $0xc] sm:$0xf]
  %v41 = vld [vmem:[%s1 + $0x10] sm:$0xf]
  %v42 = vld [vmem:[%s1 + $0x14] sm:$0xf]
  %v43 = vld [vmem:[%s1 + $0x18] sm:$0xf]
  %v44 = vld [vmem:[%s1 + $0x1c] sm:$0xf]
  %v45 = vld [vmem:[%s1 + $0x20] sm:$0xf]
  %v46 = vld [vmem:[%s1 + $0x24] sm:$0xf]
  %v47 = vld [vmem:[%s1 + $0x28] sm:$0xf]
  %v48 = vld [vmem:[%s1 + $0x2c] sm:$0xf]
  %v49 = vld [vmem:[%s1 + $0x30] sm:$0xf]
  %v50 = vld [vmem:[%s1 + $0x34] sm:$0xf]
  %v51 = vld [vmem:[%s1 + $0x38] sm:$0xf]
  %v52 = vld [vmem:[%s1 + $0x3c] sm:$0xf]
  %v53 = vld [vmem:[%s1 + $0x40] sm:$0xf]
  %v54 = vld [vmem:[%s1 + $0x44] sm:$0xf]
  %v55 = vld [vmem:[%s1 + $0x48] sm:$0xf]
  %v56 = vld [vmem:[%s1 + $0x4c] sm:$0xf]
  %v57 = vld [vmem:[%s1 + $0x50] sm:$0xf]
  %v58 = vld [vmem:[%s1 + $0x54] sm:$0xf]
  %v59 = vld [vmem:[%s1 + $0x58] sm:$0xf]
  %v60 = vld [vmem:[%s1 + $0x5c] sm:$0xf]
  %v61 = vld [vmem:[%s1 + $0x60] sm:$0xf]
  %v62 = vld [vmem:[%s1 + $0x64] sm:$0xf]
  %v63 = vld [vmem:[%s1 + $0x68] sm:$0xf]
  %v64 = vld [vmem:[%s1 + $0x6c] sm:$0xf]
  %v65 = vld [vmem:[%s1 + $0x70] sm:$0xf]
  %v66 = vld [vmem:[%s1 + $0x74] sm:$0xf]
  %v67 = vld [vmem:[%s1 + $0x78] sm:$0xf]
  %v68 = vld [vmem:[%s1 + $0x7c] sm:$0xf]
  %v69 = vld [vmem:[%s1 + $0x80] sm:$0xf]
  %v70 = vld [vmem:[%s1 + $0x84] sm:$0xf]
  %v71 = vld [vmem:[%s1 + $0x88] sm:$0xf]
  %v72 = vld [vmem:[%s1 + $0x8c] sm:$0xf]
  %v73 = vld [vmem:[%s1 + $0x90] sm:$0xf]
  %v74 = vld [vmem:[%s1 + $0x94] sm:$0xf]
  %v75 = vld [vmem:[%s1 + $0x98] sm:$0xf]
  %v76 = vld [vmem:[%s1 + $0x9c] sm:$0xf]
  %v77 = vld [vmem:[%s1 + $0xa0] sm:$0xf]
  %v78 = vld [vmem:[%s1 + $0xa4] sm:$0xf]
  %v79 = vld [vmem:[%s1 + $0xa8] sm:$0xf]
  %v80 = vld [vmem:[%s1 + $0xac] sm:$0xf]
  %v81 = vld [vmem:[%s1 + $0xb0] sm:$0xf]
  %v82 = vld [vmem:[%s1 + $0xb4] sm:$0xf]
  %v83 = vld [vmem:[%s1 + $0xb8] sm:$0xf]
  %v84 = vld [vmem:[%s1 + $0xbc] sm:$0xf]
  %v85 = vld [vmem:[%s1 + $0xc0] sm:$0xf]
  %v86 = vld [vmem:[%s1 + $0xc4] sm:$0xf]
  %v87 = vld [vmem:[%s1 + $0xc8] sm:$0xf]
  %v88 = vld [vmem:[%s1 + $0xcc] sm:$0xf]
  %v89 = vld [vmem:[%s1 + $0xd0] sm:$0xf]
  %v90 = vld [vmem:[%s1 + $0xd4] sm:$0xf]
  %v91 = vld [vmem:[%s1 + $0xd8] sm:$0xf]
  %v92 = vld [vmem:[%s1 + $0xdc] sm:$0xf]
  %v93 = vld [vmem:[%s1 + $0xe0] sm:$0xf]
  %v94 = vld [vmem:[%s1 + $0xe4] sm:$0xf]
  %v95 = vld [vmem:[%s1 + $0xe8] sm:$0xf]
  %v96 = vld [vmem:[%s1 + $0xec] sm:$0xf]
  %v97 = vld [vmem:[%s1 + $0xf0] sm:$0xf]
  %v98 = vld [vmem:[%s1 + $0xf4] sm:$0xf]
  %v99 = vld [vmem:[%s1 + $0xf8] sm:$0xf]
  %v100 = vld [vmem:[%s1 + $0xfc] sm:$0xf]
  %v109 = vunpack.c.l.b16 %v29
  %v110 = vunpack.c.h.b16 %v29
  %v111 = vunpack.c.l.b16 %v30
  %v112 = vunpack.c.h.b16 %v30
  %v113 = vunpack.c.l.b16 %v31
  %v114 = vunpack.c.h.b16 %v31
  %v115 = vunpack.c.l.b16 %v32
  %v116 = vunpack.c.h.b16 %v32
  %v117 = vunpack.c.l.b16 %v33
  %v118 = vunpack.c.h.b16 %v33
  %v119 = vunpack.c.l.b16 %v34
  %v120 = vunpack.c.h.b16 %v34
  %v121 = vunpack.c.l.b16 %v35
  %v122 = vunpack.c.h.b16 %v35
  %v123 = vunpack.c.l.b16 %v36
  %v124 = vunpack.c.h.b16 %v36
  %v125 = vpack.c.b16 %v113, %v109
  %v126 = vpack.c.b16 %v114, %v110
  %v127 = vpack.c.b16 %v115, %v111
  %v128 = vpack.c.b16 %v116, %v112
  %v129 = vpack.c.b16 %v121, %v117
  %v130 = vpack.c.b16 %v122, %v118
  %v131 = vpack.c.b16 %v123, %v119
  %v132 = vpack.c.b16 %v124, %v120
  %v205 = vunpack.c.l.b16 %v37
  %v206 = vunpack.c.l.b16 %v38
  %v207 = vunpack.c.l.b16 %v39
  %v208 = vunpack.c.l.b16 %v40
  %v209 = vunpack.c.l.b16 %v41
  %v210 = vunpack.c.l.b16 %v42
  %v211 = vunpack.c.l.b16 %v43
  %v212 = vunpack.c.l.b16 %v44
  %v213 = vunpack.c.l.b16 %v45
  %v214 = vunpack.c.l.b16 %v46
  %v215 = vunpack.c.l.b16 %v47
  %v216 = vunpack.c.l.b16 %v48
  %v217 = vunpack.c.l.b16 %v49
  %v218 = vunpack.c.l.b16 %v50
  %v219 = vunpack.c.l.b16 %v51
  %v220 = vunpack.c.l.b16 %v52
  %v221 = vunpack.c.l.b16 %v53
  %v222 = vunpack.c.l.b16 %v54
  %v223 = vunpack.c.l.b16 %v55
  %v224 = vunpack.c.l.b16 %v56
  %v225 = vunpack.c.l.b16 %v57
  %v226 = vunpack.c.l.b16 %v58
  %v227 = vunpack.c.l.b16 %v59
  %v228 = vunpack.c.l.b16 %v60
  %v229 = vunpack.c.l.b16 %v61
  %v230 = vunpack.c.l.b16 %v62
  %v231 = vunpack.c.l.b16 %v63
  %v232 = vunpack.c.l.b16 %v64
  %v233 = vunpack.c.l.b16 %v65
  %v234 = vunpack.c.l.b16 %v66
  %v235 = vunpack.c.l.b16 %v67
  %v236 = vunpack.c.l.b16 %v68
  %v237 = vunpack.c.l.b16 %v69
  %v238 = vunpack.c.l.b16 %v70
  %v239 = vunpack.c.l.b16 %v71
  %v240 = vunpack.c.l.b16 %v72
  %v241 = vunpack.c.l.b16 %v73
  %v242 = vunpack.c.l.b16 %v74
  %v243 = vunpack.c.l.b16 %v75
  %v244 = vunpack.c.l.b16 %v76
  %v245 = vunpack.c.l.b16 %v77
  %v246 = vunpack.c.l.b16 %v78
  %v247 = vunpack.c.l.b16 %v79
  %v248 = vunpack.c.l.b16 %v80
  %v249 = vunpack.c.l.b16 %v81
  %v250 = vunpack.c.l.b16 %v82
  %v251 = vunpack.c.l.b16 %v83
  %v252 = vunpack.c.l.b16 %v84
  %v253 = vunpack.c.l.b16 %v85
  %v254 = vunpack.c.l.b16 %v86
  %v255 = vunpack.c.l.b16 %v87
  %v256 = vunpack.c.l.b16 %v88
  %v257 = vunpack.c.l.b16 %v89
  %v258 = vunpack.c.l.b16 %v90
  %v259 = vunpack.c.l.b16 %v91
  %v260 = vunpack.c.l.b16 %v92
  %v261 = vunpack.c.l.b16 %v93
  %v262 = vunpack.c.l.b16 %v94
  %v263 = vunpack.c.l.b16 %v95
  %v264 = vunpack.c.l.b16 %v96
  %v265 = vunpack.c.l.b16 %v97
  %v266 = vunpack.c.l.b16 %v98
  %v267 = vunpack.c.l.b16 %v99
  %v268 = vunpack.c.l.b16 %v100
  %v269 = vpack.c.b16 %v206, %v205
  %v270 = vpack.c.b16 %v208, %v207
  %v271 = vpack.c.b16 %v210, %v209
  %v272 = vpack.c.b16 %v212, %v211
  %v273 = vpack.c.b16 %v214, %v213
  %v274 = vpack.c.b16 %v216, %v215
  %v275 = vpack.c.b16 %v218, %v217
  %v276 = vpack.c.b16 %v220, %v219
  %v277 = vpack.c.b16 %v222, %v221
  %v278 = vpack.c.b16 %v224, %v223
  %v279 = vpack.c.b16 %v226, %v225
  %v280 = vpack.c.b16 %v228, %v227
  %v281 = vpack.c.b16 %v230, %v229
  %v282 = vpack.c.b16 %v232, %v231
  %v283 = vpack.c.b16 %v234, %v233
  %v284 = vpack.c.b16 %v236, %v235
  %v285 = vpack.c.b16 %v238, %v237
  %v286 = vpack.c.b16 %v240, %v239
  %v287 = vpack.c.b16 %v242, %v241
  %v288 = vpack.c.b16 %v244, %v243
  %v289 = vpack.c.b16 %v246, %v245
  %v290 = vpack.c.b16 %v248, %v247
  %v291 = vpack.c.b16 %v250, %v249
  %v292 = vpack.c.b16 %v252, %v251
  %v293 = vpack.c.b16 %v254, %v253
  %v294 = vpack.c.b16 %v256, %v255
  %v295 = vpack.c.b16 %v258, %v257
  %v296 = vpack.c.b16 %v260, %v259
  %v297 = vpack.c.b16 %v262, %v261
  %v298 = vpack.c.b16 %v264, %v263
  %v299 = vpack.c.b16 %v266, %v265
  %v300 = vpack.c.b16 %v268, %v267
  %333 = vmatprep.subr.bf16.mxu0 0
  %334 = vmatpush1.bf16.msra.mxu0 %v269
  %335 = vmatprep.subr.bf16.mxu0 0
  %336 = vmatpush1.bf16.msra.mxu0 %v270
  %337 = vmatprep.subr.bf16.mxu0 0
  %338 = vmatpush1.bf16.msra.mxu0 %v271
  %339 = vmatprep.subr.bf16.mxu0 0
  %340 = vmatpush1.bf16.msra.mxu0 %v272
  %341 = vmatprep.subr.bf16.mxu0 0
  %342 = vmatpush1.bf16.msra.mxu0 %v273
  %343 = vmatprep.subr.bf16.mxu0 0
  %344 = vmatpush1.bf16.msra.mxu0 %v274
  %345 = vmatprep.subr.bf16.mxu0 0
  %346 = vmatpush1.bf16.msra.mxu0 %v275
  %347 = vmatprep.subr.bf16.mxu0 0
  %348 = vmatpush1.bf16.msra.mxu0 %v276
  %349 = vmatprep.subr.bf16.mxu0 0
  %350 = vmatpush1.bf16.msra.mxu0 %v277
  %351 = vmatprep.subr.bf16.mxu0 0
  %352 = vmatpush1.bf16.msra.mxu0 %v278
  %353 = vmatprep.subr.bf16.mxu0 0
  %354 = vmatpush1.bf16.msra.mxu0 %v279
  %355 = vmatprep.subr.bf16.mxu0 0
  %356 = vmatpush1.bf16.msra.mxu0 %v280
  %357 = vmatprep.subr.bf16.mxu0 0
  %358 = vmatpush1.bf16.msra.mxu0 %v281
  %359 = vmatprep.subr.bf16.mxu0 0
  %360 = vmatpush1.bf16.msra.mxu0 %v282
  %361 = vmatprep.subr.bf16.mxu0 0
  %362 = vmatpush1.bf16.msra.mxu0 %v283
  %363 = vmatprep.subr.bf16.mxu0 0
  %364 = vmatpush1.bf16.msra.mxu0 %v284
  %365 = vmatprep.mubr.bf16.mxu0 %v126
  %366 = vmatmul.mubr.bf16.gmra.mrb[0].mxu0 %v125
  %v367 = vpop.f32.mrb[0].mxu0
  %v368 = vadd.f32 0.0, %v367
  %v369 = vpop.f32.mrb[0].mxu0
  %v370 = vpop.f32.mrb[0].mxu0
  %v371 = vadd.f32 0.0, %v370
  %v372 = vpop.f32.mrb[0].mxu0
  %373 = vmatprep.mubr.bf16.mxu0 %v130
  %374 = vmatmul.mubr.bf16.gmra.mrb[0].mxu0 %v129
  %v375 = vpop.f32.mrb[0].mxu0
  %v376 = vadd.f32 0.0, %v375
  %v377 = vpop.f32.mrb[0].mxu0
  %v378 = vpop.f32.mrb[0].mxu0
  %v379 = vadd.f32 0.0, %v378
  %v380 = vpop.f32.mrb[0].mxu0
  %381 = vdwg.mxu0
  %382 = vmatprep.subr.bf16.mxu0 0
  %383 = vmatpush1.bf16.msra.mxu0 %v285
  %384 = vmatprep.subr.bf16.mxu0 0
  %385 = vmatpush1.bf16.msra.mxu0 %v286
  %386 = vmatprep.subr.bf16.mxu0 0
  %387 = vmatpush1.bf16.msra.mxu0 %v287
  %388 = vmatprep.subr.bf16.mxu0 0
  %389 = vmatpush1.bf16.msra.mxu0 %v288
  %390 = vmatprep.subr.bf16.mxu0 0
  %391 = vmatpush1.bf16.msra.mxu0 %v289
  %392 = vmatprep.subr.bf16.mxu0 0
  %393 = vmatpush1.bf16.msra.mxu0 %v290
  %394 = vmatprep.subr.bf16.mxu0 0
  %395 = vmatpush1.bf16.msra.mxu0 %v291
  %396 = vmatprep.subr.bf16.mxu0 0
  %397 = vmatpush1.bf16.msra.mxu0 %v292
  %398 = vmatprep.subr.bf16.mxu0 0
  %399 = vmatpush1.bf16.msra.mxu0 %v293
  %400 = vmatprep.subr.bf16.mxu0 0
  %401 = vmatpush1.bf16.msra.mxu0 %v294
  %402 = vmatprep.subr.bf16.mxu0 0
  %403 = vmatpush1.bf16.msra.mxu0 %v295
  %404 = vmatprep.subr.bf16.mxu0 0
  %405 = vmatpush1.bf16.msra.mxu0 %v296
  %406 = vmatprep.subr.bf16.mxu0 0
  %407 = vmatpush1.bf16.msra.mxu0 %v297
  %408 = vmatprep.subr.bf16.mxu0 0
  %409 = vmatpush1.bf16.msra.mxu0 %v298
  %410 = vmatprep.subr.bf16.mxu0 0
  %411 = vmatpush1.bf16.msra.mxu0 %v299
  %412 = vmatprep.subr.bf16.mxu0 0
  %413 = vmatpush1.bf16.msra.mxu0 %v300
  %414 = vmatprep.mubr.bf16.mxu0 %v128
  %415 = vmatmul.mubr.bf16.gmra.mrb[0].mxu0 %v127
  %v416 = vpop.f32.mrb[0].mxu0
  %v417 = vadd.f32 %v368, %v416
  %v418 = vpop.f32.mrb[0].mxu0
  %v419 = vpop.f32.mrb[0].mxu0
  %v420 = vadd.f32 %v371, %v419
  %v421 = vpop.f32.mrb[0].mxu0
  %422 = vmatprep.mubr.bf16.mxu0 %v132
  %423 = vmatmul.mubr.bf16.gmra.mrb[0].mxu0 %v131
  %v424 = vpop.f32.mrb[0].mxu0
  %v425 = vadd.f32 %v376, %v424
  %v426 = vpop.f32.mrb[0].mxu0
  %v427 = vpop.f32.mrb[0].mxu0
  %v428 = vadd.f32 %v379, %v427
  %v429 = vpop.f32.mrb[0].mxu0
  %430 = vdwg.mxu0
  %v431 = vadd.f32 %v25, %v417
  %v432 = vadd.f32 %v26, %v420
  %v433 = vadd.f32 %v27, %v425
  %v434 = vadd.f32 %v28, %v428
  %435 = vst [vmem:[#allocation2] sm:$0xff] %v431
  %436 = vst [vmem:[#allocation2 + $0x8] sm:$0xff] %v432
  %437 = vst [vmem:[#allocation2 + $0x10] sm:$0xff] %v433
  %438 = vst [vmem:[#allocation2 + $0x18] sm:$0xff] %v434
  // Predicated region
  $region18: #{_lambda_.15} parent=0 // pred_check
    %p439 = pneg %p17
  $region19: #{_lambda_.15} parent=0 // pred_check_branch
    %441 = sbr.rel (%p439) target = $region21
  $region20: #{_lambda_.15} parent=0 // pred_region
    %v442 = vld [vmem:[#allocation2] sm:$0xff]
    %v443 = vld [vmem:[#allocation2 + $0x8] sm:$0xff]
    %v444 = vld [vmem:[#allocation2 + $0x10] sm:$0xff]
    %v445 = vld [vmem:[#allocation2 + $0x18] sm:$0xff]
    %v446 = vld [vmem:[%s2] sm:$0x1]
    %v448 = vlaneseq
    %v449 = vshrl.u32 %v448, 7
    %v450 = vsub.s32 0, %v449
    %v451 = vrot.slane %v446, %v450
    %v453 = vadd.f32 %v442, %v451
    %v454 = vadd.f32 %v443, %v451
    %v455 = vadd.f32 %v444, %v451
    %v456 = vadd.f32 %v445, %v451
    %v457 = vpack.c.bf16 %v454, %v453
    %v458 = vpack.c.bf16 %v456, %v455
    %v461 = vunpack.c.l.b16 %v457
    %v462 = vunpack.c.h.b16 %v457
    %v463 = vunpack.c.l.b16 %v458
    %v464 = vunpack.c.h.b16 %v458
    %v465 = vpack.c.b16 %v461, %v461
    %v466 = vpack.c.b16 %v462, %v462
    %v467 = vpack.c.b16 %v463, %v463
    %v468 = vpack.c.b16 %v464, %v464
    %473 = vst [vmem:[%s3] sm:$0xf] %v465
    %474 = vst [vmem:[%s3 + $0x4] sm:$0xf] %v466
    %475 = vst [vmem:[%s3 + $0x8] sm:$0xf] %v467
    %476 = vst [vmem:[%s3 + $0xc] sm:$0xf] %v468
    %v477 = vadd.f32 %v453, %v454
    %v478 = vadd.f32 %v477, %v455
    %v479 = vadd.f32 %v478, %v456
    %v480 = vrot.slane %v479, 4
    %v481 = vadd.f32 %v479, %v480
    %v482 = vrot.slane %v481, 2
    %v483 = vadd.f32 %v481, %v482
    %v484 = vrot.slane %v483, 1
    %v485 = vadd.f32 %v483, %v484
    %v486 = vmul.f32 %v453, %v453
    %v487 = vmul.f32 %v454, %v454
    %v488 = vmul.f32 %v455, %v455
    %v489 = vmul.f32 %v456, %v456
    %v490 = vadd.f32 %v486, %v487
    %v491 = vadd.f32 %v490, %v488
    %v492 = vadd.f32 %v491, %v489
    %v493 = vrot.slane %v492, 4
    %v494 = vadd.f32 %v492, %v493
    %v495 = vrot.slane %v494, 2
    %v496 = vadd.f32 %v494, %v495
    %v497 = vrot.slane %v496, 1
    %v498 = vadd.f32 %v496, %v497
    %v499 = vlaneseq
    %v500 = vshrl.u32 %v499, 7
    %vm501 = vcmp.eq.s32.totalorder %v500, 0
    %vm502 = vcmp.eq.s32.totalorder %v500, 1
    %v503 = vsel %vm502, %v498, 0.0
    %v504 = vsel %vm501, %v485, %v503
    %505 = vst [vmem:[%s4] sm:$0xff] %v504
  $region21: #{_lambda_.15} parent=0 // pred_fallthru
    _
  // Predicated region
  $region22: #{_lambda_.15} parent=0 // pred_check
    _
  $region23: #{_lambda_.15} parent=0 // pred_check_branch
    %507 = sbr.rel (0) target = $region25
  $region24: #{_lambda_.15} parent=0 // pred_region
    _
  $region25: #{_lambda_.15} parent=0 // pred_fallthru
    _
  // Predicated region
  $region26: #{_lambda_.15} parent=0 // pred_check
    _
  $region27: #{_lambda_.15} parent=0 // pred_check_branch
    %509 = sbr.rel (0) target = $region29
  $region28: #{_lambda_.15} parent=0 // pred_region
    _
  $region29: #{_lambda_.15} parent=0 // pred_fallthru
    _
  // Predicated region
  $region30: #{_lambda_.15} parent=0 // pred_check
    _
  $region31: #{_lambda_.15} parent=0 // pred_check_branch
    %511 = sbr.rel (0) target = $region33
  $region32: #{_lambda_.15} parent=0 // pred_region
    _
  $region33: #{_lambda_.15} parent=0 // pred_fallthru
    _
  // Predicated region
  $region34: #{_lambda_.15} parent=0 // pred_check
    _
  $region35: #{_lambda_.15} parent=0 // pred_check_branch
    %513 = sbr.rel (0) target = $region37
  $region36: #{_lambda_.15} parent=0 // pred_region
    _
  $region37: #{_lambda_.15} parent=0 // pred_fallthru
    _

// kernel: _lambda_.19
$region0: #{_lambda_.19}
  #allocation0 [shape = 'u32[]', space=smem, size = 0x4, offset = 0x4, fixed_abs, tag = 'smem constant byte address 0x4 - core index']
  #allocation1 [shape = 'u32[144,128]{1,0:T(1,128)}', space=vmem, size = 0x12000, scoped, tag = 'internal scratch']
  %s0 = inlined_call_operand.vmem [shape: f32[8,128], index: 0, kind: input, shape index: {}]
  %s1 = inlined_call_operand.vmem [shape: f32[1,128], index: 1, kind: output, shape index: {0}]
  %s2 = inlined_call_operand.vmem [shape: f32[1,128], index: 2, kind: output, shape index: {1}]
  %3 = xla_tuple %s1, %s2
  %s4 = sld [smem:[#allocation0]]
  $region22: #{_lambda_.19} parent=0
    _
  %s6 = ssub.s32 1, %s4
  %s7 = scalar_select 0, %s6, %s4
  // Predicated region
  $region2: #{_lambda_.19} parent=0 // pred_check
    _
  $region3: #{_lambda_.19} parent=0 // pred_check_branch
    %9 = sbr.rel (0) target = $region5
  $region4: #{_lambda_.19} parent=0 // pred_region
    _
  $region5: #{_lambda_.19} parent=0 // pred_fallthru
    _
  %v10 = vld [vmem:[%s0] sm:$0xff]
  %v11 = vlaneseq
  %v12 = vshrl.u32 %v11, 7
  %vm13 = vcmp.lt.s32.totalorder %v12, 0
  %v14 = vsub.s32 0, %v12
  %v15 = vsel %vm13, %v14, %v12
  %v16 = vshrl.u32 %v15, 3
  %v17 = vand.u32 %v15, 7
  %v18 = vsub.s32 0, %v17
  %v19 = vsel %vm13, %v18, %v17
  %vm20 = vcmp.ne.s32.totalorder %v19, 0
  %vm21 = vcmp.lt.s32.totalorder %v19, 0
  %vm22 = vmand %vm21, %vm20
  %v23 = vadd.s32 %v19, 8
  %v24 = vsel %vm22, %v23, %v19
  %vm25 = vcmp.eq.s32.totalorder %v24, 0
  %v26 = vsel %vm25, %v10, 0.0
  %v27 = vrot.slane %v26, 4
  %v28 = vadd.f32 %v26, %v27
  %v29 = vrot.slane %v28, 2
  %v30 = vadd.f32 %v28, %v29
  %v31 = vrot.slane %v30, 1
  %v32 = vadd.f32 %v30, %v31
  %vm33 = vcmp.eq.s32.totalorder %v24, 1
  %v34 = vsel %vm33, %v10, 0.0
  %v35 = vrot.slane %v34, 4
  %v36 = vadd.f32 %v34, %v35
  %v37 = vrot.slane %v36, 2
  %v38 = vadd.f32 %v36, %v37
  %v39 = vrot.slane %v38, 1
  %v40 = vadd.f32 %v38, %v39
  %v41 = vmul.f32 %v32, 0.055555556
  %v42 = vmul.f32 %v40, 0.055555556
  %v43 = vmul.f32 %v41, %v41
  %v44 = vsub.f32 %v42, %v43
  %v45 = vmax.f32 %v44, 0.0
  %v46 = vadd.f32 %v45, 1e-05
  %v47 = vrsqrt.pop %v46
  %48 = vst [vmem:[%s1] sm:$0x1] %v47
  %v49 = vsub.f32 0.0, %v41
  %v50 = vmul.f32 %v49, %v47
  %51 = vst [vmem:[%s2] sm:$0x1] %v50
  // Predicated region
  $region6: #{_lambda_.19} parent=0 // pred_check
    _
  $region7: #{_lambda_.19} parent=0 // pred_check_branch
    %53 = sbr.rel (0) target = $region9
  $region8: #{_lambda_.19} parent=0 // pred_region
    _
  $region9: #{_lambda_.19} parent=0 // pred_fallthru
    _
  // Predicated region
  $region10: #{_lambda_.19} parent=0 // pred_check
    _
  $region11: #{_lambda_.19} parent=0 // pred_check_branch
    %55 = sbr.rel (0) target = $region13
  $region12: #{_lambda_.19} parent=0 // pred_region
    _
  $region13: #{_lambda_.19} parent=0 // pred_fallthru
    _
  // Predicated region
  $region14: #{_lambda_.19} parent=0 // pred_check
    _
  $region15: #{_lambda_.19} parent=0 // pred_check_branch
    %57 = sbr.rel (0) target = $region17
  $region16: #{_lambda_.19} parent=0 // pred_region
    _
  $region17: #{_lambda_.19} parent=0 // pred_fallthru
    _
  // Predicated region
  $region18: #{_lambda_.19} parent=0 // pred_check
    _
  $region19: #{_lambda_.19} parent=0 // pred_check_branch
    %59 = sbr.rel (0) target = $region21
  $region20: #{_lambda_.19} parent=0 // pred_region
    _
  $region21: #{_lambda_.19} parent=0 // pred_fallthru
    _

// kernel: _lambda_.18
$region0: #{_lambda_.18}
  #allocation0 [shape = 'u32[]', space=smem, size = 0x4, offset = 0x4, fixed_abs, tag = 'smem constant byte address 0x4 - core index']
  #allocation1 [shape = 'u32[144,128]{1,0:T(1,128)}', space=vmem, size = 0x12000, scoped, tag = 'internal scratch']
  #allocation2 [shape = 'f32[32,128]{1,0:T(8,128)}', space=vmem, size = 0x4000, scoped, tag = 'scratch operand']
  %s0 = inlined_call_operand.vmem [shape: bf16[32,1024], index: 0, kind: input, shape index: {}]
  %s1 = inlined_call_operand.vmem [shape: bf16[1024,128], index: 1, kind: input, shape index: {}]
  %s2 = inlined_call_operand.vmem [shape: f32[1,128], index: 2, kind: input, shape index: {}]
  %s3 = inlined_call_operand.vmem [shape: bf16[32,128], index: 3, kind: output, shape index: {0}]
  %s4 = inlined_call_operand.vmem [shape: f32[8,128], index: 4, kind: output, shape index: {1}]
  %5 = xla_tuple %s3, %s4
  %s6 = sld [smem:[#allocation0]]
  $region38: #{_lambda_.18} parent=0
    _
  %s8 = ssub.s32 1, %s6
  %s9 = scalar_select 0, %s8, %s6
  // Predicated region
  $region2: #{_lambda_.18} parent=0 // pred_check
    _
  $region3: #{_lambda_.18} parent=0 // pred_check_branch
    %11 = sbr.rel (0) target = $region5
  $region4: #{_lambda_.18} parent=0 // pred_region
    _
  $region5: #{_lambda_.18} parent=0 // pred_fallthru
    _
  // Predicated region
  $region6: #{_lambda_.18} parent=0 // pred_check
    _
  $region7: #{_lambda_.18} parent=0 // pred_check_branch
    %13 = sbr.rel (0) target = $region9
  $region8: #{_lambda_.18} parent=0 // pred_region
    _
  $region9: #{_lambda_.18} parent=0 // pred_fallthru
    _
  // Predicated region
  $region10: #{_lambda_.18} parent=0 // pred_check
    _
  $region11: #{_lambda_.18} parent=0 // pred_check_branch
    %15 = sbr.rel (0) target = $region13
  $region12: #{_lambda_.18} parent=0 // pred_region
    _
  $region13: #{_lambda_.18} parent=0 // pred_fallthru
    _
  %p17 = scmp.eq.s32.totalorder 0, 0
  // Predicated region
  $region14: #{_lambda_.18} parent=0 // pred_check
    %p18 = pneg %p17
  $region15: #{_lambda_.18} parent=0 // pred_check_branch
    %20 = sbr.rel (%p18) target = $region17
  $region16: #{_lambda_.18} parent=0 // pred_region
    %21 = vst [vmem:[#allocation2] sm:$0xff] 0.0
    %22 = vst [vmem:[#allocation2 + $0x8] sm:$0xff] 0.0
    %23 = vst [vmem:[#allocation2 + $0x10] sm:$0xff] 0.0
    %24 = vst [vmem:[#allocation2 + $0x18] sm:$0xff] 0.0
  $region17: #{_lambda_.18} parent=0 // pred_fallthru
    _
  %v25 = vld [vmem:[#allocation2] sm:$0xff]
  %v26 = vld [vmem:[#allocation2 + $0x8] sm:$0xff]
  %v27 = vld [vmem:[#allocation2 + $0x10] sm:$0xff]
  %v28 = vld [vmem:[#allocation2 + $0x18] sm:$0xff]
  %v29 = vld [vmem:[%s0] sm:$0xff]
  %v30 = vld [vmem:[%s0 + $0x8] sm:$0xff]
  %v31 = vld [vmem:[%s0 + $0x10] sm:$0xff]
  %v32 = vld [vmem:[%s0 + $0x18] sm:$0xff]
  %v33 = vld [vmem:[%s0 + $0x20] sm:$0xff]
  %v34 = vld [vmem:[%s0 + $0x28] sm:$0xff]
  %v35 = vld [vmem:[%s0 + $0x30] sm:$0xff]
  %v36 = vld [vmem:[%s0 + $0x38] sm:$0xff]
  %v37 = vld [vmem:[%s0 + $0x40] sm:$0xff]
  %v38 = vld [vmem:[%s0 + $0x48] sm:$0xff]
  %v39 = vld [vmem:[%s0 + $0x50] sm:$0xff]
  %v40 = vld [vmem:[%s0 + $0x58] sm:$0xff]
  %v41 = vld [vmem:[%s0 + $0x60] sm:$0xff]
  %v42 = vld [vmem:[%s0 + $0x68] sm:$0xff]
  %v43 = vld [vmem:[%s0 + $0x70] sm:$0xff]
  %v44 = vld [vmem:[%s0 + $0x78] sm:$0xff]
  %v45 = vld [vmem:[%s1] sm:$0xf]
  %v46 = vld [vmem:[%s1 + $0x4] sm:$0xf]
  %v47 = vld [vmem:[%s1 + $0x8] sm:$0xf]
  %v48 = vld [vmem:[%s1 + $0xc] sm:$0xf]
  %v49 = vld [vmem:[%s1 + $0x10] sm:$0xf]
  %v50 = vld [vmem:[%s1 + $0x14] sm:$0xf]
  %v51 = vld [vmem:[%s1 + $0x18] sm:$0xf]
  %v52 = vld [vmem:[%s1 + $0x1c] sm:$0xf]
  %v53 = vld [vmem:[%s1 + $0x20] sm:$0xf]
  %v54 = vld [vmem:[%s1 + $0x24] sm:$0xf]
  %v55 = vld [vmem:[%s1 + $0x28] sm:$0xf]
  %v56 = vld [vmem:[%s1 + $0x2c] sm:$0xf]
  %v57 = vld [vmem:[%s1 + $0x30] sm:$0xf]
  %v58 = vld [vmem:[%s1 + $0x34] sm:$0xf]
  %v59 = vld [vmem:[%s1 + $0x38] sm:$0xf]
  %v60 = vld [vmem:[%s1 + $0x3c] sm:$0xf]
  %v61 = vld [vmem:[%s1 + $0x40] sm:$0xf]
  %v62 = vld [vmem:[%s1 + $0x44] sm:$0xf]
  %v63 = vld [vmem:[%s1 + $0x48] sm:$0xf]
  %v64 = vld [vmem:[%s1 + $0x4c] sm:$0xf]
  %v65 = vld [vmem:[%s1 + $0x50] sm:$0xf]
  %v66 = vld [vmem:[%s1 + $0x54] sm:$0xf]
  %v67 = vld [vmem:[%s1 + $0x58] sm:$0xf]
  %v68 = vld [vmem:[%s1 + $0x5c] sm:$0xf]
  %v69 = vld [vmem:[%s1 + $0x60] sm:$0xf]
  %v70 = vld [vmem:[%s1 + $0x64] sm:$0xf]
  %v71 = vld [vmem:[%s1 + $0x68] sm:$0xf]
  %v72 = vld [vmem:[%s1 + $0x6c] sm:$0xf]
  %v73 = vld [vmem:[%s1 + $0x70] sm:$0xf]
  %v74 = vld [vmem:[%s1 + $0x74] sm:$0xf]
  %v75 = vld [vmem:[%s1 + $0x78] sm:$0xf]
  %v76 = vld [vmem:[%s1 + $0x7c] sm:$0xf]
  %v77 = vld [vmem:[%s1 + $0x80] sm:$0xf]
  %v78 = vld [vmem:[%s1 + $0x84] sm:$0xf]
  %v79 = vld [vmem:[%s1 + $0x88] sm:$0xf]
  %v80 = vld [vmem:[%s1 + $0x8c] sm:$0xf]
  %v81 = vld [vmem:[%s1 + $0x90] sm:$0xf]
  %v82 = vld [vmem:[%s1 + $0x94] sm:$0xf]
  %v83 = vld [vmem:[%s1 + $0x98] sm:$0xf]
  %v84 = vld [vmem:[%s1 + $0x9c] sm:$0xf]
  %v85 = vld [vmem:[%s1 + $0xa0] sm:$0xf]
  %v86 = vld [vmem:[%s1 + $0xa4] sm:$0xf]
  %v87 = vld [vmem:[%s1 + $0xa8] sm:$0xf]
  %v88 = vld [vmem:[%s1 + $0xac] sm:$0xf]
  %v89 = vld [vmem:[%s1 + $0xb0] sm:$0xf]
  %v90 = vld [vmem:[%s1 + $0xb4] sm:$0xf]
  %v91 = vld [vmem:[%s1 + $0xb8] sm:$0xf]
  %v92 = vld [vmem:[%s1 + $0xbc] sm:$0xf]
  %v93 = vld [vmem:[%s1 + $0xc0] sm:$0xf]
  %v94 = vld [vmem:[%s1 + $0xc4] sm:$0xf]
  %v95 = vld [vmem:[%s1 + $0xc8] sm:$0xf]
  %v96 = vld [vmem:[%s1 + $0xcc] sm:$0xf]
  %v97 = vld [vmem:[%s1 + $0xd0] sm:$0xf]
  %v98 = vld [vmem:[%s1 + $0xd4] sm:$0xf]
  %v99 = vld [vmem:[%s1 + $0xd8] sm:$0xf]
  %v100 = vld [vmem:[%s1 + $0xdc] sm:$0xf]
  %v101 = vld [vmem:[%s1 + $0xe0] sm:$0xf]
  %v102 = vld [vmem:[%s1 + $0xe4] sm:$0xf]
  %v103 = vld [vmem:[%s1 + $0xe8] sm:$0xf]
  %v104 = vld [vmem:[%s1 + $0xec] sm:$0xf]
  %v105 = vld [vmem:[%s1 + $0xf0] sm:$0xf]
  %v106 = vld [vmem:[%s1 + $0xf4] sm:$0xf]
  %v107 = vld [vmem:[%s1 + $0xf8] sm:$0xf]
  %v108 = vld [vmem:[%s1 + $0xfc] sm:$0xf]
  %v109 = vld [vmem:[%s1 + $0x100] sm:$0xf]
  %v110 = vld [vmem:[%s1 + $0x104] sm:$0xf]
  %v111 = vld [vmem:[%s1 + $0x108] sm:$0xf]
  %v112 = vld [vmem:[%s1 + $0x10c] sm:$0xf]
  %v113 = vld [vmem:[%s1 + $0x110] sm:$0xf]
  %v114 = vld [vmem:[%s1 + $0x114] sm:$0xf]
  %v115 = vld [vmem:[%s1 + $0x118] sm:$0xf]
  %v116 = vld [vmem:[%s1 + $0x11c] sm:$0xf]
  %v117 = vld [vmem:[%s1 + $0x120] sm:$0xf]
  %v118 = vld [vmem:[%s1 + $0x124] sm:$0xf]
  %v119 = vld [vmem:[%s1 + $0x128] sm:$0xf]
  %v120 = vld [vmem:[%s1 + $0x12c] sm:$0xf]
  %v121 = vld [vmem:[%s1 + $0x130] sm:$0xf]
  %v122 = vld [vmem:[%s1 + $0x134] sm:$0xf]
  %v123 = vld [vmem:[%s1 + $0x138] sm:$0xf]
  %v124 = vld [vmem:[%s1 + $0x13c] sm:$0xf]
  %v125 = vld [vmem:[%s1 + $0x140] sm:$0xf]
  %v126 = vld [vmem:[%s1 + $0x144] sm:$0xf]
  %v127 = vld [vmem:[%s1 + $0x148] sm:$0xf]
  %v128 = vld [vmem:[%s1 + $0x14c] sm:$0xf]
  %v129 = vld [vmem:[%s1 + $0x150] sm:$0xf]
  %v130 = vld [vmem:[%s1 + $0x154] sm:$0xf]
  %v131 = vld [vmem:[%s1 + $0x158] sm:$0xf]
  %v132 = vld [vmem:[%s1 + $0x15c] sm:$0xf]
  %v133 = vld [vmem:[%s1 + $0x160] sm:$0xf]
  %v134 = vld [vmem:[%s1 + $0x164] sm:$0xf]
  %v135 = vld [vmem:[%s1 + $0x168] sm:$0xf]
  %v136 = vld [vmem:[%s1 + $0x16c] sm:$0xf]
  %v137 = vld [vmem:[%s1 + $0x170] sm:$0xf]
  %v138 = vld [vmem:[%s1 + $0x174] sm:$0xf]
  %v139 = vld [vmem:[%s1 + $0x178] sm:$0xf]
  %v140 = vld [vmem:[%s1 + $0x17c] sm:$0xf]
  %v141 = vld [vmem:[%s1 + $0x180] sm:$0xf]
  %v142 = vld [vmem:[%s1 + $0x184] sm:$0xf]
  %v143 = vld [vmem:[%s1 + $0x188] sm:$0xf]
  %v144 = vld [vmem:[%s1 + $0x18c] sm:$0xf]
  %v145 = vld [vmem:[%s1 + $0x190] sm:$0xf]
  %v146 = vld [vmem:[%s1 + $0x194] sm:$0xf]
  %v147 = vld [vmem:[%s1 + $0x198] sm:$0xf]
  %v148 = vld [vmem:[%s1 + $0x19c] sm:$0xf]
  %v149 = vld [vmem:[%s1 + $0x1a0] sm:$0xf]
  %v150 = vld [vmem:[%s1 + $0x1a4] sm:$0xf]
  %v151 = vld [vmem:[%s1 + $0x1a8] sm:$0xf]
  %v152 = vld [vmem:[%s1 + $0x1ac] sm:$0xf]
  %v153 = vld [vmem:[%s1 + $0x1b0] sm:$0xf]
  %v154 = vld [vmem:[%s1 + $0x1b4] sm:$0xf]
  %v155 = vld [vmem:[%s1 + $0x1b8] sm:$0xf]
  %v156 = vld [vmem:[%s1 + $0x1bc] sm:$0xf]
  %v157 = vld [vmem:[%s1 + $0x1c0] sm:$0xf]
  %v158 = vld [vmem:[%s1 + $0x1c4] sm:$0xf]
  %v159 = vld [vmem:[%s1 + $0x1c8] sm:$0xf]
  %v160 = vld [vmem:[%s1 + $0x1cc] sm:$0xf]
  %v161 = vld [vmem:[%s1 + $0x1d0] sm:$0xf]
  %v162 = vld [vmem:[%s1 + $0x1d4] sm:$0xf]
  %v163 = vld [vmem:[%s1 + $0x1d8] sm:$0xf]
  %v164 = vld [vmem:[%s1 + $0x1dc] sm:$0xf]
  %v165 = vld [vmem:[%s1 + $0x1e0] sm:$0xf]
  %v166 = vld [vmem:[%s1 + $0x1e4] sm:$0xf]
  %v167 = vld [vmem:[%s1 + $0x1e8] sm:$0xf]
  %v168 = vld [vmem:[%s1 + $0x1ec] sm:$0xf]
  %v169 = vld [vmem:[%s1 + $0x1f0] sm:$0xf]
  %v170 = vld [vmem:[%s1 + $0x1f4] sm:$0xf]
  %v171 = vld [vmem:[%s1 + $0x1f8] sm:$0xf]
  %v172 = vld [vmem:[%s1 + $0x1fc] sm:$0xf]
  %v189 = vunpack.c.l.b16 %v29
  %v190 = vunpack.c.h.b16 %v29
  %v191 = vunpack.c.l.b16 %v30
  %v192 = vunpack.c.h.b16 %v30
  %v193 = vunpack.c.l.b16 %v31
  %v194 = vunpack.c.h.b16 %v31
  %v195 = vunpack.c.l.b16 %v32
  %v196 = vunpack.c.h.b16 %v32
  %v197 = vunpack.c.l.b16 %v33
  %v198 = vunpack.c.h.b16 %v33
  %v199 = vunpack.c.l.b16 %v34
  %v200 = vunpack.c.h.b16 %v34
  %v201 = vunpack.c.l.b16 %v35
  %v202 = vunpack.c.h.b16 %v35
  %v203 = vunpack.c.l.b16 %v36
  %v204 = vunpack.c.h.b16 %v36
  %v205 = vunpack.c.l.b16 %v37
  %v206 = vunpack.c.h.b16 %v37
  %v207 = vunpack.c.l.b16 %v38
  %v208 = vunpack.c.h.b16 %v38
  %v209 = vunpack.c.l.b16 %v39
  %v210 = vunpack.c.h.b16 %v39
  %v211 = vunpack.c.l.b16 %v40
  %v212 = vunpack.c.h.b16 %v40
  %v213 = vunpack.c.l.b16 %v41
  %v214 = vunpack.c.h.b16 %v41
  %v215 = vunpack.c.l.b16 %v42
  %v216 = vunpack.c.h.b16 %v42
  %v217 = vunpack.c.l.b16 %v43
  %v218 = vunpack.c.h.b16 %v43
  %v219 = vunpack.c.l.b16 %v44
  %v220 = vunpack.c.h.b16 %v44
  %v221 = vpack.c.b16 %v197, %v189
  %v222 = vpack.c.b16 %v198, %v190
  %v223 = vpack.c.b16 %v199, %v191
  %v224 = vpack.c.b16 %v200, %v192
  %v225 = vpack.c.b16 %v201, %v193
  %v226 = vpack.c.b16 %v202, %v194
  %v227 = vpack.c.b16 %v203, %v195
  %v228 = vpack.c.b16 %v204, %v196
  %v229 = vpack.c.b16 %v213, %v205
  %v230 = vpack.c.b16 %v214, %v206
  %v231 = vpack.c.b16 %v215, %v207
  %v232 = vpack.c.b16 %v216, %v208
  %v233 = vpack.c.b16 %v217, %v209
  %v234 = vpack.c.b16 %v218, %v210
  %v235 = vpack.c.b16 %v219, %v211
  %v236 = vpack.c.b16 %v220, %v212
  %v381 = vunpack.c.l.b16 %v45
  %v382 = vunpack.c.l.b16 %v46
  %v383 = vunpack.c.l.b16 %v47
  %v384 = vunpack.c.l.b16 %v48
  %v385 = vunpack.c.l.b16 %v49
  %v386 = vunpack.c.l.b16 %v50
  %v387 = vunpack.c.l.b16 %v51
  %v388 = vunpack.c.l.b16 %v52
  %v389 = vunpack.c.l.b16 %v53
  %v390 = vunpack.c.l.b16 %v54
  %v391 = vunpack.c.l.b16 %v55
  %v392 = vunpack.c.l.b16 %v56
  %v393 = vunpack.c.l.b16 %v57
  %v394 = vunpack.c.l.b16 %v58
  %v395 = vunpack.c.l.b16 %v59
  %v396 = vunpack.c.l.b16 %v60
  %v397 = vunpack.c.l.b16 %v61
  %v398 = vunpack.c.l.b16 %v62
  %v399 = vunpack.c.l.b16 %v63
  %v400 = vunpack.c.l.b16 %v64
  %v401 = vunpack.c.l.b16 %v65
  %v402 = vunpack.c.l.b16 %v66
  %v403 = vunpack.c.l.b16 %v67
  %v404 = vunpack.c.l.b16 %v68
  %v405 = vunpack.c.l.b16 %v69
  %v406 = vunpack.c.l.b16 %v70
  %v407 = vunpack.c.l.b16 %v71
  %v408 = vunpack.c.l.b16 %v72
  %v409 = vunpack.c.l.b16 %v73
  %v410 = vunpack.c.l.b16 %v74
  %v411 = vunpack.c.l.b16 %v75
  %v412 = vunpack.c.l.b16 %v76
  %v413 = vunpack.c.l.b16 %v77
  %v414 = vunpack.c.l.b16 %v78
  %v415 = vunpack.c.l.b16 %v79
  %v416 = vunpack.c.l.b16 %v80
  %v417 = vunpack.c.l.b16 %v81
  %v418 = vunpack.c.l.b16 %v82
  %v419 = vunpack.c.l.b16 %v83
  %v420 = vunpack.c.l.b16 %v84
  %v421 = vunpack.c.l.b16 %v85
  %v422 = vunpack.c.l.b16 %v86
  %v423 = vunpack.c.l.b16 %v87
  %v424 = vunpack.c.l.b16 %v88
  %v425 = vunpack.c.l.b16 %v89
  %v426 = vunpack.c.l.b16 %v90
  %v427 = vunpack.c.l.b16 %v91
  %v428 = vunpack.c.l.b16 %v92
  %v429 = vunpack.c.l.b16 %v93
  %v430 = vunpack.c.l.b16 %v94
  %v431 = vunpack.c.l.b16 %v95
  %v432 = vunpack.c.l.b16 %v96
  %v433 = vunpack.c.l.b16 %v97
  %v434 = vunpack.c.l.b16 %v98
  %v435 = vunpack.c.l.b16 %v99
  %v436 = vunpack.c.l.b16 %v100
  %v437 = vunpack.c.l.b16 %v101
  %v438 = vunpack.c.l.b16 %v102
  %v439 = vunpack.c.l.b16 %v103
  %v440 = vunpack.c.l.b16 %v104
  %v441 = vunpack.c.l.b16 %v105
  %v442 = vunpack.c.l.b16 %v106
  %v443 = vunpack.c.l.b16 %v107
  %v444 = vunpack.c.l.b16 %v108
  %v445 = vunpack.c.l.b16 %v109
  %v446 = vunpack.c.l.b16 %v110
  %v447 = vunpack.c.l.b16 %v111
  %v448 = vunpack.c.l.b16 %v112
  %v449 = vunpack.c.l.b16 %v113
  %v450 = vunpack.c.l.b16 %v114
  %v451 = vunpack.c.l.b16 %v115
  %v452 = vunpack.c.l.b16 %v116
  %v453 = vunpack.c.l.b16 %v117
  %v454 = vunpack.c.l.b16 %v118
  %v455 = vunpack.c.l.b16 %v119
  %v456 = vunpack.c.l.b16 %v120
  %v457 = vunpack.c.l.b16 %v121
  %v458 = vunpack.c.l.b16 %v122
  %v459 = vunpack.c.l.b16 %v123
  %v460 = vunpack.c.l.b16 %v124
  %v461 = vunpack.c.l.b16 %v125
  %v462 = vunpack.c.l.b16 %v126
  %v463 = vunpack.c.l.b16 %v127
  %v464 = vunpack.c.l.b16 %v128
  %v465 = vunpack.c.l.b16 %v129
  %v466 = vunpack.c.l.b16 %v130
  %v467 = vunpack.c.l.b16 %v131
  %v468 = vunpack.c.l.b16 %v132
  %v469 = vunpack.c.l.b16 %v133
  %v470 = vunpack.c.l.b16 %v134
  %v471 = vunpack.c.l.b16 %v135
  %v472 = vunpack.c.l.b16 %v136
  %v473 = vunpack.c.l.b16 %v137
  %v474 = vunpack.c.l.b16 %v138
  %v475 = vunpack.c.l.b16 %v139
  %v476 = vunpack.c.l.b16 %v140
  %v477 = vunpack.c.l.b16 %v141
  %v478 = vunpack.c.l.b16 %v142
  %v479 = vunpack.c.l.b16 %v143
  %v480 = vunpack.c.l.b16 %v144
  %v481 = vunpack.c.l.b16 %v145
  %v482 = vunpack.c.l.b16 %v146
  %v483 = vunpack.c.l.b16 %v147
  %v484 = vunpack.c.l.b16 %v148
  %v485 = vunpack.c.l.b16 %v149
  %v486 = vunpack.c.l.b16 %v150
  %v487 = vunpack.c.l.b16 %v151
  %v488 = vunpack.c.l.b16 %v152
  %v489 = vunpack.c.l.b16 %v153
  %v490 = vunpack.c.l.b16 %v154
  %v491 = vunpack.c.l.b16 %v155
  %v492 = vunpack.c.l.b16 %v156
  %v493 = vunpack.c.l.b16 %v157
  %v494 = vunpack.c.l.b16 %v158
  %v495 = vunpack.c.l.b16 %v159
  %v496 = vunpack.c.l.b16 %v160
  %v497 = vunpack.c.l.b16 %v161
  %v498 = vunpack.c.l.b16 %v162
  %v499 = vunpack.c.l.b16 %v163
  %v500 = vunpack.c.l.b16 %v164
  %v501 = vunpack.c.l.b16 %v165
  %v502 = vunpack.c.l.b16 %v166
  %v503 = vunpack.c.l.b16 %v167
  %v504 = vunpack.c.l.b16 %v168
  %v505 = vunpack.c.l.b16 %v169
  %v506 = vunpack.c.l.b16 %v170
  %v507 = vunpack.c.l.b16 %v171
  %v508 = vunpack.c.l.b16 %v172
  %v509 = vpack.c.b16 %v382, %v381
  %v510 = vpack.c.b16 %v384, %v383
  %v511 = vpack.c.b16 %v386, %v385
  %v512 = vpack.c.b16 %v388, %v387
  %v513 = vpack.c.b16 %v390, %v389
  %v514 = vpack.c.b16 %v392, %v391
  %v515 = vpack.c.b16 %v394, %v393
  %v516 = vpack.c.b16 %v396, %v395
  %v517 = vpack.c.b16 %v398, %v397
  %v518 = vpack.c.b16 %v400, %v399
  %v519 = vpack.c.b16 %v402, %v401
  %v520 = vpack.c.b16 %v404, %v403
  %v521 = vpack.c.b16 %v406, %v405
  %v522 = vpack.c.b16 %v408, %v407
  %v523 = vpack.c.b16 %v410, %v409
  %v524 = vpack.c.b16 %v412, %v411
  %v525 = vpack.c.b16 %v414, %v413
  %v526 = vpack.c.b16 %v416, %v415
  %v527 = vpack.c.b16 %v418, %v417
  %v528 = vpack.c.b16 %v420, %v419
  %v529 = vpack.c.b16 %v422, %v421
  %v530 = vpack.c.b16 %v424, %v423
  %v531 = vpack.c.b16 %v426, %v425
  %v532 = vpack.c.b16 %v428, %v427
  %v533 = vpack.c.b16 %v430, %v429
  %v534 = vpack.c.b16 %v432, %v431
  %v535 = vpack.c.b16 %v434, %v433
  %v536 = vpack.c.b16 %v436, %v435
  %v537 = vpack.c.b16 %v438, %v437
  %v538 = vpack.c.b16 %v440, %v439
  %v539 = vpack.c.b16 %v442, %v441
  %v540 = vpack.c.b16 %v444, %v443
  %v541 = vpack.c.b16 %v446, %v445
  %v542 = vpack.c.b16 %v448, %v447
  %v543 = vpack.c.b16 %v450, %v449
  %v544 = vpack.c.b16 %v452, %v451
  %v545 = vpack.c.b16 %v454, %v453
  %v546 = vpack.c.b16 %v456, %v455
  %v547 = vpack.c.b16 %v458, %v457
  %v548 = vpack.c.b16 %v460, %v459
  %v549 = vpack.c.b16 %v462, %v461
  %v550 = vpack.c.b16 %v464, %v463
  %v551 = vpack.c.b16 %v466, %v465
  %v552 = vpack.c.b16 %v468, %v467
  %v553 = vpack.c.b16 %v470, %v469
  %v554 = vpack.c.b16 %v472, %v471
  %v555 = vpack.c.b16 %v474, %v473
  %v556 = vpack.c.b16 %v476, %v475
  %v557 = vpack.c.b16 %v478, %v477
  %v558 = vpack.c.b16 %v480, %v479
  %v559 = vpack.c.b16 %v482, %v481
  %v560 = vpack.c.b16 %v484, %v483
  %v561 = vpack.c.b16 %v486, %v485
  %v562 = vpack.c.b16 %v488, %v487
  %v563 = vpack.c.b16 %v490, %v489
  %v564 = vpack.c.b16 %v492, %v491
  %v565 = vpack.c.b16 %v494, %v493
  %v566 = vpack.c.b16 %v496, %v495
  %v567 = vpack.c.b16 %v498, %v497
  %v568 = vpack.c.b16 %v500, %v499
  %v569 = vpack.c.b16 %v502, %v501
  %v570 = vpack.c.b16 %v504, %v503
  %v571 = vpack.c.b16 %v506, %v505
  %v572 = vpack.c.b16 %v508, %v507
  %637 = vmatprep.subr.bf16.mxu0 0
  %638 = vmatpush1.bf16.msra.mxu0 %v509
  %639 = vmatprep.subr.bf16.mxu0 0
  %640 = vmatpush1.bf16.msra.mxu0 %v510
  %641 = vmatprep.subr.bf16.mxu0 0
  %642 = vmatpush1.bf16.msra.mxu0 %v511
  %643 = vmatprep.subr.bf16.mxu0 0
  %644 = vmatpush1.bf16.msra.mxu0 %v512
  %645 = vmatprep.subr.bf16.mxu0 0
  %646 = vmatpush1.bf16.msra.mxu0 %v513
  %647 = vmatprep.subr.bf16.mxu0 0
  %648 = vmatpush1.bf16.msra.mxu0 %v514
  %649 = vmatprep.subr.bf16.mxu0 0
  %650 = vmatpush1.bf16.msra.mxu0 %v515
  %651 = vmatprep.subr.bf16.mxu0 0
  %652 = vmatpush1.bf16.msra.mxu0 %v516
  %653 = vmatprep.subr.bf16.mxu0 0
  %654 = vmatpush1.bf16.msra.mxu0 %v517
  %655 = vmatprep.subr.bf16.mxu0 0
  %656 = vmatpush1.bf16.msra.mxu0 %v518
  %657 = vmatprep.subr.bf16.mxu0 0
  %658 = vmatpush1.bf16.msra.mxu0 %v519
  %659 = vmatprep.subr.bf16.mxu0 0
  %660 = vmatpush1.bf16.msra.mxu0 %v520
  %661 = vmatprep.subr.bf16.mxu0 0
  %662 = vmatpush1.bf16.msra.mxu0 %v521
  %663 = vmatprep.subr.bf16.mxu0 0
  %664 = vmatpush1.bf16.msra.mxu0 %v522
  %665 = vmatprep.subr.bf16.mxu0 0
  %666 = vmatpush1.bf16.msra.mxu0 %v523
  %667 = vmatprep.subr.bf16.mxu0 0
  %668 = vmatpush1.bf16.msra.mxu0 %v524
  %669 = vmatprep.mubr.bf16.mxu0 %v222
  %670 = vmatmul.mubr.bf16.gmra.mrb[0].mxu0 %v221
  %v671 = vpop.f32.mrb[0].mxu0
  %v672 = vadd.f32 0.0, %v671
  %v673 = vpop.f32.mrb[0].mxu0
  %v674 = vpop.f32.mrb[0].mxu0
  %v675 = vadd.f32 0.0, %v674
  %v676 = vpop.f32.mrb[0].mxu0
  %677 = vmatprep.mubr.bf16.mxu0 %v230
  %678 = vmatmul.mubr.bf16.gmra.mrb[0].mxu0 %v229
  %v679 = vpop.f32.mrb[0].mxu0
  %v680 = vadd.f32 0.0, %v679
  %v681 = vpop.f32.mrb[0].mxu0
  %v682 = vpop.f32.mrb[0].mxu0
  %v683 = vadd.f32 0.0, %v682
  %v684 = vpop.f32.mrb[0].mxu0
  %685 = vdwg.mxu0
  %686 = vmatprep.subr.bf16.mxu0 0
  %687 = vmatpush1.bf16.msra.mxu0 %v525
  %688 = vmatprep.subr.bf16.mxu0 0
  %689 = vmatpush1.bf16.msra.mxu0 %v526
  %690 = vmatprep.subr.bf16.mxu0 0
  %691 = vmatpush1.bf16.msra.mxu0 %v527
  %692 = vmatprep.subr.bf16.mxu0 0
  %693 = vmatpush1.bf16.msra.mxu0 %v528
  %694 = vmatprep.subr.bf16.mxu0 0
  %695 = vmatpush1.bf16.msra.mxu0 %v529
  %696 = vmatprep.subr.bf16.mxu0 0
  %697 = vmatpush1.bf16.msra.mxu0 %v530
  %698 = vmatprep.subr.bf16.mxu0 0
  %699 = vmatpush1.bf16.msra.mxu0 %v531
  %700 = vmatprep.subr.bf16.mxu0 0
  %701 = vmatpush1.bf16.msra.mxu0 %v532
  %702 = vmatprep.subr.bf16.mxu0 0
  %703 = vmatpush1.bf16.msra.mxu0 %v533
  %704 = vmatprep.subr.bf16.mxu0 0
  %705 = vmatpush1.bf16.msra.mxu0 %v534
  %706 = vmatprep.subr.bf16.mxu0 0
  %707 = vmatpush1.bf16.msra.mxu0 %v535
  %708 = vmatprep.subr.bf16.mxu0 0
  %709 = vmatpush1.bf16.msra.mxu0 %v536
  %710 = vmatprep.subr.bf16.mxu0 0
  %711 = vmatpush1.bf16.msra.mxu0 %v537
  %712 = vmatprep.subr.bf16.mxu0 0
  %713 = vmatpush1.bf16.msra.mxu0 %v538
  %714 = vmatprep.subr.bf16.mxu0 0
  %715 = vmatpush1.bf16.msra.mxu0 %v539
  %716 = vmatprep.subr.bf16.mxu0 0
  %717 = vmatpush1.bf16.msra.mxu0 %v540
  %718 = vmatprep.mubr.bf16.mxu0 %v224
  %719 = vmatmul.mubr.bf16.gmra.mrb[0].mxu0 %v223
  %v720 = vpop.f32.mrb[0].mxu0
  %v721 = vadd.f32 %v672, %v720
  %v722 = vpop.f32.mrb[0].mxu0
  %v723 = vpop.f32.mrb[0].mxu0
  %v724 = vadd.f32 %v675, %v723
  %v725 = vpop.f32.mrb[0].mxu0
  %726 = vmatprep.mubr.bf16.mxu0 %v232
  %727 = vmatmul.mubr.bf16.gmra.mrb[0].mxu0 %v231
  %v728 = vpop.f32.mrb[0].mxu0
  %v729 = vadd.f32 %v680, %v728
  %v730 = vpop.f32.mrb[0].mxu0
  %v731 = vpop.f32.mrb[0].mxu0
  %v732 = vadd.f32 %v683, %v731
  %v733 = vpop.f32.mrb[0].mxu0
  %734 = vdwg.mxu0
  %735 = vmatprep.subr.bf16.mxu0 0
  %736 = vmatpush1.bf16.msra.mxu0 %v541
  %737 = vmatprep.subr.bf16.mxu0 0
  %738 = vmatpush1.bf16.msra.mxu0 %v542
  %739 = vmatprep.subr.bf16.mxu0 0
  %740 = vmatpush1.bf16.msra.mxu0 %v543
  %741 = vmatprep.subr.bf16.mxu0 0
  %742 = vmatpush1.bf16.msra.mxu0 %v544
  %743 = vmatprep.subr.bf16.mxu0 0
  %744 = vmatpush1.bf16.msra.mxu0 %v545
  %745 = vmatprep.subr.bf16.mxu0 0
  %746 = vmatpush1.bf16.msra.mxu0 %v546
  %747 = vmatprep.subr.bf16.mxu0 0
  %748 = vmatpush1.bf16.msra.mxu0 %v547
  %749 = vmatprep.subr.bf16.mxu0 0
  %750 = vmatpush1.bf16.msra.mxu0 %v548
  %751 = vmatprep.subr.bf16.mxu0 0
  %752 = vmatpush1.bf16.msra.mxu0 %v549
  %753 = vmatprep.subr.bf16.mxu0 0
  %754 = vmatpush1.bf16.msra.mxu0 %v550
  %755 = vmatprep.subr.bf16.mxu0 0
  %756 = vmatpush1.bf16.msra.mxu0 %v551
  %757 = vmatprep.subr.bf16.mxu0 0
  %758 = vmatpush1.bf16.msra.mxu0 %v552
  %759 = vmatprep.subr.bf16.mxu0 0
  %760 = vmatpush1.bf16.msra.mxu0 %v553
  %761 = vmatprep.subr.bf16.mxu0 0
  %762 = vmatpush1.bf16.msra.mxu0 %v554
  %763 = vmatprep.subr.bf16.mxu0 0
  %764 = vmatpush1.bf16.msra.mxu0 %v555
  %765 = vmatprep.subr.bf16.mxu0 0
  %766 = vmatpush1.bf16.msra.mxu0 %v556
  %767 = vmatprep.mubr.bf16.mxu0 %v226
  %768 = vmatmul.mubr.bf16.gmra.mrb[0].mxu0 %v225
  %v769 = vpop.f32.mrb[0].mxu0
  %v770 = vadd.f32 %v721, %v769
  %v771 = vpop.f32.mrb[0].mxu0
  %v772 = vpop.f32.mrb[0].mxu0
  %v773 = vadd.f32 %v724, %v772
  %v774 = vpop.f32.mrb[0].mxu0
  %775 = vmatprep.mubr.bf16.mxu0 %v234
  %776 = vmatmul.mubr.bf16.gmra.mrb[0].mxu0 %v233
  %v777 = vpop.f32.mrb[0].mxu0
  %v778 = vadd.f32 %v729, %v777
  %v779 = vpop.f32.mrb[0].mxu0
  %v780 = vpop.f32.mrb[0].mxu0
  %v781 = vadd.f32 %v732, %v780
  %v782 = vpop.f32.mrb[0].mxu0
  %783 = vdwg.mxu0
  %784 = vmatprep.subr.bf16.mxu0 0
  %785 = vmatpush1.bf16.msra.mxu0 %v557
  %786 = vmatprep.subr.bf16.mxu0 0
  %787 = vmatpush1.bf16.msra.mxu0 %v558
  %788 = vmatprep.subr.bf16.mxu0 0
  %789 = vmatpush1.bf16.msra.mxu0 %v559
  %790 = vmatprep.subr.bf16.mxu0 0
  %791 = vmatpush1.bf16.msra.mxu0 %v560
  %792 = vmatprep.subr.bf16.mxu0 0
  %793 = vmatpush1.bf16.msra.mxu0 %v561
  %794 = vmatprep.subr.bf16.mxu0 0
  %795 = vmatpush1.bf16.msra.mxu0 %v562
  %796 = vmatprep.subr.bf16.mxu0 0
  %797 = vmatpush1.bf16.msra.mxu0 %v563
  %798 = vmatprep.subr.bf16.mxu0 0
  %799 = vmatpush1.bf16.msra.mxu0 %v564
  %800 = vmatprep.subr.bf16.mxu0 0
  %801 = vmatpush1.bf16.msra.mxu0 %v565
  %802 = vmatprep.subr.bf16.mxu0 0
  %803 = vmatpush1.bf16.msra.mxu0 %v566
  %804 = vmatprep.subr.bf16.mxu0 0
  %805 = vmatpush1.bf16.msra.mxu0 %v567
  %806 = vmatprep.subr.bf16.mxu0 0
  %807 = vmatpush1.bf16.msra.mxu0 %v568
  %808 = vmatprep.subr.bf16.mxu0 0
  %809 = vmatpush1.bf16.msra.mxu0 %v569
  %810 = vmatprep.subr.bf16.mxu0 0
  %811 = vmatpush1.bf16.msra.mxu0 %v570
  %812 = vmatprep.subr.bf16.mxu0 0
  %813 = vmatpush1.bf16.msra.mxu0 %v571
  %814 = vmatprep.subr.bf16.mxu0 0
  %815 = vmatpush1.bf16.msra.mxu0 %v572
  %816 = vmatprep.mubr.bf16.mxu0 %v228
  %817 = vmatmul.mubr.bf16.gmra.mrb[0].mxu0 %v227
  %v818 = vpop.f32.mrb[0].mxu0
  %v819 = vadd.f32 %v770, %v818
  %v820 = vpop.f32.mrb[0].mxu0
  %v821 = vpop.f32.mrb[0].mxu0
  %v822 = vadd.f32 %v773, %v821
  %v823 = vpop.f32.mrb[0].mxu0
  %824 = vmatprep.mubr.bf16.mxu0 %v236
  %825 = vmatmul.mubr.bf16.gmra.mrb[0].mxu0 %v235
  %v826 = vpop.f32.mrb[0].mxu0
  %v827 = vadd.f32 %v778, %v826
  %v828 = vpop.f32.mrb[0].mxu0
  %v829 = vpop.f32.mrb[0].mxu0
  %v830 = vadd.f32 %v781, %v829
  %v831 = vpop.f32.mrb[0].mxu0
  %832 = vdwg.mxu0
  %v833 = vadd.f32 %v25, %v819
  %v834 = vadd.f32 %v26, %v822
  %v835 = vadd.f32 %v27, %v827
  %v836 = vadd.f32 %v28, %v830
  %837 = vst [vmem:[#allocation2] sm:$0xff] %v833
  %838 = vst [vmem:[#allocation2 + $0x8] sm:$0xff] %v834
  %839 = vst [vmem:[#allocation2 + $0x10] sm:$0xff] %v835
  %840 = vst [vmem:[#allocation2 + $0x18] sm:$0xff] %v836
  // Predicated region
  $region18: #{_lambda_.18} parent=0 // pred_check
    %p841 = pneg %p17
  $region19: #{_lambda_.18} parent=0 // pred_check_branch
    %843 = sbr.rel (%p841) target = $region21
  $region20: #{_lambda_.18} parent=0 // pred_region
    %v844 = vld [vmem:[#allocation2] sm:$0xff]
    %v845 = vld [vmem:[#allocation2 + $0x8] sm:$0xff]
    %v846 = vld [vmem:[#allocation2 + $0x10] sm:$0xff]
    %v847 = vld [vmem:[#allocation2 + $0x18] sm:$0xff]
    %v848 = vld [vmem:[%s2] sm:$0x1]
    %v850 = vlaneseq
    %v851 = vshrl.u32 %v850, 7
    %v852 = vsub.s32 0, %v851
    %v853 = vrot.slane %v848, %v852
    %v855 = vadd.f32 %v844, %v853
    %v856 = vadd.f32 %v845, %v853
    %v857 = vadd.f32 %v846, %v853
    %v858 = vadd.f32 %v847, %v853
    %v859 = vpack.c.bf16 %v856, %v855
    %v860 = vpack.c.bf16 %v858, %v857
    %v863 = vunpack.c.l.b16 %v859
    %v864 = vunpack.c.h.b16 %v859
    %v865 = vunpack.c.l.b16 %v860
    %v866 = vunpack.c.h.b16 %v860
    %v867 = vpack.c.b16 %v863, %v863
    %v868 = vpack.c.b16 %v864, %v864
    %v869 = vpack.c.b16 %v865, %v865
    %v870 = vpack.c.b16 %v866, %v866
    %875 = vst [vmem:[%s3] sm:$0xf] %v867
    %876 = vst [vmem:[%s3 + $0x4] sm:$0xf] %v868
    %877 = vst [vmem:[%s3 + $0x8] sm:$0xf] %v869
    %878 = vst [vmem:[%s3 + $0xc] sm:$0xf] %v870
    %v879 = vadd.f32 %v855, %v856
    %v880 = vadd.f32 %v879, %v857
    %v881 = vadd.f32 %v880, %v858
    %v882 = vrot.slane %v881, 4
    %v883 = vadd.f32 %v881, %v882
    %v884 = vrot.slane %v883, 2
    %v885 = vadd.f32 %v883, %v884
    %v886 = vrot.slane %v885, 1
    %v887 = vadd.f32 %v885, %v886
    %v888 = vmul.f32 %v855, %v855
    %v889 = vmul.f32 %v856, %v856
    %v890 = vmul.f32 %v857, %v857
    %v891 = vmul.f32 %v858, %v858
    %v892 = vadd.f32 %v888, %v889
    %v893 = vadd.f32 %v892, %v890
    %v894 = vadd.f32 %v893, %v891
    %v895 = vrot.slane %v894, 4
    %v896 = vadd.f32 %v894, %v895
    %v897 = vrot.slane %v896, 2
    %v898 = vadd.f32 %v896, %v897
    %v899 = vrot.slane %v898, 1
    %v900 = vadd.f32 %v898, %v899
    %v901 = vlaneseq
    %v902 = vshrl.u32 %v901, 7
    %vm903 = vcmp.eq.s32.totalorder %v902, 0
    %vm904 = vcmp.eq.s32.totalorder %v902, 1
    %v905 = vsel %vm904, %v900, 0.0
    %v906 = vsel %vm903, %v887, %v905
    %907 = vst [vmem:[%s4] sm:$0xff] %v906
  $region21: #{_lambda_.18} parent=0 // pred_fallthru
    _
  // Predicated region
  $region22: #{_lambda_.18} parent=0 // pred_check
    _
  $region23: #{_lambda_.18} parent=0 // pred_check_branch
    %909 = sbr.rel (0) target = $region25
  $region24: #{_lambda_.18} parent=0 // pred_region
    _
  $region25: #{_lambda_.18} parent=0 // pred_fallthru
    _
  // Predicated region
  $region26: #{_lambda_.18} parent=0 // pred_check
    _
  $region27: #{_lambda_.18} parent=0 // pred_check_branch
    %911 = sbr.rel (0) target = $region29
  $region28: #{_lambda_.18} parent=0 // pred_region
    _
  $region29: #{_lambda_.18} parent=0 // pred_fallthru
    _
  // Predicated region
  $region30: #{_lambda_.18} parent=0 // pred_check
    _
  $region31: #{_lambda_.18} parent=0 // pred_check_branch
    %913 = sbr.rel (0) target = $region33
  $region32: #{_lambda_.18} parent=0 // pred_region
    _
  $region33: #{_lambda_.18} parent=0 // pred_fallthru
    _
  // Predicated region
  $region34: #{_lambda_.18} parent=0 // pred_check
    _
  $region35: #{_lambda_.18} parent=0 // pred_check_branch
    %915 = sbr.rel (0) target = $region37
  $region36: #{_lambda_.18} parent=0 // pred_region
    _
  $region37: #{_lambda_.18} parent=0 // pred_fallthru
    _

// kernel: _lambda_.21
$region0: #{_lambda_.21}
  #allocation0 [shape = 'u32[]', space=smem, size = 0x4, offset = 0x4, fixed_abs, tag = 'smem constant byte address 0x4 - core index']
  #allocation1 [shape = 'u32[144,128]{1,0:T(1,128)}', space=vmem, size = 0x12000, scoped, tag = 'internal scratch']
  #allocation2 [shape = 'f32[16,128]{1,0:T(8,128)}', space=vmem, size = 0x2000, scoped, tag = 'scratch operand']
  %s0 = inlined_call_operand.vmem [shape: bf16[16,2048], index: 0, kind: input, shape index: {}]
  %s1 = inlined_call_operand.vmem [shape: bf16[2048,128], index: 1, kind: input, shape index: {}]
  %s2 = inlined_call_operand.vmem [shape: f32[1,128], index: 2, kind: input, shape index: {}]
  %s3 = inlined_call_operand.vmem [shape: f32[16,128], index: 3, kind: output, shape index: {}]
  %s4 = sld [smem:[#allocation0]]
  $region30: #{_lambda_.21} parent=0
    _
  %s6 = ssub.s32 1, %s4
  %s7 = scalar_select 0, %s6, %s4
  // Predicated region
  $region2: #{_lambda_.21} parent=0 // pred_check
    _
  $region3: #{_lambda_.21} parent=0 // pred_check_branch
    %9 = sbr.rel (0) target = $region5
  $region4: #{_lambda_.21} parent=0 // pred_region
    _
  $region5: #{_lambda_.21} parent=0 // pred_fallthru
    _
  // Predicated region
  $region6: #{_lambda_.21} parent=0 // pred_check
    _
  $region7: #{_lambda_.21} parent=0 // pred_check_branch
    %11 = sbr.rel (0) target = $region9
  $region8: #{_lambda_.21} parent=0 // pred_region
    _
  $region9: #{_lambda_.21} parent=0 // pred_fallthru
    _
  // Predicated region
  $region10: #{_lambda_.21} parent=0 // pred_check
    _
  $region11: #{_lambda_.21} parent=0 // pred_check_branch
    %13 = sbr.rel (0) target = $region13
  $region12: #{_lambda_.21} parent=0 // pred_region
    _
  $region13: #{_lambda_.21} parent=0 // pred_fallthru
    _
  %p15 = scmp.eq.s32.totalorder 0, 0
  // Predicated region
  $region14: #{_lambda_.21} parent=0 // pred_check
    %p16 = pneg %p15
  $region15: #{_lambda_.21} parent=0 // pred_check_branch
    %18 = sbr.rel (%p16) target = $region17
  $region16: #{_lambda_.21} parent=0 // pred_region
    %19 = vst [vmem:[#allocation2] sm:$0xff] 0.0
    %20 = vst [vmem:[#allocation2 + $0x8] sm:$0xff] 0.0
  $region17: #{_lambda_.21} parent=0 // pred_fallthru
    _
  %v21 = vld [vmem:[#allocation2] sm:$0xff]
  %v22 = vld [vmem:[#allocation2 + $0x8] sm:$0xff]
  %v23 = vld [vmem:[%s0] sm:$0xff]
  %v24 = vld [vmem:[%s0 + $0x8] sm:$0xff]
  %v25 = vld [vmem:[%s0 + $0x10] sm:$0xff]
  %v26 = vld [vmem:[%s0 + $0x18] sm:$0xff]
  %v27 = vld [vmem:[%s0 + $0x20] sm:$0xff]
  %v28 = vld [vmem:[%s0 + $0x28] sm:$0xff]
  %v29 = vld [vmem:[%s0 + $0x30] sm:$0xff]
  %v30 = vld [vmem:[%s0 + $0x38] sm:$0xff]
  %v31 = vld [vmem:[%s0 + $0x40] sm:$0xff]
  %v32 = vld [vmem:[%s0 + $0x48] sm:$0xff]
  %v33 = vld [vmem:[%s0 + $0x50] sm:$0xff]
  %v34 = vld [vmem:[%s0 + $0x58] sm:$0xff]
  %v35 = vld [vmem:[%s0 + $0x60] sm:$0xff]
  %v36 = vld [vmem:[%s0 + $0x68] sm:$0xff]
  %v37 = vld [vmem:[%s0 + $0x70] sm:$0xff]
  %v38 = vld [vmem:[%s0 + $0x78] sm:$0xff]
  %v39 = vld [vmem:[%s1] sm:$0xf]
  %v40 = vld [vmem:[%s1 + $0x4] sm:$0xf]
  %v41 = vld [vmem:[%s1 + $0x8] sm:$0xf]
  %v42 = vld [vmem:[%s1 + $0xc] sm:$0xf]
  %v43 = vld [vmem:[%s1 + $0x10] sm:$0xf]
  %v44 = vld [vmem:[%s1 + $0x14] sm:$0xf]
  %v45 = vld [vmem:[%s1 + $0x18] sm:$0xf]
  %v46 = vld [vmem:[%s1 + $0x1c] sm:$0xf]
  %v47 = vld [vmem:[%s1 + $0x20] sm:$0xf]
  %v48 = vld [vmem:[%s1 + $0x24] sm:$0xf]
  %v49 = vld [vmem:[%s1 + $0x28] sm:$0xf]
  %v50 = vld [vmem:[%s1 + $0x2c] sm:$0xf]
  %v51 = vld [vmem:[%s1 + $0x30] sm:$0xf]
  %v52 = vld [vmem:[%s1 + $0x34] sm:$0xf]
  %v53 = vld [vmem:[%s1 + $0x38] sm:$0xf]
  %v54 = vld [vmem:[%s1 + $0x3c] sm:$0xf]
  %v55 = vld [vmem:[%s1 + $0x40] sm:$0xf]
  %v56 = vld [vmem:[%s1 + $0x44] sm:$0xf]
  %v57 = vld [vmem:[%s1 + $0x48] sm:$0xf]
  %v58 = vld [vmem:[%s1 + $0x4c] sm:$0xf]
  %v59 = vld [vmem:[%s1 + $0x50] sm:$0xf]
  %v60 = vld [vmem:[%s1 + $0x54] sm:$0xf]
  %v61 = vld [vmem:[%s1 + $0x58] sm:$0xf]
  %v62 = vld [vmem:[%s1 + $0x5c] sm:$0xf]
  %v63 = vld [vmem:[%s1 + $0x60] sm:$0xf]
  %v64 = vld [vmem:[%s1 + $0x64] sm:$0xf]
  %v65 = vld [vmem:[%s1 + $0x68] sm:$0xf]
  %v66 = vld [vmem:[%s1 + $0x6c] sm:$0xf]
  %v67 = vld [vmem:[%s1 + $0x70] sm:$0xf]
  %v68 = vld [vmem:[%s1 + $0x74] sm:$0xf]
  %v69 = vld [vmem:[%s1 + $0x78] sm:$0xf]
  %v70 = vld [vmem:[%s1 + $0x7c] sm:$0xf]
  %v71 = vld [vmem:[%s1 + $0x80] sm:$0xf]
  %v72 = vld [vmem:[%s1 + $0x84] sm:$0xf]
  %v73 = vld [vmem:[%s1 + $0x88] sm:$0xf]
  %v74 = vld [vmem:[%s1 + $0x8c] sm:$0xf]
  %v75 = vld [vmem:[%s1 + $0x90] sm:$0xf]
  %v76 = vld [vmem:[%s1 + $0x94] sm:$0xf]
  %v77 = vld [vmem:[%s1 + $0x98] sm:$0xf]
  %v78 = vld [vmem:[%s1 + $0x9c] sm:$0xf]
  %v79 = vld [vmem:[%s1 + $0xa0] sm:$0xf]
  %v80 = vld [vmem:[%s1 + $0xa4] sm:$0xf]
  %v81 = vld [vmem:[%s1 + $0xa8] sm:$0xf]
  %v82 = vld [vmem:[%s1 + $0xac] sm:$0xf]
  %v83 = vld [vmem:[%s1 + $0xb0] sm:$0xf]
  %v84 = vld [vmem:[%s1 + $0xb4] sm:$0xf]
  %v85 = vld [vmem:[%s1 + $0xb8] sm:$0xf]
  %v86 = vld [vmem:[%s1 + $0xbc] sm:$0xf]
  %v87 = vld [vmem:[%s1 + $0xc0] sm:$0xf]
  %v88 = vld [vmem:[%s1 + $0xc4] sm:$0xf]
  %v89 = vld [vmem:[%s1 + $0xc8] sm:$0xf]
  %v90 = vld [vmem:[%s1 + $0xcc] sm:$0xf]
  %v91 = vld [vmem:[%s1 + $0xd0] sm:$0xf]
  %v92 = vld [vmem:[%s1 + $0xd4] sm:$0xf]
  %v93 = vld [vmem:[%s1 + $0xd8] sm:$0xf]
  %v94 = vld [vmem:[%s1 + $0xdc] sm:$0xf]
  %v95 = vld [vmem:[%s1 + $0xe0] sm:$0xf]
  %v96 = vld [vmem:[%s1 + $0xe4] sm:$0xf]
  %v97 = vld [vmem:[%s1 + $0xe8] sm:$0xf]
  %v98 = vld [vmem:[%s1 + $0xec] sm:$0xf]
  %v99 = vld [vmem:[%s1 + $0xf0] sm:$0xf]
  %v100 = vld [vmem:[%s1 + $0xf4] sm:$0xf]
  %v101 = vld [vmem:[%s1 + $0xf8] sm:$0xf]
  %v102 = vld [vmem:[%s1 + $0xfc] sm:$0xf]
  %v103 = vld [vmem:[%s1 + $0x100] sm:$0xf]
  %v104 = vld [vmem:[%s1 + $0x104] sm:$0xf]
  %v105 = vld [vmem:[%s1 + $0x108] sm:$0xf]
  %v106 = vld [vmem:[%s1 + $0x10c] sm:$0xf]
  %v107 = vld [vmem:[%s1 + $0x110] sm:$0xf]
  %v108 = vld [vmem:[%s1 + $0x114] sm:$0xf]
  %v109 = vld [vmem:[%s1 + $0x118] sm:$0xf]
  %v110 = vld [vmem:[%s1 + $0x11c] sm:$0xf]
  %v111 = vld [vmem:[%s1 + $0x120] sm:$0xf]
  %v112 = vld [vmem:[%s1 + $0x124] sm:$0xf]
  %v113 = vld [vmem:[%s1 + $0x128] sm:$0xf]
  %v114 = vld [vmem:[%s1 + $0x12c] sm:$0xf]
  %v115 = vld [vmem:[%s1 + $0x130] sm:$0xf]
  %v116 = vld [vmem:[%s1 + $0x134] sm:$0xf]
  %v117 = vld [vmem:[%s1 + $0x138] sm:$0xf]
  %v118 = vld [vmem:[%s1 + $0x13c] sm:$0xf]
  %v119 = vld [vmem:[%s1 + $0x140] sm:$0xf]
  %v120 = vld [vmem:[%s1 + $0x144] sm:$0xf]
  %v121 = vld [vmem:[%s1 + $0x148] sm:$0xf]
  %v122 = vld [vmem:[%s1 + $0x14c] sm:$0xf]
  %v123 = vld [vmem:[%s1 + $0x150] sm:$0xf]
  %v124 = vld [vmem:[%s1 + $0x154] sm:$0xf]
  %v125 = vld [vmem:[%s1 + $0x158] sm:$0xf]
  %v126 = vld [vmem:[%s1 + $0x15c] sm:$0xf]
  %v127 = vld [vmem:[%s1 + $0x160] sm:$0xf]
  %v128 = vld [vmem:[%s1 + $0x164] sm:$0xf]
  %v129 = vld [vmem:[%s1 + $0x168] sm:$0xf]
  %v130 = vld [vmem:[%s1 + $0x16c] sm:$0xf]
  %v131 = vld [vmem:[%s1 + $0x170] sm:$0xf]
  %v132 = vld [vmem:[%s1 + $0x174] sm:$0xf]
  %v133 = vld [vmem:[%s1 + $0x178] sm:$0xf]
  %v134 = vld [vmem:[%s1 + $0x17c] sm:$0xf]
  %v135 = vld [vmem:[%s1 + $0x180] sm:$0xf]
  %v136 = vld [vmem:[%s1 + $0x184] sm:$0xf]
  %v137 = vld [vmem:[%s1 + $0x188] sm:$0xf]
  %v138 = vld [vmem:[%s1 + $0x18c] sm:$0xf]
  %v139 = vld [vmem:[%s1 + $0x190] sm:$0xf]
  %v140 = vld [vmem:[%s1 + $0x194] sm:$0xf]
  %v141 = vld [vmem:[%s1 + $0x198] sm:$0xf]
  %v142 = vld [vmem:[%s1 + $0x19c] sm:$0xf]
  %v143 = vld [vmem:[%s1 + $0x1a0] sm:$0xf]
  %v144 = vld [vmem:[%s1 + $0x1a4] sm:$0xf]
  %v145 = vld [vmem:[%s1 + $0x1a8] sm:$0xf]
  %v146 = vld [vmem:[%s1 + $0x1ac] sm:$0xf]
  %v147 = vld [vmem:[%s1 + $0x1b0] sm:$0xf]
  %v148 = vld [vmem:[%s1 + $0x1b4] sm:$0xf]
  %v149 = vld [vmem:[%s1 + $0x1b8] sm:$0xf]
  %v150 = vld [vmem:[%s1 + $0x1bc] sm:$0xf]
  %v151 = vld [vmem:[%s1 + $0x1c0] sm:$0xf]
  %v152 = vld [vmem:[%s1 + $0x1c4] sm:$0xf]
  %v153 = vld [vmem:[%s1 + $0x1c8] sm:$0xf]
  %v154 = vld [vmem:[%s1 + $0x1cc] sm:$0xf]
  %v155 = vld [vmem:[%s1 + $0x1d0] sm:$0xf]
  %v156 = vld [vmem:[%s1 + $0x1d4] sm:$0xf]
  %v157 = vld [vmem:[%s1 + $0x1d8] sm:$0xf]
  %v158 = vld [vmem:[%s1 + $0x1dc] sm:$0xf]
  %v159 = vld [vmem:[%s1 + $0x1e0] sm:$0xf]
  %v160 = vld [vmem:[%s1 + $0x1e4] sm:$0xf]
  %v161 = vld [vmem:[%s1 + $0x1e8] sm:$0xf]
  %v162 = vld [vmem:[%s1 + $0x1ec] sm:$0xf]
  %v163 = vld [vmem:[%s1 + $0x1f0] sm:$0xf]
  %v164 = vld [vmem:[%s1 + $0x1f4] sm:$0xf]
  %v165 = vld [vmem:[%s1 + $0x1f8] sm:$0xf]
  %v166 = vld [vmem:[%s1 + $0x1fc] sm:$0xf]
  %v167 = vld [vmem:[%s1 + $0x200] sm:$0xf]
  %v168 = vld [vmem:[%s1 + $0x204] sm:$0xf]
  %v169 = vld [vmem:[%s1 + $0x208] sm:$0xf]
  %v170 = vld [vmem:[%s1 + $0x20c] sm:$0xf]
  %v171 = vld [vmem:[%s1 + $0x210] sm:$0xf]
  %v172 = vld [vmem:[%s1 + $0x214] sm:$0xf]
  %v173 = vld [vmem:[%s1 + $0x218] sm:$0xf]
  %v174 = vld [vmem:[%s1 + $0x21c] sm:$0xf]
  %v175 = vld [vmem:[%s1 + $0x220] sm:$0xf]
  %v176 = vld [vmem:[%s1 + $0x224] sm:$0xf]
  %v177 = vld [vmem:[%s1 + $0x228] sm:$0xf]
  %v178 = vld [vmem:[%s1 + $0x22c] sm:$0xf]
  %v179 = vld [vmem:[%s1 + $0x230] sm:$0xf]
  %v180 = vld [vmem:[%s1 + $0x234] sm:$0xf]
  %v181 = vld [vmem:[%s1 + $0x238] sm:$0xf]
  %v182 = vld [vmem:[%s1 + $0x23c] sm:$0xf]
  %v183 = vld [vmem:[%s1 + $0x240] sm:$0xf]
  %v184 = vld [vmem:[%s1 + $0x244] sm:$0xf]
  %v185 = vld [vmem:[%s1 + $0x248] sm:$0xf]
  %v186 = vld [vmem:[%s1 + $0x24c] sm:$0xf]
  %v187 = vld [vmem:[%s1 + $0x250] sm:$0xf]
  %v188 = vld [vmem:[%s1 + $0x254] sm:$0xf]
  %v189 = vld [vmem:[%s1 + $0x258] sm:$0xf]
  %v190 = vld [vmem:[%s1 + $0x25c] sm:$0xf]
  %v191 = vld [vmem:[%s1 + $0x260] sm:$0xf]
  %v192 = vld [vmem:[%s1 + $0x264] sm:$0xf]
  %v193 = vld [vmem:[%s1 + $0x268] sm:$0xf]
  %v194 = vld [vmem:[%s1 + $0x26c] sm:$0xf]
  %v195 = vld [vmem:[%s1 + $0x270] sm:$0xf]
  %v196 = vld [vmem:[%s1 + $0x274] sm:$0xf]
  %v197 = vld [vmem:[%s1 + $0x278] sm:$0xf]
  %v198 = vld [vmem:[%s1 + $0x27c] sm:$0xf]
  %v199 = vld [vmem:[%s1 + $0x280] sm:$0xf]
  %v200 = vld [vmem:[%s1 + $0x284] sm:$0xf]
  %v201 = vld [vmem:[%s1 + $0x288] sm:$0xf]
  %v202 = vld [vmem:[%s1 + $0x28c] sm:$0xf]
  %v203 = vld [vmem:[%s1 + $0x290] sm:$0xf]
  %v204 = vld [vmem:[%s1 + $0x294] sm:$0xf]
  %v205 = vld [vmem:[%s1 + $0x298] sm:$0xf]
  %v206 = vld [vmem:[%s1 + $0x29c] sm:$0xf]
  %v207 = vld [vmem:[%s1 + $0x2a0] sm:$0xf]
  %v208 = vld [vmem:[%s1 + $0x2a4] sm:$0xf]
  %v209 = vld [vmem:[%s1 + $0x2a8] sm:$0xf]
  %v210 = vld [vmem:[%s1 + $0x2ac] sm:$0xf]
  %v211 = vld [vmem:[%s1 + $0x2b0] sm:$0xf]
  %v212 = vld [vmem:[%s1 + $0x2b4] sm:$0xf]
  %v213 = vld [vmem:[%s1 + $0x2b8] sm:$0xf]
  %v214 = vld [vmem:[%s1 + $0x2bc] sm:$0xf]
  %v215 = vld [vmem:[%s1 + $0x2c0] sm:$0xf]
  %v216 = vld [vmem:[%s1 + $0x2c4] sm:$0xf]
  %v217 = vld [vmem:[%s1 + $0x2c8] sm:$0xf]
  %v218 = vld [vmem:[%s1 + $0x2cc] sm:$0xf]
  %v219 = vld [vmem:[%s1 + $0x2d0] sm:$0xf]
  %v220 = vld [vmem:[%s1 + $0x2d4] sm:$0xf]
  %v221 = vld [vmem:[%s1 + $0x2d8] sm:$0xf]
  %v222 = vld [vmem:[%s1 + $0x2dc] sm:$0xf]
  %v223 = vld [vmem:[%s1 + $0x2e0] sm:$0xf]
  %v224 = vld [vmem:[%s1 + $0x2e4] sm:$0xf]
  %v225 = vld [vmem:[%s1 + $0x2e8] sm:$0xf]
  %v226 = vld [vmem:[%s1 + $0x2ec] sm:$0xf]
  %v227 = vld [vmem:[%s1 + $0x2f0] sm:$0xf]
  %v228 = vld [vmem:[%s1 + $0x2f4] sm:$0xf]
  %v229 = vld [vmem:[%s1 + $0x2f8] sm:$0xf]
  %v230 = vld [vmem:[%s1 + $0x2fc] sm:$0xf]
  %v231 = vld [vmem:[%s1 + $0x300] sm:$0xf]
  %v232 = vld [vmem:[%s1 + $0x304] sm:$0xf]
  %v233 = vld [vmem:[%s1 + $0x308] sm:$0xf]
  %v234 = vld [vmem:[%s1 + $0x30c] sm:$0xf]
  %v235 = vld [vmem:[%s1 + $0x310] sm:$0xf]
  %v236 = vld [vmem:[%s1 + $0x314] sm:$0xf]
  %v237 = vld [vmem:[%s1 + $0x318] sm:$0xf]
  %v238 = vld [vmem:[%s1 + $0x31c] sm:$0xf]
  %v239 = vld [vmem:[%s1 + $0x320] sm:$0xf]
  %v240 = vld [vmem:[%s1 + $0x324] sm:$0xf]
  %v241 = vld [vmem:[%s1 + $0x328] sm:$0xf]
  %v242 = vld [vmem:[%s1 + $0x32c] sm:$0xf]
  %v243 = vld [vmem:[%s1 + $0x330] sm:$0xf]
  %v244 = vld [vmem:[%s1 + $0x334] sm:$0xf]
  %v245 = vld [vmem:[%s1 + $0x338] sm:$0xf]
  %v246 = vld [vmem:[%s1 + $0x33c] sm:$0xf]
  %v247 = vld [vmem:[%s1 + $0x340] sm:$0xf]
  %v248 = vld [vmem:[%s1 + $0x344] sm:$0xf]
  %v249 = vld [vmem:[%s1 + $0x348] sm:$0xf]
  %v250 = vld [vmem:[%s1 + $0x34c] sm:$0xf]
  %v251 = vld [vmem:[%s1 + $0x350] sm:$0xf]
  %v252 = vld [vmem:[%s1 + $0x354] sm:$0xf]
  %v253 = vld [vmem:[%s1 + $0x358] sm:$0xf]
  %v254 = vld [vmem:[%s1 + $0x35c] sm:$0xf]
  %v255 = vld [vmem:[%s1 + $0x360] sm:$0xf]
  %v256 = vld [vmem:[%s1 + $0x364] sm:$0xf]
  %v257 = vld [vmem:[%s1 + $0x368] sm:$0xf]
  %v258 = vld [vmem:[%s1 + $0x36c] sm:$0xf]
  %v259 = vld [vmem:[%s1 + $0x370] sm:$0xf]
  %v260 = vld [vmem:[%s1 + $0x374] sm:$0xf]
  %v261 = vld [vmem:[%s1 + $0x378] sm:$0xf]
  %v262 = vld [vmem:[%s1 + $0x37c] sm:$0xf]
  %v263 = vld [vmem:[%s1 + $0x380] sm:$0xf]
  %v264 = vld [vmem:[%s1 + $0x384] sm:$0xf]
  %v265 = vld [vmem:[%s1 + $0x388] sm:$0xf]
  %v266 = vld [vmem:[%s1 + $0x38c] sm:$0xf]
  %v267 = vld [vmem:[%s1 + $0x390] sm:$0xf]
  %v268 = vld [vmem:[%s1 + $0x394] sm:$0xf]
  %v269 = vld [vmem:[%s1 + $0x398] sm:$0xf]
  %v270 = vld [vmem:[%s1 + $0x39c] sm:$0xf]
  %v271 = vld [vmem:[%s1 + $0x3a0] sm:$0xf]
  %v272 = vld [vmem:[%s1 + $0x3a4] sm:$0xf]
  %v273 = vld [vmem:[%s1 + $0x3a8] sm:$0xf]
  %v274 = vld [vmem:[%s1 + $0x3ac] sm:$0xf]
  %v275 = vld [vmem:[%s1 + $0x3b0] sm:$0xf]
  %v276 = vld [vmem:[%s1 + $0x3b4] sm:$0xf]
  %v277 = vld [vmem:[%s1 + $0x3b8] sm:$0xf]
  %v278 = vld [vmem:[%s1 + $0x3bc] sm:$0xf]
  %v279 = vld [vmem:[%s1 + $0x3c0] sm:$0xf]
  %v280 = vld [vmem:[%s1 + $0x3c4] sm:$0xf]
  %v281 = vld [vmem:[%s1 + $0x3c8] sm:$0xf]
  %v282 = vld [vmem:[%s1 + $0x3cc] sm:$0xf]
  %v283 = vld [vmem:[%s1 + $0x3d0] sm:$0xf]
  %v284 = vld [vmem:[%s1 + $0x3d4] sm:$0xf]
  %v285 = vld [vmem:[%s1 + $0x3d8] sm:$0xf]
  %v286 = vld [vmem:[%s1 + $0x3dc] sm:$0xf]
  %v287 = vld [vmem:[%s1 + $0x3e0] sm:$0xf]
  %v288 = vld [vmem:[%s1 + $0x3e4] sm:$0xf]
  %v289 = vld [vmem:[%s1 + $0x3e8] sm:$0xf]
  %v290 = vld [vmem:[%s1 + $0x3ec] sm:$0xf]
  %v291 = vld [vmem:[%s1 + $0x3f0] sm:$0xf]
  %v292 = vld [vmem:[%s1 + $0x3f4] sm:$0xf]
  %v293 = vld [vmem:[%s1 + $0x3f8] sm:$0xf]
  %v294 = vld [vmem:[%s1 + $0x3fc] sm:$0xf]
  %v311 = vunpack.c.l.b16 %v23
  %v312 = vunpack.c.h.b16 %v23
  %v313 = vunpack.c.l.b16 %v24
  %v314 = vunpack.c.h.b16 %v24
  %v315 = vunpack.c.l.b16 %v25
  %v316 = vunpack.c.h.b16 %v25
  %v317 = vunpack.c.l.b16 %v26
  %v318 = vunpack.c.h.b16 %v26
  %v319 = vunpack.c.l.b16 %v27
  %v320 = vunpack.c.h.b16 %v27
  %v321 = vunpack.c.l.b16 %v28
  %v322 = vunpack.c.h.b16 %v28
  %v323 = vunpack.c.l.b16 %v29
  %v324 = vunpack.c.h.b16 %v29
  %v325 = vunpack.c.l.b16 %v30
  %v326 = vunpack.c.h.b16 %v30
  %v327 = vunpack.c.l.b16 %v31
  %v328 = vunpack.c.h.b16 %v31
  %v329 = vunpack.c.l.b16 %v32
  %v330 = vunpack.c.h.b16 %v32
  %v331 = vunpack.c.l.b16 %v33
  %v332 = vunpack.c.h.b16 %v33
  %v333 = vunpack.c.l.b16 %v34
  %v334 = vunpack.c.h.b16 %v34
  %v335 = vunpack.c.l.b16 %v35
  %v336 = vunpack.c.h.b16 %v35
  %v337 = vunpack.c.l.b16 %v36
  %v338 = vunpack.c.h.b16 %v36
  %v339 = vunpack.c.l.b16 %v37
  %v340 = vunpack.c.h.b16 %v37
  %v341 = vunpack.c.l.b16 %v38
  %v342 = vunpack.c.h.b16 %v38
  %v343 = vpack.c.b16 %v327, %v311
  %v344 = vpack.c.b16 %v328, %v312
  %v345 = vpack.c.b16 %v329, %v313
  %v346 = vpack.c.b16 %v330, %v314
  %v347 = vpack.c.b16 %v331, %v315
  %v348 = vpack.c.b16 %v332, %v316
  %v349 = vpack.c.b16 %v333, %v317
  %v350 = vpack.c.b16 %v334, %v318
  %v351 = vpack.c.b16 %v335, %v319
  %v352 = vpack.c.b16 %v336, %v320
  %v353 = vpack.c.b16 %v337, %v321
  %v354 = vpack.c.b16 %v338, %v322
  %v355 = vpack.c.b16 %v339, %v323
  %v356 = vpack.c.b16 %v340, %v324
  %v357 = vpack.c.b16 %v341, %v325
  %v358 = vpack.c.b16 %v342, %v326
  %v631 = vunpack.c.l.b16 %v39
  %v632 = vunpack.c.l.b16 %v40
  %v633 = vunpack.c.l.b16 %v41
  %v634 = vunpack.c.l.b16 %v42
  %v635 = vunpack.c.l.b16 %v43
  %v636 = vunpack.c.l.b16 %v44
  %v637 = vunpack.c.l.b16 %v45
  %v638 = vunpack.c.l.b16 %v46
  %v639 = vunpack.c.l.b16 %v47
  %v640 = vunpack.c.l.b16 %v48
  %v641 = vunpack.c.l.b16 %v49
  %v642 = vunpack.c.l.b16 %v50
  %v643 = vunpack.c.l.b16 %v51
  %v644 = vunpack.c.l.b16 %v52
  %v645 = vunpack.c.l.b16 %v53
  %v646 = vunpack.c.l.b16 %v54
  %v647 = vunpack.c.l.b16 %v55
  %v648 = vunpack.c.l.b16 %v56
  %v649 = vunpack.c.l.b16 %v57
  %v650 = vunpack.c.l.b16 %v58
  %v651 = vunpack.c.l.b16 %v59
  %v652 = vunpack.c.l.b16 %v60
  %v653 = vunpack.c.l.b16 %v61
  %v654 = vunpack.c.l.b16 %v62
  %v655 = vunpack.c.l.b16 %v63
  %v656 = vunpack.c.l.b16 %v64
  %v657 = vunpack.c.l.b16 %v65
  %v658 = vunpack.c.l.b16 %v66
  %v659 = vunpack.c.l.b16 %v67
  %v660 = vunpack.c.l.b16 %v68
  %v661 = vunpack.c.l.b16 %v69
  %v662 = vunpack.c.l.b16 %v70
  %v663 = vunpack.c.l.b16 %v71
  %v664 = vunpack.c.l.b16 %v72
  %v665 = vunpack.c.l.b16 %v73
  %v666 = vunpack.c.l.b16 %v74
  %v667 = vunpack.c.l.b16 %v75
  %v668 = vunpack.c.l.b16 %v76
  %v669 = vunpack.c.l.b16 %v77
  %v670 = vunpack.c.l.b16 %v78
  %v671 = vunpack.c.l.b16 %v79
  %v672 = vunpack.c.l.b16 %v80
  %v673 = vunpack.c.l.b16 %v81
  %v674 = vunpack.c.l.b16 %v82
  %v675 = vunpack.c.l.b16 %v83
  %v676 = vunpack.c.l.b16 %v84
  %v677 = vunpack.c.l.b16 %v85
  %v678 = vunpack.c.l.b16 %v86
  %v679 = vunpack.c.l.b16 %v87
  %v680 = vunpack.c.l.b16 %v88
  %v681 = vunpack.c.l.b16 %v89
  %v682 = vunpack.c.l.b16 %v90
  %v683 = vunpack.c.l.b16 %v91
  %v684 = vunpack.c.l.b16 %v92
  %v685 = vunpack.c.l.b16 %v93
  %v686 = vunpack.c.l.b16 %v94
  %v687 = vunpack.c.l.b16 %v95
  %v688 = vunpack.c.l.b16 %v96
  %v689 = vunpack.c.l.b16 %v97
  %v690 = vunpack.c.l.b16 %v98
  %v691 = vunpack.c.l.b16 %v99
  %v692 = vunpack.c.l.b16 %v100
  %v693 = vunpack.c.l.b16 %v101
  %v694 = vunpack.c.l.b16 %v102
  %v695 = vunpack.c.l.b16 %v103
  %v696 = vunpack.c.l.b16 %v104
  %v697 = vunpack.c.l.b16 %v105
  %v698 = vunpack.c.l.b16 %v106
  %v699 = vunpack.c.l.b16 %v107
  %v700 = vunpack.c.l.b16 %v108
  %v701 = vunpack.c.l.b16 %v109
  %v702 = vunpack.c.l.b16 %v110
  %v703 = vunpack.c.l.b16 %v111
  %v704 = vunpack.c.l.b16 %v112
  %v705 = vunpack.c.l.b16 %v113
  %v706 = vunpack.c.l.b16 %v114
  %v707 = vunpack.c.l.b16 %v115
  %v708 = vunpack.c.l.b16 %v116
  %v709 = vunpack.c.l.b16 %v117
  %v710 = vunpack.c.l.b16 %v118
  %v711 = vunpack.c.l.b16 %v119
  %v712 = vunpack.c.l.b16 %v120
  %v713 = vunpack.c.l.b16 %v121
  %v714 = vunpack.c.l.b16 %v122
  %v715 = vunpack.c.l.b16 %v123
  %v716 = vunpack.c.l.b16 %v124
  %v717 = vunpack.c.l.b16 %v125
  %v718 = vunpack.c.l.b16 %v126
  %v719 = vunpack.c.l.b16 %v127
  %v720 = vunpack.c.l.b16 %v128
  %v721 = vunpack.c.l.b16 %v129
  %v722 = vunpack.c.l.b16 %v130
  %v723 = vunpack.c.l.b16 %v131
  %v724 = vunpack.c.l.b16 %v132
  %v725 = vunpack.c.l.b16 %v133
  %v726 = vunpack.c.l.b16 %v134
  %v727 = vunpack.c.l.b16 %v135
  %v728 = vunpack.c.l.b16 %v136
  %v729 = vunpack.c.l.b16 %v137
  %v730 = vunpack.c.l.b16 %v138
  %v731 = vunpack.c.l.b16 %v139
  %v732 = vunpack.c.l.b16 %v140
  %v733 = vunpack.c.l.b16 %v141
  %v734 = vunpack.c.l.b16 %v142
  %v735 = vunpack.c.l.b16 %v143
  %v736 = vunpack.c.l.b16 %v144
  %v737 = vunpack.c.l.b16 %v145
  %v738 = vunpack.c.l.b16 %v146
  %v739 = vunpack.c.l.b16 %v147
  %v740 = vunpack.c.l.b16 %v148
  %v741 = vunpack.c.l.b16 %v149
  %v742 = vunpack.c.l.b16 %v150
  %v743 = vunpack.c.l.b16 %v151
  %v744 = vunpack.c.l.b16 %v152
  %v745 = vunpack.c.l.b16 %v153
  %v746 = vunpack.c.l.b16 %v154
  %v747 = vunpack.c.l.b16 %v155
  %v748 = vunpack.c.l.b16 %v156
  %v749 = vunpack.c.l.b16 %v157
  %v750 = vunpack.c.l.b16 %v158
  %v751 = vunpack.c.l.b16 %v159
  %v752 = vunpack.c.l.b16 %v160
  %v753 = vunpack.c.l.b16 %v161
  %v754 = vunpack.c.l.b16 %v162
  %v755 = vunpack.c.l.b16 %v163
  %v756 = vunpack.c.l.b16 %v164
  %v757 = vunpack.c.l.b16 %v165
  %v758 = vunpack.c.l.b16 %v166
  %v759 = vunpack.c.l.b16 %v167
  %v760 = vunpack.c.l.b16 %v168
  %v761 = vunpack.c.l.b16 %v169
  %v762 = vunpack.c.l.b16 %v170
  %v763 = vunpack.c.l.b16 %v171
  %v764 = vunpack.c.l.b16 %v172
  %v765 = vunpack.c.l.b16 %v173
  %v766 = vunpack.c.l.b16 %v174
  %v767 = vunpack.c.l.b16 %v175
  %v768 = vunpack.c.l.b16 %v176
  %v769 = vunpack.c.l.b16 %v177
  %v770 = vunpack.c.l.b16 %v178
  %v771 = vunpack.c.l.b16 %v179
  %v772 = vunpack.c.l.b16 %v180
  %v773 = vunpack.c.l.b16 %v181
  %v774 = vunpack.c.l.b16 %v182
  %v775 = vunpack.c.l.b16 %v183
  %v776 = vunpack.c.l.b16 %v184
  %v777 = vunpack.c.l.b16 %v185
  %v778 = vunpack.c.l.b16 %v186
  %v779 = vunpack.c.l.b16 %v187
  %v780 = vunpack.c.l.b16 %v188
  %v781 = vunpack.c.l.b16 %v189
  %v782 = vunpack.c.l.b16 %v190
  %v783 = vunpack.c.l.b16 %v191
  %v784 = vunpack.c.l.b16 %v192
  %v785 = vunpack.c.l.b16 %v193
  %v786 = vunpack.c.l.b16 %v194
  %v787 = vunpack.c.l.b16 %v195
  %v788 = vunpack.c.l.b16 %v196
  %v789 = vunpack.c.l.b16 %v197
  %v790 = vunpack.c.l.b16 %v198
  %v791 = vunpack.c.l.b16 %v199
  %v792 = vunpack.c.l.b16 %v200
  %v793 = vunpack.c.l.b16 %v201
  %v794 = vunpack.c.l.b16 %v202
  %v795 = vunpack.c.l.b16 %v203
  %v796 = vunpack.c.l.b16 %v204
  %v797 = vunpack.c.l.b16 %v205
  %v798 = vunpack.c.l.b16 %v206
  %v799 = vunpack.c.l.b16 %v207
  %v800 = vunpack.c.l.b16 %v208
  %v801 = vunpack.c.l.b16 %v209
  %v802 = vunpack.c.l.b16 %v210
  %v803 = vunpack.c.l.b16 %v211
  %v804 = vunpack.c.l.b16 %v212
  %v805 = vunpack.c.l.b16 %v213
  %v806 = vunpack.c.l.b16 %v214
  %v807 = vunpack.c.l.b16 %v215
  %v808 = vunpack.c.l.b16 %v216
  %v809 = vunpack.c.l.b16 %v217
  %v810 = vunpack.c.l.b16 %v218
  %v811 = vunpack.c.l.b16 %v219
  %v812 = vunpack.c.l.b16 %v220
  %v813 = vunpack.c.l.b16 %v221
  %v814 = vunpack.c.l.b16 %v222
  %v815 = vunpack.c.l.b16 %v223
  %v816 = vunpack.c.l.b16 %v224
  %v817 = vunpack.c.l.b16 %v225
  %v818 = vunpack.c.l.b16 %v226
  %v819 = vunpack.c.l.b16 %v227
  %v820 = vunpack.c.l.b16 %v228
  %v821 = vunpack.c.l.b16 %v229
  %v822 = vunpack.c.l.b16 %v230
  %v823 = vunpack.c.l.b16 %v231
  %v824 = vunpack.c.l.b16 %v232
  %v825 = vunpack.c.l.b16 %v233
  %v826 = vunpack.c.l.b16 %v234
  %v827 = vunpack.c.l.b16 %v235
  %v828 = vunpack.c.l.b16 %v236
  %v829 = vunpack.c.l.b16 %v237
  %v830 = vunpack.c.l.b16 %v238
  %v831 = vunpack.c.l.b16 %v239
  %v832 = vunpack.c.l.b16 %v240
  %v833 = vunpack.c.l.b16 %v241
  %v834 = vunpack.c.l.b16 %v242
  %v835 = vunpack.c.l.b16 %v243
  %v836 = vunpack.c.l.b16 %v244
  %v837 = vunpack.c.l.b16 %v245
  %v838 = vunpack.c.l.b16 %v246
  %v839 = vunpack.c.l.b16 %v247
  %v840 = vunpack.c.l.b16 %v248
  %v841 = vunpack.c.l.b16 %v249
  %v842 = vunpack.c.l.b16 %v250
  %v843 = vunpack.c.l.b16 %v251
  %v844 = vunpack.c.l.b16 %v252
  %v845 = vunpack.c.l.b16 %v253
  %v846 = vunpack.c.l.b16 %v254
  %v847 = vunpack.c.l.b16 %v255
  %v848 = vunpack.c.l.b16 %v256
  %v849 = vunpack.c.l.b16 %v257
  %v850 = vunpack.c.l.b16 %v258
  %v851 = vunpack.c.l.b16 %v259
  %v852 = vunpack.c.l.b16 %v260
  %v853 = vunpack.c.l.b16 %v261
  %v854 = vunpack.c.l.b16 %v262
  %v855 = vunpack.c.l.b16 %v263
  %v856 = vunpack.c.l.b16 %v264
  %v857 = vunpack.c.l.b16 %v265
  %v858 = vunpack.c.l.b16 %v266
  %v859 = vunpack.c.l.b16 %v267
  %v860 = vunpack.c.l.b16 %v268
  %v861 = vunpack.c.l.b16 %v269
  %v862 = vunpack.c.l.b16 %v270
  %v863 = vunpack.c.l.b16 %v271
  %v864 = vunpack.c.l.b16 %v272
  %v865 = vunpack.c.l.b16 %v273
  %v866 = vunpack.c.l.b16 %v274
  %v867 = vunpack.c.l.b16 %v275
  %v868 = vunpack.c.l.b16 %v276
  %v869 = vunpack.c.l.b16 %v277
  %v870 = vunpack.c.l.b16 %v278
  %v871 = vunpack.c.l.b16 %v279
  %v872 = vunpack.c.l.b16 %v280
  %v873 = vunpack.c.l.b16 %v281
  %v874 = vunpack.c.l.b16 %v282
  %v875 = vunpack.c.l.b16 %v283
  %v876 = vunpack.c.l.b16 %v284
  %v877 = vunpack.c.l.b16 %v285
  %v878 = vunpack.c.l.b16 %v286
  %v879 = vunpack.c.l.b16 %v287
  %v880 = vunpack.c.l.b16 %v288
  %v881 = vunpack.c.l.b16 %v289
  %v882 = vunpack.c.l.b16 %v290
  %v883 = vunpack.c.l.b16 %v291
  %v884 = vunpack.c.l.b16 %v292
  %v885 = vunpack.c.l.b16 %v293
  %v886 = vunpack.c.l.b16 %v294
  %v887 = vpack.c.b16 %v632, %v631
  %v888 = vpack.c.b16 %v634, %v633
  %v889 = vpack.c.b16 %v636, %v635
  %v890 = vpack.c.b16 %v638, %v637
  %v891 = vpack.c.b16 %v640, %v639
  %v892 = vpack.c.b16 %v642, %v641
  %v893 = vpack.c.b16 %v644, %v643
  %v894 = vpack.c.b16 %v646, %v645
  %v895 = vpack.c.b16 %v648, %v647
  %v896 = vpack.c.b16 %v650, %v649
  %v897 = vpack.c.b16 %v652, %v651
  %v898 = vpack.c.b16 %v654, %v653
  %v899 = vpack.c.b16 %v656, %v655
  %v900 = vpack.c.b16 %v658, %v657
  %v901 = vpack.c.b16 %v660, %v659
  %v902 = vpack.c.b16 %v662, %v661
  %v903 = vpack.c.b16 %v664, %v663
  %v904 = vpack.c.b16 %v666, %v665
  %v905 = vpack.c.b16 %v668, %v667
  %v906 = vpack.c.b16 %v670, %v669
  %v907 = vpack.c.b16 %v672, %v671
  %v908 = vpack.c.b16 %v674, %v673
  %v909 = vpack.c.b16 %v676, %v675
  %v910 = vpack.c.b16 %v678, %v677
  %v911 = vpack.c.b16 %v680, %v679
  %v912 = vpack.c.b16 %v682, %v681
  %v913 = vpack.c.b16 %v684, %v683
  %v914 = vpack.c.b16 %v686, %v685
  %v915 = vpack.c.b16 %v688, %v687
  %v916 = vpack.c.b16 %v690, %v689
  %v917 = vpack.c.b16 %v692, %v691
  %v918 = vpack.c.b16 %v694, %v693
  %v919 = vpack.c.b16 %v696, %v695
  %v920 = vpack.c.b16 %v698, %v697
  %v921 = vpack.c.b16 %v700, %v699
  %v922 = vpack.c.b16 %v702, %v701
  %v923 = vpack.c.b16 %v704, %v703
  %v924 = vpack.c.b16 %v706, %v705
  %v925 = vpack.c.b16 %v708, %v707
  %v926 = vpack.c.b16 %v710, %v709
  %v927 = vpack.c.b16 %v712, %v711
  %v928 = vpack.c.b16 %v714, %v713
  %v929 = vpack.c.b16 %v716, %v715
  %v930 = vpack.c.b16 %v718, %v717
  %v931 = vpack.c.b16 %v720, %v719
  %v932 = vpack.c.b16 %v722, %v721
  %v933 = vpack.c.b16 %v724, %v723
  %v934 = vpack.c.b16 %v726, %v725
  %v935 = vpack.c.b16 %v728, %v727
  %v936 = vpack.c.b16 %v730, %v729
  %v937 = vpack.c.b16 %v732, %v731
  %v938 = vpack.c.b16 %v734, %v733
  %v939 = vpack.c.b16 %v736, %v735
  %v940 = vpack.c.b16 %v738, %v737
  %v941 = vpack.c.b16 %v740, %v739
  %v942 = vpack.c.b16 %v742, %v741
  %v943 = vpack.c.b16 %v744, %v743
  %v944 = vpack.c.b16 %v746, %v745
  %v945 = vpack.c.b16 %v748, %v747
  %v946 = vpack.c.b16 %v750, %v749
  %v947 = vpack.c.b16 %v752, %v751
  %v948 = vpack.c.b16 %v754, %v753
  %v949 = vpack.c.b16 %v756, %v755
  %v950 = vpack.c.b16 %v758, %v757
  %v951 = vpack.c.b16 %v760, %v759
  %v952 = vpack.c.b16 %v762, %v761
  %v953 = vpack.c.b16 %v764, %v763
  %v954 = vpack.c.b16 %v766, %v765
  %v955 = vpack.c.b16 %v768, %v767
  %v956 = vpack.c.b16 %v770, %v769
  %v957 = vpack.c.b16 %v772, %v771
  %v958 = vpack.c.b16 %v774, %v773
  %v959 = vpack.c.b16 %v776, %v775
  %v960 = vpack.c.b16 %v778, %v777
  %v961 = vpack.c.b16 %v780, %v779
  %v962 = vpack.c.b16 %v782, %v781
  %v963 = vpack.c.b16 %v784, %v783
  %v964 = vpack.c.b16 %v786, %v785
  %v965 = vpack.c.b16 %v788, %v787
  %v966 = vpack.c.b16 %v790, %v789
  %v967 = vpack.c.b16 %v792, %v791
  %v968 = vpack.c.b16 %v794, %v793
  %v969 = vpack.c.b16 %v796, %v795
  %v970 = vpack.c.b16 %v798, %v797
  %v971 = vpack.c.b16 %v800, %v799
  %v972 = vpack.c.b16 %v802, %v801
  %v973 = vpack.c.b16 %v804, %v803
  %v974 = vpack.c.b16 %v806, %v805
  %v975 = vpack.c.b16 %v808, %v807
  %v976 = vpack.c.b16 %v810, %v809
  %v977 = vpack.c.b16 %v812, %v811
  %v978 = vpack.c.b16 %v814, %v813
  %v979 = vpack.c.b16 %v816, %v815
  %v980 = vpack.c.b16 %v818, %v817
  %v981 = vpack.c.b16 %v820, %v819
  %v982 = vpack.c.b16 %v822, %v821
  %v983 = vpack.c.b16 %v824, %v823
  %v984 = vpack.c.b16 %v826, %v825
  %v985 = vpack.c.b16 %v828, %v827
  %v986 = vpack.c.b16 %v830, %v829
  %v987 = vpack.c.b16 %v832, %v831
  %v988 = vpack.c.b16 %v834, %v833
  %v989 = vpack.c.b16 %v836, %v835
  %v990 = vpack.c.b16 %v838, %v837
  %v991 = vpack.c.b16 %v840, %v839
  %v992 = vpack.c.b16 %v842, %v841
  %v993 = vpack.c.b16 %v844, %v843
  %v994 = vpack.c.b16 %v846, %v845
  %v995 = vpack.c.b16 %v848, %v847
  %v996 = vpack.c.b16 %v850, %v849
  %v997 = vpack.c.b16 %v852, %v851
  %v998 = vpack.c.b16 %v854, %v853
  %v999 = vpack.c.b16 %v856, %v855
  %v1000 = vpack.c.b16 %v858, %v857
  %v1001 = vpack.c.b16 %v860, %v859
  %v1002 = vpack.c.b16 %v862, %v861
  %v1003 = vpack.c.b16 %v864, %v863
  %v1004 = vpack.c.b16 %v866, %v865
  %v1005 = vpack.c.b16 %v868, %v867
  %v1006 = vpack.c.b16 %v870, %v869
  %v1007 = vpack.c.b16 %v872, %v871
  %v1008 = vpack.c.b16 %v874, %v873
  %v1009 = vpack.c.b16 %v876, %v875
  %v1010 = vpack.c.b16 %v878, %v877
  %v1011 = vpack.c.b16 %v880, %v879
  %v1012 = vpack.c.b16 %v882, %v881
  %v1013 = vpack.c.b16 %v884, %v883
  %v1014 = vpack.c.b16 %v886, %v885
  %1143 = vmatprep.subr.bf16.mxu0 0
  %1144 = vmatpush1.bf16.msra.mxu0 %v887
  %1145 = vmatprep.subr.bf16.mxu0 0
  %1146 = vmatpush1.bf16.msra.mxu0 %v888
  %1147 = vmatprep.subr.bf16.mxu0 0
  %1148 = vmatpush1.bf16.msra.mxu0 %v889
  %1149 = vmatprep.subr.bf16.mxu0 0
  %1150 = vmatpush1.bf16.msra.mxu0 %v890
  %1151 = vmatprep.subr.bf16.mxu0 0
  %1152 = vmatpush1.bf16.msra.mxu0 %v891
  %1153 = vmatprep.subr.bf16.mxu0 0
  %1154 = vmatpush1.bf16.msra.mxu0 %v892
  %1155 = vmatprep.subr.bf16.mxu0 0
  %1156 = vmatpush1.bf16.msra.mxu0 %v893
  %1157 = vmatprep.subr.bf16.mxu0 0
  %1158 = vmatpush1.bf16.msra.mxu0 %v894
  %1159 = vmatprep.subr.bf16.mxu0 0
  %1160 = vmatpush1.bf16.msra.mxu0 %v895
  %1161 = vmatprep.subr.bf16.mxu0 0
  %1162 = vmatpush1.bf16.msra.mxu0 %v896
  %1163 = vmatprep.subr.bf16.mxu0 0
  %1164 = vmatpush1.bf16.msra.mxu0 %v897
  %1165 = vmatprep.subr.bf16.mxu0 0
  %1166 = vmatpush1.bf16.msra.mxu0 %v898
  %1167 = vmatprep.subr.bf16.mxu0 0
  %1168 = vmatpush1.bf16.msra.mxu0 %v899
  %1169 = vmatprep.subr.bf16.mxu0 0
  %1170 = vmatpush1.bf16.msra.mxu0 %v900
  %1171 = vmatprep.subr.bf16.mxu0 0
  %1172 = vmatpush1.bf16.msra.mxu0 %v901
  %1173 = vmatprep.subr.bf16.mxu0 0
  %1174 = vmatpush1.bf16.msra.mxu0 %v902
  %1175 = vmatprep.mubr.bf16.mxu0 %v344
  %1176 = vmatmul.mubr.bf16.gmra.mrb[0].mxu0 %v343
  %v1177 = vpop.f32.mrb[0].mxu0
  %v1178 = vadd.f32 0.0, %v1177
  %v1179 = vpop.f32.mrb[0].mxu0
  %v1180 = vpop.f32.mrb[0].mxu0
  %v1181 = vadd.f32 0.0, %v1180
  %v1182 = vpop.f32.mrb[0].mxu0
  %1183 = vdwg.mxu0
  %1184 = vmatprep.subr.bf16.mxu0 0
  %1185 = vmatpush1.bf16.msra.mxu0 %v903
  %1186 = vmatprep.subr.bf16.mxu0 0
  %1187 = vmatpush1.bf16.msra.mxu0 %v904
  %1188 = vmatprep.subr.bf16.mxu0 0
  %1189 = vmatpush1.bf16.msra.mxu0 %v905
  %1190 = vmatprep.subr.bf16.mxu0 0
  %1191 = vmatpush1.bf16.msra.mxu0 %v906
  %1192 = vmatprep.subr.bf16.mxu0 0
  %1193 = vmatpush1.bf16.msra.mxu0 %v907
  %1194 = vmatprep.subr.bf16.mxu0 0
  %1195 = vmatpush1.bf16.msra.mxu0 %v908
  %1196 = vmatprep.subr.bf16.mxu0 0
  %1197 = vmatpush1.bf16.msra.mxu0 %v909
  %1198 = vmatprep.subr.bf16.mxu0 0
  %1199 = vmatpush1.bf16.msra.mxu0 %v910
  %1200 = vmatprep.subr.bf16.mxu0 0
  %1201 = vmatpush1.bf16.msra.mxu0 %v911
  %1202 = vmatprep.subr.bf16.mxu0 0
  %1203 = vmatpush1.bf16.msra.mxu0 %v912
  %1204 = vmatprep.subr.bf16.mxu0 0
  %1205 = vmatpush1.bf16.msra.mxu0 %v913
  %1206 = vmatprep.subr.bf16.mxu0 0
  %1207 = vmatpush1.bf16.msra.mxu0 %v914
  %1208 = vmatprep.subr.bf16.mxu0 0
  %1209 = vmatpush1.bf16.msra.mxu0 %v915
  %1210 = vmatprep.subr.bf16.mxu0 0
  %1211 = vmatpush1.bf16.msra.mxu0 %v916
  %1212 = vmatprep.subr.bf16.mxu0 0
  %1213 = vmatpush1.bf16.msra.mxu0 %v917
  %1214 = vmatprep.subr.bf16.mxu0 0
  %1215 = vmatpush1.bf16.msra.mxu0 %v918
  %1216 = vmatprep.mubr.bf16.mxu0 %v346
  %1217 = vmatmul.mubr.bf16.gmra.mrb[0].mxu0 %v345
  %v1218 = vpop.f32.mrb[0].mxu0
  %v1219 = vadd.f32 %v1178, %v1218
  %v1220 = vpop.f32.mrb[0].mxu0
  %v1221 = vpop.f32.mrb[0].mxu0
  %v1222 = vadd.f32 %v1181, %v1221
  %v1223 = vpop.f32.mrb[0].mxu0
  %1224 = vdwg.mxu0
  %1225 = vmatprep.subr.bf16.mxu0 0
  %1226 = vmatpush1.bf16.msra.mxu0 %v919
  %1227 = vmatprep.subr.bf16.mxu0 0
  %1228 = vmatpush1.bf16.msra.mxu0 %v920
  %1229 = vmatprep.subr.bf16.mxu0 0
  %1230 = vmatpush1.bf16.msra.mxu0 %v921
  %1231 = vmatprep.subr.bf16.mxu0 0
  %1232 = vmatpush1.bf16.msra.mxu0 %v922
  %1233 = vmatprep.subr.bf16.mxu0 0
  %1234 = vmatpush1.bf16.msra.mxu0 %v923
  %1235 = vmatprep.subr.bf16.mxu0 0
  %1236 = vmatpush1.bf16.msra.mxu0 %v924
  %1237 = vmatprep.subr.bf16.mxu0 0
  %1238 = vmatpush1.bf16.msra.mxu0 %v925
  %1239 = vmatprep.subr.bf16.mxu0 0
  %1240 = vmatpush1.bf16.msra.mxu0 %v926
  %1241 = vmatprep.subr.bf16.mxu0 0
  %1242 = vmatpush1.bf16.msra.mxu0 %v927
  %1243 = vmatprep.subr.bf16.mxu0 0
  %1244 = vmatpush1.bf16.msra.mxu0 %v928
  %1245 = vmatprep.subr.bf16.mxu0 0
  %1246 = vmatpush1.bf16.msra.mxu0 %v929
  %1247 = vmatprep.subr.bf16.mxu0 0
  %1248 = vmatpush1.bf16.msra.mxu0 %v930
  %1249 = vmatprep.subr.bf16.mxu0 0
  %1250 = vmatpush1.bf16.msra.mxu0 %v931
  %1251 = vmatprep.subr.bf16.mxu0 0
  %1252 = vmatpush1.bf16.msra.mxu0 %v932
  %1253 = vmatprep.subr.bf16.mxu0 0
  %1254 = vmatpush1.bf16.msra.mxu0 %v933
  %1255 = vmatprep.subr.bf16.mxu0 0
  %1256 = vmatpush1.bf16.msra.mxu0 %v934
  %1257 = vmatprep.mubr.bf16.mxu0 %v348
  %1258 = vmatmul.mubr.bf16.gmra.mrb[0].mxu0 %v347
  %v1259 = vpop.f32.mrb[0].mxu0
  %v1260 = vadd.f32 %v1219, %v1259
  %v1261 = vpop.f32.mrb[0].mxu0
  %v1262 = vpop.f32.mrb[0].mxu0
  %v1263 = vadd.f32 %v1222, %v1262
  %v1264 = vpop.f32.mrb[0].mxu0
  %1265 = vdwg.mxu0
  %1266 = vmatprep.subr.bf16.mxu0 0
  %1267 = vmatpush1.bf16.msra.mxu0 %v935
  %1268 = vmatprep.subr.bf16.mxu0 0
  %1269 = vmatpush1.bf16.msra.mxu0 %v936
  %1270 = vmatprep.subr.bf16.mxu0 0
  %1271 = vmatpush1.bf16.msra.mxu0 %v937
  %1272 = vmatprep.subr.bf16.mxu0 0
  %1273 = vmatpush1.bf16.msra.mxu0 %v938
  %1274 = vmatprep.subr.bf16.mxu0 0
  %1275 = vmatpush1.bf16.msra.mxu0 %v939
  %1276 = vmatprep.subr.bf16.mxu0 0
  %1277 = vmatpush1.bf16.msra.mxu0 %v940
  %1278 = vmatprep.subr.bf16.mxu0 0
  %1279 = vmatpush1.bf16.msra.mxu0 %v941
  %1280 = vmatprep.subr.bf16.mxu0 0
  %1281 = vmatpush1.bf16.msra.mxu0 %v942
  %1282 = vmatprep.subr.bf16.mxu0 0
  %1283 = vmatpush1.bf16.msra.mxu0 %v943
  %1284 = vmatprep.subr.bf16.mxu0 0
  %1285 = vmatpush1.bf16.msra.mxu0 %v944
  %1286 = vmatprep.subr.bf16.mxu0 0
  %1287 = vmatpush1.bf16.msra.mxu0 %v945
  %1288 = vmatprep.subr.bf16.mxu0 0
  %1289 = vmatpush1.bf16.msra.mxu0 %v946
  %1290 = vmatprep.subr.bf16.mxu0 0
  %1291 = vmatpush1.bf16.msra.mxu0 %v947
  %1292 = vmatprep.subr.bf16.mxu0 0
  %1293 = vmatpush1.bf16.msra.mxu0 %v948
  %1294 = vmatprep.subr.bf16.mxu0 0
  %1295 = vmatpush1.bf16.msra.mxu0 %v949
  %1296 = vmatprep.subr.bf16.mxu0 0
  %1297 = vmatpush1.bf16.msra.mxu0 %v950
  %1298 = vmatprep.mubr.bf16.mxu0 %v350
  %1299 = vmatmul.mubr.bf16.gmra.mrb[0].mxu0 %v349
  %v1300 = vpop.f32.mrb[0].mxu0
  %v1301 = vadd.f32 %v1260, %v1300
  %v1302 = vpop.f32.mrb[0].mxu0
  %v1303 = vpop.f32.mrb[0].mxu0
  %v1304 = vadd.f32 %v1263, %v1303
  %v1305 = vpop.f32.mrb[0].mxu0
  %1306 = vdwg.mxu0
  %1307 = vmatprep.subr.bf16.mxu0 0
  %1308 = vmatpush1.bf16.msra.mxu0 %v951
  %1309 = vmatprep.subr.bf16.mxu0 0
  %1310 = vmatpush1.bf16.msra.mxu0 %v952
  %1311 = vmatprep.subr.bf16.mxu0 0
  %1312 = vmatpush1.bf16.msra.mxu0 %v953
  %1313 = vmatprep.subr.bf16.mxu0 0
  %1314 = vmatpush1.bf16.msra.mxu0 %v954
  %1315 = vmatprep.subr.bf16.mxu0 0
  %1316 = vmatpush1.bf16.msra.mxu0 %v955
  %1317 = vmatprep.subr.bf16.mxu0 0
  %1318 = vmatpush1.bf16.msra.mxu0 %v956
  %1319 = vmatprep.subr.bf16.mxu0 0
  %1320 = vmatpush1.bf16.msra.mxu0 %v957
  %1321 = vmatprep.subr.bf16.mxu0 0
  %1322 = vmatpush1.bf16.msra.mxu0 %v958
  %1323 = vmatprep.subr.bf16.mxu0 0
  %1324 = vmatpush1.bf16.msra.mxu0 %v959
  %1325 = vmatprep.subr.bf16.mxu0 0
  %1326 = vmatpush1.bf16.msra.mxu0 %v960
  %1327 = vmatprep.subr.bf16.mxu0 0
  %1328 = vmatpush1.bf16.msra.mxu0 %v961
  %1329 = vmatprep.subr.bf16.mxu0 0
  %1330 = vmatpush1.bf16.msra.mxu0 %v962
  %1331 = vmatprep.subr.bf16.mxu0 0
  %1332 = vmatpush1.bf16.msra.mxu0 %v963
  %1333 = vmatprep.subr.bf16.mxu0 0
  %1334 = vmatpush1.bf16.msra.mxu0 %v964
  %1335 = vmatprep.subr.bf16.mxu0 0
  %1336 = vmatpush1.bf16.msra.mxu0 %v965
  %1337 = vmatprep.subr.bf16.mxu0 0
  %1338 = vmatpush1.bf16.msra.mxu0 %v966
  %1339 = vmatprep.mubr.bf16.mxu0 %v352
  %1340 = vmatmul.mubr.bf16.gmra.mrb[0].mxu0 %v351
  %v1341 = vpop.f32.mrb[0].mxu0
  %v1342 = vadd.f32 %v1301, %v1341
  %v1343 = vpop.f32.mrb[0].mxu0
  %v1344 = vpop.f32.mrb[0].mxu0
  %v1345 = vadd.f32 %v1304, %v1344
  %v1346 = vpop.f32.mrb[0].mxu0
  %1347 = vdwg.mxu0
  %1348 = vmatprep.subr.bf16.mxu0 0
  %1349 = vmatpush1.bf16.msra.mxu0 %v967
  %1350 = vmatprep.subr.bf16.mxu0 0
  %1351 = vmatpush1.bf16.msra.mxu0 %v968
  %1352 = vmatprep.subr.bf16.mxu0 0
  %1353 = vmatpush1.bf16.msra.mxu0 %v969
  %1354 = vmatprep.subr.bf16.mxu0 0
  %1355 = vmatpush1.bf16.msra.mxu0 %v970
  %1356 = vmatprep.subr.bf16.mxu0 0
  %1357 = vmatpush1.bf16.msra.mxu0 %v971
  %1358 = vmatprep.subr.bf16.mxu0 0
  %1359 = vmatpush1.bf16.msra.mxu0 %v972
  %1360 = vmatprep.subr.bf16.mxu0 0
  %1361 = vmatpush1.bf16.msra.mxu0 %v973
  %1362 = vmatprep.subr.bf16.mxu0 0
  %1363 = vmatpush1.bf16.msra.mxu0 %v974
  %1364 = vmatprep.subr.bf16.mxu0 0
  %1365 = vmatpush1.bf16.msra.mxu0 %v975
  %1366 = vmatprep.subr.bf16.mxu0 0
  %1367 = vmatpush1.bf16.msra.mxu0 %v976
  %1368 = vmatprep.subr.bf16.mxu0 0
  %1369 = vmatpush1.bf16.msra.mxu0 %v977
  %1370 = vmatprep.subr.bf16.mxu0 0
  %1371 = vmatpush1.bf16.msra.mxu0 %v978
  %1372 = vmatprep.subr.bf16.mxu0 0
  %1373 = vmatpush1.bf16.msra.mxu0 %v979
  %1374 = vmatprep.subr.bf16.mxu0 0
  %1375 = vmatpush1.bf16.msra.mxu0 %v980
  %1376 = vmatprep.subr.bf16.mxu0 0
  %1377 = vmatpush1.bf16.msra.mxu0 %v981
  %1378 = vmatprep.subr.bf16.mxu0 0
  %1379 = vmatpush1.bf16.msra.mxu0 %v982
  %1380 = vmatprep.mubr.bf16.mxu0 %v354
  %1381 = vmatmul.mubr.bf16.gmra.mrb[0].mxu0 %v353
  %v1382 = vpop.f32.mrb[0].mxu0
  %v1383 = vadd.f32 %v1342, %v1382
  %v1384 = vpop.f32.mrb[0].mxu0
  %v1385 = vpop.f32.mrb[0].mxu0
  %v1386 = vadd.f32 %v1345, %v1385
  %v1387 = vpop.f32.mrb[0].mxu0
  %1388 = vdwg.mxu0
  %1389 = vmatprep.subr.bf16.mxu0 0
  %1390 = vmatpush1.bf16.msra.mxu0 %v983
  %1391 = vmatprep.subr.bf16.mxu0 0
  %1392 = vmatpush1.bf16.msra.mxu0 %v984
  %1393 = vmatprep.subr.bf16.mxu0 0
  %1394 = vmatpush1.bf16.msra.mxu0 %v985
  %1395 = vmatprep.subr.bf16.mxu0 0
  %1396 = vmatpush1.bf16.msra.mxu0 %v986
  %1397 = vmatprep.subr.bf16.mxu0 0
  %1398 = vmatpush1.bf16.msra.mxu0 %v987
  %1399 = vmatprep.subr.bf16.mxu0 0
  %1400 = vmatpush1.bf16.msra.mxu0 %v988
  %1401 = vmatprep.subr.bf16.mxu0 0
  %1402 = vmatpush1.bf16.msra.mxu0 %v989
  %1403 = vmatprep.subr.bf16.mxu0 0
  %1404 = vmatpush1.bf16.msra.mxu0 %v990
  %1405 = vmatprep.subr.bf16.mxu0 0
  %1406 = vmatpush1.bf16.msra.mxu0 %v991
  %1407 = vmatprep.subr.bf16.mxu0 0
  %1408 = vmatpush1.bf16.msra.mxu0 %v992
  %1409 = vmatprep.subr.bf16.mxu0 0
  %1410 = vmatpush1.bf16.msra.mxu0 %v993
  %1411 = vmatprep.subr.bf16.mxu0 0
  %1412 = vmatpush1.bf16.msra.mxu0 %v994
  %1413 = vmatprep.subr.bf16.mxu0 0
  %1414 = vmatpush1.bf16.msra.mxu0 %v995
  %1415 = vmatprep.subr.bf16.mxu0 0
  %1416 = vmatpush1.bf16.msra.mxu0 %v996
  %1417 = vmatprep.subr.bf16.mxu0 0
  %1418 = vmatpush1.bf16.msra.mxu0 %v997
  %1419 = vmatprep.subr.bf16.mxu0 0
  %1420 = vmatpush1.bf16.msra.mxu0 %v998
  %1421 = vmatprep.mubr.bf16.mxu0 %v356
  %1422 = vmatmul.mubr.bf16.gmra.mrb[0].mxu0 %v355
  %v1423 = vpop.f32.mrb[0].mxu0
  %v1424 = vadd.f32 %v1383, %v1423
  %v1425 = vpop.f32.mrb[0].mxu0
  %v1426 = vpop.f32.mrb[0].mxu0
  %v1427 = vadd.f32 %v1386, %v1426
  %v1428 = vpop.f32.mrb[0].mxu0
  %1429 = vdwg.mxu0
  %1430 = vmatprep.subr.bf16.mxu0 0
  %1431 = vmatpush1.bf16.msra.mxu0 %v999
  %1432 = vmatprep.subr.bf16.mxu0 0
  %1433 = vmatpush1.bf16.msra.mxu0 %v1000
  %1434 = vmatprep.subr.bf16.mxu0 0
  %1435 = vmatpush1.bf16.msra.mxu0 %v1001
  %1436 = vmatprep.subr.bf16.mxu0 0
  %1437 = vmatpush1.bf16.msra.mxu0 %v1002
  %1438 = vmatprep.subr.bf16.mxu0 0
  %1439 = vmatpush1.bf16.msra.mxu0 %v1003
  %1440 = vmatprep.subr.bf16.mxu0 0
  %1441 = vmatpush1.bf16.msra.mxu0 %v1004
  %1442 = vmatprep.subr.bf16.mxu0 0
  %1443 = vmatpush1.bf16.msra.mxu0 %v1005
  %1444 = vmatprep.subr.bf16.mxu0 0
  %1445 = vmatpush1.bf16.msra.mxu0 %v1006
  %1446 = vmatprep.subr.bf16.mxu0 0
  %1447 = vmatpush1.bf16.msra.mxu0 %v1007
  %1448 = vmatprep.subr.bf16.mxu0 0
  %1449 = vmatpush1.bf16.msra.mxu0 %v1008
  %1450 = vmatprep.subr.bf16.mxu0 0
  %1451 = vmatpush1.bf16.msra.mxu0 %v1009
  %1452 = vmatprep.subr.bf16.mxu0 0
  %1453 = vmatpush1.bf16.msra.mxu0 %v1010
  %1454 = vmatprep.subr.bf16.mxu0 0
  %1455 = vmatpush1.bf16.msra.mxu0 %v1011
  %1456 = vmatprep.subr.bf16.mxu0 0
  %1457 = vmatpush1.bf16.msra.mxu0 %v1012
  %1458 = vmatprep.subr.bf16.mxu0 0
  %1459 = vmatpush1.bf16.msra.mxu0 %v1013
  %1460 = vmatprep.subr.bf16.mxu0 0
  %1461 = vmatpush1.bf16.msra.mxu0 %v1014
  %1462 = vmatprep.mubr.bf16.mxu0 %v358
  %1463 = vmatmul.mubr.bf16.gmra.mrb[0].mxu0 %v357
  %v1464 = vpop.f32.mrb[0].mxu0
  %v1465 = vadd.f32 %v1424, %v1464
  %v1466 = vpop.f32.mrb[0].mxu0
  %v1467 = vpop.f32.mrb[0].mxu0
  %v1468 = vadd.f32 %v1427, %v1467
  %v1469 = vpop.f32.mrb[0].mxu0
  %1470 = vdwg.mxu0
  %v1471 = vadd.f32 %v21, %v1465
  %v1472 = vadd.f32 %v22, %v1468
  %1473 = vst [vmem:[#allocation2] sm:$0xff] %v1471
  %1474 = vst [vmem:[#allocation2 + $0x8] sm:$0xff] %v1472
  // Predicated region
  $region18: #{_lambda_.21} parent=0 // pred_check
    %p1475 = pneg %p15
  $region19: #{_lambda_.21} parent=0 // pred_check_branch
    %1477 = sbr.rel (%p1475) target = $region21
  $region20: #{_lambda_.21} parent=0 // pred_region
    %v1478 = vld [vmem:[#allocation2] sm:$0xff]
    %v1479 = vld [vmem:[#allocation2 + $0x8] sm:$0xff]
    %v1480 = vld [vmem:[%s2] sm:$0x1]
    %v1482 = vlaneseq
    %v1483 = vshrl.u32 %v1482, 7
    %v1484 = vsub.s32 0, %v1483
    %v1485 = vrot.slane %v1480, %v1484
    %v1487 = vadd.f32 %v1478, %v1485
    %v1488 = vadd.f32 %v1479, %v1485
    %1489 = vst [vmem:[%s3] sm:$0xff] %v1487
    %1490 = vst [vmem:[%s3 + $0x8] sm:$0xff] %v1488
  $region21: #{_lambda_.21} parent=0 // pred_fallthru
    _
  // Predicated region
  $region22: #{_lambda_.21} parent=0 // pred_check
    _
  $region23: #{_lambda_.21} parent=0 // pred_check_branch
    %1492 = sbr.rel (0) target = $region25
  $region24: #{_lambda_.21} parent=0 // pred_region
    _
  $region25: #{_lambda_.21} parent=0 // pred_fallthru
    _
  // Predicated region
  $region26: #{_lambda_.21} parent=0 // pred_check
    _
  $region27: #{_lambda_.21} parent=0 // pred_check_branch
    %1494 = sbr.rel (0) target = $region29
  $region28: #{_lambda_.21} parent=0 // pred_region
    _
  $region29: #{_lambda_.21} parent=0 // pred_fallthru
    _

</llo_original>
